<compile_context>
chip_gen: v7x
topology: tpu7x:2x2x1
jax: 0.10.0
libtpu: 0.0.40
codegen_flags: <defaults>
</compile_context>

<pallas_src>
import jax
import jax.numpy as jnp
from jax.experimental import pallas as pl
from jax.experimental.pallas import tpu as pltpu

LN_EPS = 1e-5  # PyTorch nn.LayerNorm default


def _ln_relu(y, gamma, beta):
    """One-pass LayerNorm (+affine) followed by ReLU, all in f32."""
    d = y.shape[-1]
    inv_d = 1.0 / d
    s1 = jnp.sum(y, axis=-1, keepdims=True)
    s2 = jnp.sum(y * y, axis=-1, keepdims=True)
    mean = s1 * inv_d
    var = s2 * inv_d - mean * mean
    scale = gamma * jax.lax.rsqrt(var + LN_EPS)       # (rows,1)*(1,D) -> (rows,D)
    shift = beta - mean * scale
    return jnp.maximum(y * scale + shift, 0.0)


def _dwf_tail(theta, x_h, x_h1,
              wl, bl, gl, hel, wr1t, br1, wr2t, br2, wp, bp,
              Bt, L, D, o_ref):
    """Common part after the three parallel Linear+LN+ReLU branches."""
    mix = x_h * jnp.cos(theta) + x_h1 * jnp.sin(theta)
    x_h = _ln_relu(
        jnp.dot(mix.astype(wl.dtype), wl, preferred_element_type=jnp.float32) + bl,
        gl, hel)                                      # (Bt*L, D), f32

    # F.adaptive_avg_pool1d(x_h, 1): mean over the feature axis D -> (Bt, L).
    x_h3 = x_h.reshape(Bt, L, D)
    pooled = jnp.mean(x_h3, axis=-1)                  # (Bt, L), lane-dense

    # Reweight: Conv1d(L -> 2L, 1) + ReLU + Conv1d(2L -> L, 1), row-vector form.
    r = jnp.dot(pooled, wr1t, preferred_element_type=jnp.float32) + br1
    r = jnp.maximum(r, 0.0)
    r = jnp.dot(r, wr2t, preferred_element_type=jnp.float32) + br2

    # softmax over the q_len axis (= last axis of the (Bt, L) slab).
    r = r - jnp.max(r, axis=-1, keepdims=True)
    e = jnp.exp(r)
    r = e * pl.reciprocal(jnp.sum(e, axis=-1, keepdims=True), approx=True)

    # proj(x_h * Reweight)
    scaled = (x_h3 * r[:, :, None]).reshape(Bt * L, D)
    out = jnp.dot(scaled.astype(wp.dtype), wp, preferred_element_type=jnp.float32) + bp
    o_ref[...] = out.reshape(Bt, L, D).astype(o_ref.dtype)


def dwf_kernel_fused(x_ref,
                     wcat_ref, bcat_ref, gcat_ref, becat_ref,  # theta|fc_h|fc_h1 fused
                     wl_ref, bl_ref, gl_ref, hel_ref,          # linear (Linear+LN+ReLU)
                     wr1t_ref, br1_ref, wr2t_ref, br2_ref,     # Reweight k=1 convs (T)
                     wp_ref, bp_ref,                           # proj
                     o_ref):
    Bt, L, D = x_ref.shape
    x = x_ref[...].reshape(Bt * L, D)
    # One fused GEMM for the three parallel Linear branches: (Bt*L, 3D).
    y = jnp.dot(x, wcat_ref[...], preferred_element_type=jnp.float32) + bcat_ref[...]
    g = gcat_ref[...]
    be = becat_ref[...]
    theta = _ln_relu(y[:, 0:D],     g[:, 0:D],     be[:, 0:D])
    x_h   = _ln_relu(y[:, D:2 * D], g[:, D:2 * D], be[:, D:2 * D])
    x_h1  = _ln_relu(y[:, 2 * D:],  g[:, 2 * D:],  be[:, 2 * D:])
    _dwf_tail(theta, x_h, x_h1,
              wl_ref[...], bl_ref[...], gl_ref[...], hel_ref[...],
              wr1t_ref[...], br1_ref[...], wr2t_ref[...], br2_ref[...],
              wp_ref[...], bp_ref[...], Bt, L, D, o_ref)


def dwf_kernel_split(x_ref,
                     wt_ref, bt_ref, gt_ref, het_ref,          # theta_h_conv
                     wh_ref, bh_ref, gh_ref, heh_ref,          # fc_h
                     w1_ref, b1_ref, g1_ref, he1_ref,          # fc_h1
                     wl_ref, bl_ref, gl_ref, hel_ref,          # linear
                     wr1t_ref, br1_ref, wr2t_ref, br2_ref,     # Reweight k=1 convs (T)
                     wp_ref, bp_ref,                           # proj
                     o_ref):
    Bt, L, D = x_ref.shape
    x = x_ref[...].reshape(Bt * L, D)
    theta = _ln_relu(
        jnp.dot(x, wt_ref[...], preferred_element_type=jnp.float32) + bt_ref[...],
        gt_ref[...], het_ref[...])
    x_h = _ln_relu(
        jnp.dot(x, wh_ref[...], preferred_element_type=jnp.float32) + bh_ref[...],
        gh_ref[...], heh_ref[...])
    x_h1 = _ln_relu(
        jnp.dot(x, w1_ref[...], preferred_element_type=jnp.float32) + b1_ref[...],
        g1_ref[...], he1_ref[...])
    _dwf_tail(theta, x_h, x_h1,
              wl_ref[...], bl_ref[...], gl_ref[...], hel_ref[...],
              wr1t_ref[...], br1_ref[...], wr2t_ref[...], br2_ref[...],
              wp_ref[...], bp_ref[...], Bt, L, D, o_ref)


def _physical_vmem_bytes():
    try:
        return int(pltpu.get_tpu_info().vmem_capacity_bytes)
    except Exception:
        return 64 * 1024 * 1024          # conservative default (v7x per-TC)


def _vmem_step_bytes(block_b, L, D, act_bytes, weight_bytes):
    rows = block_b * L
    slab_in = 2 * rows * D * act_bytes   # x slab, double-buffered
    slab_out = 2 * rows * D * 4          # output slab (f32), double-buffered
    scratch = 3 * rows * (3 * D) * 4     # y / branch activations / mix (f32)
    return slab_in + slab_out + scratch + weight_bytes


def _choose_block_b(B, L, D, act_bytes, weight_bytes, budget):
    """Largest batch divisor <= B//2 (>= 2 grid steps) fitting the VMEM budget."""
    limit = max(B // 2, 1)
    for cand in range(limit, 0, -1):
        if B % cand == 0 and _vmem_step_bytes(cand, L, D, act_bytes,
                                              weight_bytes) <= budget:
            return cand
    return 1


def dwf_forward(x, params, *, block_b=None, use_bf16=None):
    """params is the PyTorch-style parameter list from make_params()."""
    (wt, bt, gt, het, wh, bh, gh, heh, w1, b1, g1, he1,
     wl, bl, gl, hel, wr1, br1, wr2, br2, wp, bp) = params
    B, L, D = x.shape

    # bf16 MXU operands at production widths; f32 at tiny D for 1e-3 parity.
    if use_bf16 is None:
        use_bf16 = D >= 256
    mxu_dtype = jnp.bfloat16 if use_bf16 else x.dtype

    # Transpose the Reweight k=1 convs to lane-dense row-vector layout.
    wr1t = wr1.T                                       # (L, 2L)
    br1r = br1.reshape(1, -1)                          # (1, 2L)
    wr2t = wr2.T                                       # (2L, L)
    br2r = br2.reshape(1, -1)                          # (1, L)

    fuse3 = (D % 128 == 0)
    if fuse3:
        # One (D, 3D) GEMM for the three parallel branches; the D / 2D column
        # splits stay lane-aligned because D % 128 == 0.
        wcat = jnp.concatenate([wt, wh, w1], axis=1).astype(mxu_dtype)   # (D, 3D)
        bcat = jnp.concatenate([bt, bh, b1], axis=1)                     # (1, 3D)
        gcat = jnp.concatenate([gt, gh, g1], axis=1)                     # (1, 3D)
        becat = jnp.concatenate([het, heh, he1], axis=1)                 # (1, 3D)
        branch_params = [wcat, bcat, gcat, becat]
        kernel = dwf_kernel_fused
    else:
        # Misaligned D: three separate (D, D) GEMMs avoid lane-crossing slices.
        branch_params = [wt.astype(mxu_dtype), bt, gt, het,
                         wh.astype(mxu_dtype), bh, gh, heh,
                         w1.astype(mxu_dtype), b1, g1, he1]
        kernel = dwf_kernel_split

    kparams = branch_params + [
        wl.astype(mxu_dtype), bl, gl, hel,
        wr1t, br1r, wr2t, br2r,
        wp.astype(mxu_dtype), bp]

    act_bytes = jnp.dtype(mxu_dtype).itemsize
    weight_bytes = sum(int(p.size) * jnp.dtype(p.dtype).itemsize for p in kparams)
    # ~48 MiB on v7x (64 MiB physical), ~96 MiB on v5e/v6e (128 MiB physical).
    budget = int(0.75 * _physical_vmem_bytes())

    if block_b is None:
        block_b = _choose_block_b(B, L, D, act_bytes, weight_bytes, budget)
    assert B % block_b == 0, "batch must be divisible by block_b"

    flops = 2 * B * L * D * (5 * D) + 2 * B * L * (2 * L) * 2
    transcendentals = B * L * (2 * D + 7)              # cos/sin + exp + rsqrt/recip
    bytes_accessed = B * L * D * (act_bytes + x.dtype.itemsize) + weight_bytes

    def _call(single_buffer_weights):
        if single_buffer_weights:
            # Grid-invariant weights: constant index_map + single-buffered.
            weight_specs = [
                pl.BlockSpec(p.shape, lambda b: (0, 0),
                             pipeline_mode=pl.Buffered(buffer_count=1))
                for p in kparams]
        else:
            weight_specs = [pl.BlockSpec(p.shape, lambda b: (0, 0))
                            for p in kparams]
        return pl.pallas_call(
            kernel,
            out_shape=jax.ShapeDtypeStruct((B, L, D), x.dtype),
            grid_spec=pltpu.PrefetchScalarGridSpec(
                num_scalar_prefetch=0,
                grid=(B // block_b,),
                in_specs=[pl.BlockSpec((block_b, L, D), lambda b: (b, 0, 0))]
                         + weight_specs,
                out_specs=pl.BlockSpec((block_b, L, D), lambda b: (b, 0, 0)),
            ),
            compiler_params=pltpu.CompilerParams(
                dimension_semantics=("parallel",),     # disjoint output block per step
                vmem_limit_bytes=budget,
            ),
            cost_estimate=pl.CostEstimate(
                flops=int(flops),
                transcendentals=int(transcendentals),
                bytes_accessed=int(bytes_accessed)),
        )(x.astype(mxu_dtype), *kparams)

    try:
        return _call(single_buffer_weights=True)
    except Exception:
        # Fallback if pl.Buffered(1) is rejected by this JAX/Mosaic version;
        # identical kernel with default double-buffered weight specs.
        return _call(single_buffer_weights=False)


def dwf_reference(x, params):
    (wt, bt, gt, het, wh, bh, gh, heh, w1, b1, g1, he1,
     wl, bl, gl, hel, wr1, br1, wr2, br2, wp, bp) = params

    def ln_relu(y, g, be):
        m = jnp.mean(y, -1, keepdims=True)
        v = jnp.mean((y - m) ** 2, -1, keepdims=True)
        return jnp.maximum(((y - m) / jnp.sqrt(v + LN_EPS)) * g + be, 0.0)

    theta = ln_relu(x @ wt + bt, gt, het)
    xh = ln_relu(x @ wh + bh, gh, heh)
    xh1 = ln_relu(x @ w1 + b1, g1, he1)
    xh = ln_relu((xh * jnp.cos(theta) + xh1 * jnp.sin(theta)) @ wl + bl, gl, hel)
    pooled = jnp.mean(xh, -1, keepdims=True)           # (B, L, 1)
    r = jnp.maximum(jnp.einsum('ol,bli->boi', wr1, pooled) + br1, 0.0)
    r = jnp.einsum('ol,bli->boi', wr2, r) + br2
    r = jax.nn.softmax(r, axis=1)
    return (xh * r) @ wp + bp


def make_params(key, q_len, dim):
    keys = jax.random.split(key, 16)
    scale = 0.1
    params = []
    # four Linear+LayerNorm branches: theta_h_conv, fc_h, fc_h1, linear
    for i in range(4):
        w = scale * jax.random.normal(keys[2 * i], (dim, dim), jnp.float32)
        b = scale * jax.random.normal(keys[2 * i + 1], (1, dim), jnp.float32)
        gamma = jnp.ones((1, dim), jnp.float32)
        beta = jnp.zeros((1, dim), jnp.float32)
        params += [w, b, gamma, beta]
    # Reweight: Conv1d(q_len -> 2*q_len, 1) and Conv1d(2*q_len -> q_len, 1)
    wr1 = scale * jax.random.normal(keys[8], (2 * q_len, q_len), jnp.float32)
    br1 = scale * jax.random.normal(keys[9], (2 * q_len, 1), jnp.float32)
    wr2 = scale * jax.random.normal(keys[10], (q_len, 2 * q_len), jnp.float32)
    br2 = scale * jax.random.normal(keys[11], (q_len, 1), jnp.float32)
    params += [wr1, br1, wr2, br2]
    # proj
    wp = scale * jax.random.normal(keys[12], (dim, dim), jnp.float32)
    bp = scale * jax.random.normal(keys[13], (1, dim), jnp.float32)
    params += [wp, bp]
    return params


if __name__ == "__main__":
    B, q_len, dim = 2, 8, 32
    key = jax.random.PRNGKey(0)
    kx, kp = jax.random.split(key)
    x = jax.random.normal(kx, (B, q_len, dim), jnp.float32)
    params = make_params(kp, q_len, dim)

    out = dwf_forward(x, params)
    out = jax.block_until_ready(out)

    ref = dwf_reference(x, params)
    assert out.shape == (B, q_len, dim)
    assert jnp.allclose(out, ref, rtol=1e-3, atol=1e-3), (
        f"max abs diff {jnp.max(jnp.abs(out - ref))}")
    print("KERNEL_OK")
</pallas_src>

<mosaic_0001>
module attributes {stable_mosaic.version = 11 : i64} {
  func.func @dwf_kernel_split(%arg0: i32, %arg1: memref<1x8x32xf32, #tpu.memory_space<vmem>>, %arg2: memref<32x32xf32, #tpu.memory_space<vmem>>, %arg3: memref<1x32xf32, #tpu.memory_space<vmem>>, %arg4: memref<1x32xf32, #tpu.memory_space<vmem>>, %arg5: memref<1x32xf32, #tpu.memory_space<vmem>>, %arg6: memref<32x32xf32, #tpu.memory_space<vmem>>, %arg7: memref<1x32xf32, #tpu.memory_space<vmem>>, %arg8: memref<1x32xf32, #tpu.memory_space<vmem>>, %arg9: memref<1x32xf32, #tpu.memory_space<vmem>>, %arg10: memref<32x32xf32, #tpu.memory_space<vmem>>, %arg11: memref<1x32xf32, #tpu.memory_space<vmem>>, %arg12: memref<1x32xf32, #tpu.memory_space<vmem>>, %arg13: memref<1x32xf32, #tpu.memory_space<vmem>>, %arg14: memref<32x32xf32, #tpu.memory_space<vmem>>, %arg15: memref<1x32xf32, #tpu.memory_space<vmem>>, %arg16: memref<1x32xf32, #tpu.memory_space<vmem>>, %arg17: memref<1x32xf32, #tpu.memory_space<vmem>>, %arg18: memref<8x16xf32, #tpu.memory_space<vmem>>, %arg19: memref<1x16xf32, #tpu.memory_space<vmem>>, %arg20: memref<16x8xf32, #tpu.memory_space<vmem>>, %arg21: memref<1x8xf32, #tpu.memory_space<vmem>>, %arg22: memref<32x32xf32, #tpu.memory_space<vmem>>, %arg23: memref<1x32xf32, #tpu.memory_space<vmem>>, %arg24: memref<1x8x32xf32, #tpu.memory_space<vmem>>) attributes {dimension_semantics = [#tpu.dimension_semantics<parallel>], iteration_bounds = array<i64: 2>, scalar_prefetch = 0 : i64, scratch_operands = 0 : i64, tpu.core_type = #tpu.core_type<tc>, window_params = [{transform_indices = @transform_0, window_bounds = array<i64: 1, 8, 32>}, {pipeline_mode = #tpu.pipeline_mode<synchronous>, transform_indices = @transform_1, window_bounds = array<i64: 32, 32>}, {pipeline_mode = #tpu.pipeline_mode<synchronous>, transform_indices = @transform_2, window_bounds = array<i64: 1, 32>}, {pipeline_mode = #tpu.pipeline_mode<synchronous>, transform_indices = @transform_3, window_bounds = array<i64: 1, 32>}, {pipeline_mode = #tpu.pipeline_mode<synchronous>, transform_indices = @transform_4, window_bounds = array<i64: 1, 32>}, {pipeline_mode = #tpu.pipeline_mode<synchronous>, transform_indices = @transform_5, window_bounds = array<i64: 32, 32>}, {pipeline_mode = #tpu.pipeline_mode<synchronous>, transform_indices = @transform_6, window_bounds = array<i64: 1, 32>}, {pipeline_mode = #tpu.pipeline_mode<synchronous>, transform_indices = @transform_7, window_bounds = array<i64: 1, 32>}, {pipeline_mode = #tpu.pipeline_mode<synchronous>, transform_indices = @transform_8, window_bounds = array<i64: 1, 32>}, {pipeline_mode = #tpu.pipeline_mode<synchronous>, transform_indices = @transform_9, window_bounds = array<i64: 32, 32>}, {pipeline_mode = #tpu.pipeline_mode<synchronous>, transform_indices = @transform_10, window_bounds = array<i64: 1, 32>}, {pipeline_mode = #tpu.pipeline_mode<synchronous>, transform_indices = @transform_11, window_bounds = array<i64: 1, 32>}, {pipeline_mode = #tpu.pipeline_mode<synchronous>, transform_indices = @transform_12, window_bounds = array<i64: 1, 32>}, {pipeline_mode = #tpu.pipeline_mode<synchronous>, transform_indices = @transform_13, window_bounds = array<i64: 32, 32>}, {pipeline_mode = #tpu.pipeline_mode<synchronous>, transform_indices = @transform_14, window_bounds = array<i64: 1, 32>}, {pipeline_mode = #tpu.pipeline_mode<synchronous>, transform_indices = @transform_15, window_bounds = array<i64: 1, 32>}, {pipeline_mode = #tpu.pipeline_mode<synchronous>, transform_indices = @transform_16, window_bounds = array<i64: 1, 32>}, {pipeline_mode = #tpu.pipeline_mode<synchronous>, transform_indices = @transform_17, window_bounds = array<i64: 8, 16>}, {pipeline_mode = #tpu.pipeline_mode<synchronous>, transform_indices = @transform_18, window_bounds = array<i64: 1, 16>}, {pipeline_mode = #tpu.pipeline_mode<synchronous>, transform_indices = @transform_19, window_bounds = array<i64: 16, 8>}, {pipeline_mode = #tpu.pipeline_mode<synchronous>, transform_indices = @transform_20, window_bounds = array<i64: 1, 8>}, {pipeline_mode = #tpu.pipeline_mode<synchronous>, transform_indices = @transform_21, window_bounds = array<i64: 32, 32>}, {pipeline_mode = #tpu.pipeline_mode<synchronous>, transform_indices = @transform_22, window_bounds = array<i64: 1, 32>}, {transform_indices = @transform_23, window_bounds = array<i64: 1, 8, 32>}]} {
    %c0 = arith.constant 0 : index
    %c0_0 = arith.constant 0 : index
    %c0_1 = arith.constant 0 : index
    %0 = vector.load %arg1[%c0, %c0_0, %c0_1] : memref<1x8x32xf32, #tpu.memory_space<vmem>>, vector<1x8x32xf32>
    %1 = vector.shape_cast %0 : vector<1x8x32xf32> to vector<8x32xf32>
    %c0_2 = arith.constant 0 : index
    %c0_3 = arith.constant 0 : index
    %2 = vector.load %arg2[%c0_2, %c0_3] : memref<32x32xf32, #tpu.memory_space<vmem>>, vector<32x32xf32>
    %cst = arith.constant dense<0.000000e+00> : vector<8x32xf32>
    %3 = tpu.matmul %1, %2, %cst {dimension_numbers = #tpu.dot_dimension_numbers<[1], [0], [0], [1], [0, 0, 1, 1], [], []>} : vector<8x32xf32>, vector<32x32xf32>, vector<8x32xf32> -> vector<8x32xf32>
    %c0_4 = arith.constant 0 : index
    %c0_5 = arith.constant 0 : index
    %4 = vector.load %arg3[%c0_4, %c0_5] : memref<1x32xf32, #tpu.memory_space<vmem>>, vector<1x32xf32>
    %5 = vector.broadcast %4 : vector<1x32xf32> to vector<8x32xf32>
    %6 = arith.addf %3, %5 : vector<8x32xf32>
    %c0_6 = arith.constant 0 : index
    %c0_7 = arith.constant 0 : index
    %7 = vector.load %arg4[%c0_6, %c0_7] : memref<1x32xf32, #tpu.memory_space<vmem>>, vector<1x32xf32>
    %c0_8 = arith.constant 0 : index
    %c0_9 = arith.constant 0 : index
    %8 = vector.load %arg5[%c0_8, %c0_9] : memref<1x32xf32, #tpu.memory_space<vmem>>, vector<1x32xf32>
    %cst_10 = arith.constant dense<0.000000e+00> : vector<8xf32>
    %9 = vector.multi_reduction <add>, %6, %cst_10 [1] : vector<8x32xf32> to vector<8xf32>
    %10 = vector.shape_cast %9 : vector<8xf32> to vector<8x1xf32>
    %11 = arith.mulf %6, %6 : vector<8x32xf32>
    %cst_11 = arith.constant dense<0.000000e+00> : vector<8xf32>
    %12 = vector.multi_reduction <add>, %11, %cst_11 [1] : vector<8x32xf32> to vector<8xf32>
    %13 = vector.shape_cast %12 : vector<8xf32> to vector<8x1xf32>
    %cst_12 = arith.constant 3.125000e-02 : f32
    %14 = vector.broadcast %cst_12 : f32 to vector<8x1xf32>
    %15 = arith.mulf %10, %14 : vector<8x1xf32>
    %cst_13 = arith.constant 3.125000e-02 : f32
    %16 = vector.broadcast %cst_13 : f32 to vector<8x1xf32>
    %17 = arith.mulf %13, %16 : vector<8x1xf32>
    %18 = arith.mulf %15, %15 : vector<8x1xf32>
    %19 = arith.subf %17, %18 : vector<8x1xf32>
    %cst_14 = arith.constant 9.99999974E-6 : f32
    %20 = vector.broadcast %cst_14 : f32 to vector<8x1xf32>
    %21 = arith.addf %19, %20 : vector<8x1xf32>
    %22 = math.rsqrt %21 : vector<8x1xf32>
    %23 = vector.broadcast %7 : vector<1x32xf32> to vector<8x32xf32>
    %24 = vector.broadcast %22 : vector<8x1xf32> to vector<8x32xf32>
    %25 = arith.mulf %23, %24 : vector<8x32xf32>
    %26 = vector.broadcast %15 : vector<8x1xf32> to vector<8x32xf32>
    %27 = arith.mulf %26, %25 : vector<8x32xf32>
    %28 = vector.broadcast %8 : vector<1x32xf32> to vector<8x32xf32>
    %29 = arith.subf %28, %27 : vector<8x32xf32>
    %30 = arith.mulf %6, %25 : vector<8x32xf32>
    %31 = arith.addf %30, %29 : vector<8x32xf32>
    %cst_15 = arith.constant 0.000000e+00 : f32
    %32 = vector.broadcast %cst_15 : f32 to vector<8x32xf32>
    %33 = arith.maximumf %31, %32 : vector<8x32xf32>
    %c0_16 = arith.constant 0 : index
    %c0_17 = arith.constant 0 : index
    %34 = vector.load %arg6[%c0_16, %c0_17] : memref<32x32xf32, #tpu.memory_space<vmem>>, vector<32x32xf32>
    %cst_18 = arith.constant dense<0.000000e+00> : vector<8x32xf32>
    %35 = tpu.matmul %1, %34, %cst_18 {dimension_numbers = #tpu.dot_dimension_numbers<[1], [0], [0], [1], [0, 0, 1, 1], [], []>} : vector<8x32xf32>, vector<32x32xf32>, vector<8x32xf32> -> vector<8x32xf32>
    %c0_19 = arith.constant 0 : index
    %c0_20 = arith.constant 0 : index
    %36 = vector.load %arg7[%c0_19, %c0_20] : memref<1x32xf32, #tpu.memory_space<vmem>>, vector<1x32xf32>
    %37 = vector.broadcast %36 : vector<1x32xf32> to vector<8x32xf32>
    %38 = arith.addf %35, %37 : vector<8x32xf32>
    %c0_21 = arith.constant 0 : index
    %c0_22 = arith.constant 0 : index
    %39 = vector.load %arg8[%c0_21, %c0_22] : memref<1x32xf32, #tpu.memory_space<vmem>>, vector<1x32xf32>
    %c0_23 = arith.constant 0 : index
    %c0_24 = arith.constant 0 : index
    %40 = vector.load %arg9[%c0_23, %c0_24] : memref<1x32xf32, #tpu.memory_space<vmem>>, vector<1x32xf32>
    %cst_25 = arith.constant dense<0.000000e+00> : vector<8xf32>
    %41 = vector.multi_reduction <add>, %38, %cst_25 [1] : vector<8x32xf32> to vector<8xf32>
    %42 = vector.shape_cast %41 : vector<8xf32> to vector<8x1xf32>
    %43 = arith.mulf %38, %38 : vector<8x32xf32>
    %cst_26 = arith.constant dense<0.000000e+00> : vector<8xf32>
    %44 = vector.multi_reduction <add>, %43, %cst_26 [1] : vector<8x32xf32> to vector<8xf32>
    %45 = vector.shape_cast %44 : vector<8xf32> to vector<8x1xf32>
    %cst_27 = arith.constant 3.125000e-02 : f32
    %46 = vector.broadcast %cst_27 : f32 to vector<8x1xf32>
    %47 = arith.mulf %42, %46 : vector<8x1xf32>
    %cst_28 = arith.constant 3.125000e-02 : f32
    %48 = vector.broadcast %cst_28 : f32 to vector<8x1xf32>
    %49 = arith.mulf %45, %48 : vector<8x1xf32>
    %50 = arith.mulf %47, %47 : vector<8x1xf32>
    %51 = arith.subf %49, %50 : vector<8x1xf32>
    %cst_29 = arith.constant 9.99999974E-6 : f32
    %52 = vector.broadcast %cst_29 : f32 to vector<8x1xf32>
    %53 = arith.addf %51, %52 : vector<8x1xf32>
    %54 = math.rsqrt %53 : vector<8x1xf32>
    %55 = vector.broadcast %39 : vector<1x32xf32> to vector<8x32xf32>
    %56 = vector.broadcast %54 : vector<8x1xf32> to vector<8x32xf32>
    %57 = arith.mulf %55, %56 : vector<8x32xf32>
    %58 = vector.broadcast %47 : vector<8x1xf32> to vector<8x32xf32>
    %59 = arith.mulf %58, %57 : vector<8x32xf32>
    %60 = vector.broadcast %40 : vector<1x32xf32> to vector<8x32xf32>
    %61 = arith.subf %60, %59 : vector<8x32xf32>
    %62 = arith.mulf %38, %57 : vector<8x32xf32>
    %63 = arith.addf %62, %61 : vector<8x32xf32>
    %cst_30 = arith.constant 0.000000e+00 : f32
    %64 = vector.broadcast %cst_30 : f32 to vector<8x32xf32>
    %65 = arith.maximumf %63, %64 : vector<8x32xf32>
    %c0_31 = arith.constant 0 : index
    %c0_32 = arith.constant 0 : index
    %66 = vector.load %arg10[%c0_31, %c0_32] : memref<32x32xf32, #tpu.memory_space<vmem>>, vector<32x32xf32>
    %cst_33 = arith.constant dense<0.000000e+00> : vector<8x32xf32>
    %67 = tpu.matmul %1, %66, %cst_33 {dimension_numbers = #tpu.dot_dimension_numbers<[1], [0], [0], [1], [0, 0, 1, 1], [], []>} : vector<8x32xf32>, vector<32x32xf32>, vector<8x32xf32> -> vector<8x32xf32>
    %c0_34 = arith.constant 0 : index
    %c0_35 = arith.constant 0 : index
    %68 = vector.load %arg11[%c0_34, %c0_35] : memref<1x32xf32, #tpu.memory_space<vmem>>, vector<1x32xf32>
    %69 = vector.broadcast %68 : vector<1x32xf32> to vector<8x32xf32>
    %70 = arith.addf %67, %69 : vector<8x32xf32>
    %c0_36 = arith.constant 0 : index
    %c0_37 = arith.constant 0 : index
    %71 = vector.load %arg12[%c0_36, %c0_37] : memref<1x32xf32, #tpu.memory_space<vmem>>, vector<1x32xf32>
    %c0_38 = arith.constant 0 : index
    %c0_39 = arith.constant 0 : index
    %72 = vector.load %arg13[%c0_38, %c0_39] : memref<1x32xf32, #tpu.memory_space<vmem>>, vector<1x32xf32>
    %cst_40 = arith.constant dense<0.000000e+00> : vector<8xf32>
    %73 = vector.multi_reduction <add>, %70, %cst_40 [1] : vector<8x32xf32> to vector<8xf32>
    %74 = vector.shape_cast %73 : vector<8xf32> to vector<8x1xf32>
    %75 = arith.mulf %70, %70 : vector<8x32xf32>
    %cst_41 = arith.constant dense<0.000000e+00> : vector<8xf32>
    %76 = vector.multi_reduction <add>, %75, %cst_41 [1] : vector<8x32xf32> to vector<8xf32>
    %77 = vector.shape_cast %76 : vector<8xf32> to vector<8x1xf32>
    %cst_42 = arith.constant 3.125000e-02 : f32
    %78 = vector.broadcast %cst_42 : f32 to vector<8x1xf32>
    %79 = arith.mulf %74, %78 : vector<8x1xf32>
    %cst_43 = arith.constant 3.125000e-02 : f32
    %80 = vector.broadcast %cst_43 : f32 to vector<8x1xf32>
    %81 = arith.mulf %77, %80 : vector<8x1xf32>
    %82 = arith.mulf %79, %79 : vector<8x1xf32>
    %83 = arith.subf %81, %82 : vector<8x1xf32>
    %cst_44 = arith.constant 9.99999974E-6 : f32
    %84 = vector.broadcast %cst_44 : f32 to vector<8x1xf32>
    %85 = arith.addf %83, %84 : vector<8x1xf32>
    %86 = math.rsqrt %85 : vector<8x1xf32>
    %87 = vector.broadcast %71 : vector<1x32xf32> to vector<8x32xf32>
    %88 = vector.broadcast %86 : vector<8x1xf32> to vector<8x32xf32>
    %89 = arith.mulf %87, %88 : vector<8x32xf32>
    %90 = vector.broadcast %79 : vector<8x1xf32> to vector<8x32xf32>
    %91 = arith.mulf %90, %89 : vector<8x32xf32>
    %92 = vector.broadcast %72 : vector<1x32xf32> to vector<8x32xf32>
    %93 = arith.subf %92, %91 : vector<8x32xf32>
    %94 = arith.mulf %70, %89 : vector<8x32xf32>
    %95 = arith.addf %94, %93 : vector<8x32xf32>
    %cst_45 = arith.constant 0.000000e+00 : f32
    %96 = vector.broadcast %cst_45 : f32 to vector<8x32xf32>
    %97 = arith.maximumf %95, %96 : vector<8x32xf32>
    %c0_46 = arith.constant 0 : index
    %c0_47 = arith.constant 0 : index
    %98 = vector.load %arg14[%c0_46, %c0_47] : memref<32x32xf32, #tpu.memory_space<vmem>>, vector<32x32xf32>
    %c0_48 = arith.constant 0 : index
    %c0_49 = arith.constant 0 : index
    %99 = vector.load %arg15[%c0_48, %c0_49] : memref<1x32xf32, #tpu.memory_space<vmem>>, vector<1x32xf32>
    %c0_50 = arith.constant 0 : index
    %c0_51 = arith.constant 0 : index
    %100 = vector.load %arg16[%c0_50, %c0_51] : memref<1x32xf32, #tpu.memory_space<vmem>>, vector<1x32xf32>
    %c0_52 = arith.constant 0 : index
    %c0_53 = arith.constant 0 : index
    %101 = vector.load %arg17[%c0_52, %c0_53] : memref<1x32xf32, #tpu.memory_space<vmem>>, vector<1x32xf32>
    %c0_54 = arith.constant 0 : index
    %c0_55 = arith.constant 0 : index
    %102 = vector.load %arg18[%c0_54, %c0_55] : memref<8x16xf32, #tpu.memory_space<vmem>>, vector<8x16xf32>
    %c0_56 = arith.constant 0 : index
    %c0_57 = arith.constant 0 : index
    %103 = vector.load %arg19[%c0_56, %c0_57] : memref<1x16xf32, #tpu.memory_space<vmem>>, vector<1x16xf32>
    %c0_58 = arith.constant 0 : index
    %c0_59 = arith.constant 0 : index
    %104 = vector.load %arg20[%c0_58, %c0_59] : memref<16x8xf32, #tpu.memory_space<vmem>>, vector<16x8xf32>
    %c0_60 = arith.constant 0 : index
    %c0_61 = arith.constant 0 : index
    %105 = vector.load %arg21[%c0_60, %c0_61] : memref<1x8xf32, #tpu.memory_space<vmem>>, vector<1x8xf32>
    %c0_62 = arith.constant 0 : index
    %c0_63 = arith.constant 0 : index
    %106 = vector.load %arg22[%c0_62, %c0_63] : memref<32x32xf32, #tpu.memory_space<vmem>>, vector<32x32xf32>
    %c0_64 = arith.constant 0 : index
    %c0_65 = arith.constant 0 : index
    %107 = vector.load %arg23[%c0_64, %c0_65] : memref<1x32xf32, #tpu.memory_space<vmem>>, vector<1x32xf32>
    %108 = math.cos %33 : vector<8x32xf32>
    %109 = arith.mulf %65, %108 : vector<8x32xf32>
    %110 = math.sin %33 : vector<8x32xf32>
    %111 = arith.mulf %97, %110 : vector<8x32xf32>
    %112 = arith.addf %109, %111 : vector<8x32xf32>
    %cst_66 = arith.constant dense<0.000000e+00> : vector<8x32xf32>
    %113 = tpu.matmul %112, %98, %cst_66 {dimension_numbers = #tpu.dot_dimension_numbers<[1], [0], [0], [1], [0, 0, 1, 1], [], []>} : vector<8x32xf32>, vector<32x32xf32>, vector<8x32xf32> -> vector<8x32xf32>
    %114 = vector.broadcast %99 : vector<1x32xf32> to vector<8x32xf32>
    %115 = arith.addf %113, %114 : vector<8x32xf32>
    %cst_67 = arith.constant dense<0.000000e+00> : vector<8xf32>
    %116 = vector.multi_reduction <add>, %115, %cst_67 [1] : vector<8x32xf32> to vector<8xf32>
    %117 = vector.shape_cast %116 : vector<8xf32> to vector<8x1xf32>
    %118 = arith.mulf %115, %115 : vector<8x32xf32>
    %cst_68 = arith.constant dense<0.000000e+00> : vector<8xf32>
    %119 = vector.multi_reduction <add>, %118, %cst_68 [1] : vector<8x32xf32> to vector<8xf32>
    %120 = vector.shape_cast %119 : vector<8xf32> to vector<8x1xf32>
    %cst_69 = arith.constant 3.125000e-02 : f32
    %121 = vector.broadcast %cst_69 : f32 to vector<8x1xf32>
    %122 = arith.mulf %117, %121 : vector<8x1xf32>
    %cst_70 = arith.constant 3.125000e-02 : f32
    %123 = vector.broadcast %cst_70 : f32 to vector<8x1xf32>
    %124 = arith.mulf %120, %123 : vector<8x1xf32>
    %125 = arith.mulf %122, %122 : vector<8x1xf32>
    %126 = arith.subf %124, %125 : vector<8x1xf32>
    %cst_71 = arith.constant 9.99999974E-6 : f32
    %127 = vector.broadcast %cst_71 : f32 to vector<8x1xf32>
    %128 = arith.addf %126, %127 : vector<8x1xf32>
    %129 = math.rsqrt %128 : vector<8x1xf32>
    %130 = vector.broadcast %100 : vector<1x32xf32> to vector<8x32xf32>
    %131 = vector.broadcast %129 : vector<8x1xf32> to vector<8x32xf32>
    %132 = arith.mulf %130, %131 : vector<8x32xf32>
    %133 = vector.broadcast %122 : vector<8x1xf32> to vector<8x32xf32>
    %134 = arith.mulf %133, %132 : vector<8x32xf32>
    %135 = vector.broadcast %101 : vector<1x32xf32> to vector<8x32xf32>
    %136 = arith.subf %135, %134 : vector<8x32xf32>
    %137 = arith.mulf %115, %132 : vector<8x32xf32>
    %138 = arith.addf %137, %136 : vector<8x32xf32>
    %cst_72 = arith.constant 0.000000e+00 : f32
    %139 = vector.broadcast %cst_72 : f32 to vector<8x32xf32>
    %140 = arith.maximumf %138, %139 : vector<8x32xf32>
    %141 = vector.shape_cast %140 : vector<8x32xf32> to vector<1x8x32xf32>
    %cst_73 = arith.constant dense<0.000000e+00> : vector<1x8xf32>
    %142 = vector.multi_reduction <add>, %141, %cst_73 [2] : vector<1x8x32xf32> to vector<1x8xf32>
    %cst_74 = arith.constant 3.200000e+01 : f32
    %143 = vector.broadcast %cst_74 : f32 to vector<1x8xf32>
    %144 = arith.divf %142, %143 : vector<1x8xf32>
    %cst_75 = arith.constant dense<0.000000e+00> : vector<1x16xf32>
    %145 = tpu.matmul %144, %102, %cst_75 {dimension_numbers = #tpu.dot_dimension_numbers<[1], [0], [0], [1], [0, 0, 1, 1], [], []>} : vector<1x8xf32>, vector<8x16xf32>, vector<1x16xf32> -> vector<1x16xf32>
    %146 = arith.addf %145, %103 : vector<1x16xf32>
    %cst_76 = arith.constant 0.000000e+00 : f32
    %147 = vector.broadcast %cst_76 : f32 to vector<1x16xf32>
    %148 = arith.maximumf %146, %147 : vector<1x16xf32>
    %cst_77 = arith.constant dense<0.000000e+00> : vector<1x8xf32>
    %149 = tpu.matmul %148, %104, %cst_77 {dimension_numbers = #tpu.dot_dimension_numbers<[1], [0], [0], [1], [0, 0, 1, 1], [], []>} : vector<1x16xf32>, vector<16x8xf32>, vector<1x8xf32> -> vector<1x8xf32>
    %150 = arith.addf %149, %105 : vector<1x8xf32>
    %cst_78 = arith.constant dense<0xFF800000> : vector<1xf32>
    %151 = vector.multi_reduction <maximumf>, %150, %cst_78 [1] : vector<1x8xf32> to vector<1xf32>
    %152 = vector.shape_cast %151 : vector<1xf32> to vector<1x1xf32>
    %153 = vector.broadcast %152 : vector<1x1xf32> to vector<1x8xf32>
    %154 = arith.subf %150, %153 : vector<1x8xf32>
    %155 = math.exp %154 : vector<1x8xf32>
    %cst_79 = arith.constant dense<0.000000e+00> : vector<1xf32>
    %156 = vector.multi_reduction <add>, %155, %cst_79 [1] : vector<1x8xf32> to vector<1xf32>
    %157 = vector.shape_cast %156 : vector<1xf32> to vector<1x1xf32>
    %158 = tpu.reciprocal %157 {approx = true} : vector<1x1xf32> -> vector<1x1xf32>
    %159 = vector.broadcast %158 : vector<1x1xf32> to vector<1x8xf32>
    %160 = arith.mulf %155, %159 : vector<1x8xf32>
    %161 = vector.shape_cast %160 : vector<1x8xf32> to vector<1x8x1xf32>
    %162 = vector.broadcast %161 : vector<1x8x1xf32> to vector<1x8x32xf32>
    %163 = arith.mulf %141, %162 : vector<1x8x32xf32>
    %164 = vector.shape_cast %163 : vector<1x8x32xf32> to vector<8x32xf32>
    %cst_80 = arith.constant dense<0.000000e+00> : vector<8x32xf32>
    %165 = tpu.matmul %164, %106, %cst_80 {dimension_numbers = #tpu.dot_dimension_numbers<[1], [0], [0], [1], [0, 0, 1, 1], [], []>} : vector<8x32xf32>, vector<32x32xf32>, vector<8x32xf32> -> vector<8x32xf32>
    %166 = vector.broadcast %107 : vector<1x32xf32> to vector<8x32xf32>
    %167 = arith.addf %165, %166 : vector<8x32xf32>
    %168 = vector.shape_cast %167 : vector<8x32xf32> to vector<1x8x32xf32>
    %c0_81 = arith.constant 0 : index
    %c0_82 = arith.constant 0 : index
    %c0_83 = arith.constant 0 : index
    %169 = vector.load %arg24[%c0_81, %c0_82, %c0_83] : memref<1x8x32xf32, #tpu.memory_space<vmem>>, vector<1x8x32xf32>
    tpu.vector_store %arg24[%c0_81, %c0_82, %c0_83], %168 {strides = array<i32>} : memref<1x8x32xf32, #tpu.memory_space<vmem>>, vector<1x8x32xf32>,
    return
  }
  func.func @transform_0(%arg0: i32) -> (i32, i32, i32) {
    %c0_i32 = arith.constant 0 : i32
    %c0_i32_0 = arith.constant 0 : i32
    %c0_i32_1 = arith.constant 0 : i32
    return %arg0, %c0_i32, %c0_i32_0 : i32, i32, i32
  }
  func.func @transform_1(%arg0: i32) -> (i32, i32) {
    %c0_i32 = arith.constant 0 : i32
    %c0_i32_0 = arith.constant 0 : i32
    %c0_i32_1 = arith.constant 0 : i32
    return %c0_i32, %c0_i32_0 : i32, i32
  }
  func.func @transform_2(%arg0: i32) -> (i32, i32) {
    %c0_i32 = arith.constant 0 : i32
    %c0_i32_0 = arith.constant 0 : i32
    %c0_i32_1 = arith.constant 0 : i32
    return %c0_i32, %c0_i32_0 : i32, i32
  }
  func.func @transform_3(%arg0: i32) -> (i32, i32) {
    %c0_i32 = arith.constant 0 : i32
    %c0_i32_0 = arith.constant 0 : i32
    %c0_i32_1 = arith.constant 0 : i32
    return %c0_i32, %c0_i32_0 : i32, i32
  }
  func.func @transform_4(%arg0: i32) -> (i32, i32) {
    %c0_i32 = arith.constant 0 : i32
    %c0_i32_0 = arith.constant 0 : i32
    %c0_i32_1 = arith.constant 0 : i32
    return %c0_i32, %c0_i32_0 : i32, i32
  }
  func.func @transform_5(%arg0: i32) -> (i32, i32) {
    %c0_i32 = arith.constant 0 : i32
    %c0_i32_0 = arith.constant 0 : i32
    %c0_i32_1 = arith.constant 0 : i32
    return %c0_i32, %c0_i32_0 : i32, i32
  }
  func.func @transform_6(%arg0: i32) -> (i32, i32) {
    %c0_i32 = arith.constant 0 : i32
    %c0_i32_0 = arith.constant 0 : i32
    %c0_i32_1 = arith.constant 0 : i32
    return %c0_i32, %c0_i32_0 : i32, i32
  }
  func.func @transform_7(%arg0: i32) -> (i32, i32) {
    %c0_i32 = arith.constant 0 : i32
    %c0_i32_0 = arith.constant 0 : i32
    %c0_i32_1 = arith.constant 0 : i32
    return %c0_i32, %c0_i32_0 : i32, i32
  }
  func.func @transform_8(%arg0: i32) -> (i32, i32) {
    %c0_i32 = arith.constant 0 : i32
    %c0_i32_0 = arith.constant 0 : i32
    %c0_i32_1 = arith.constant 0 : i32
    return %c0_i32, %c0_i32_0 : i32, i32
  }
  func.func @transform_9(%arg0: i32) -> (i32, i32) {
    %c0_i32 = arith.constant 0 : i32
    %c0_i32_0 = arith.constant 0 : i32
    %c0_i32_1 = arith.constant 0 : i32
    return %c0_i32, %c0_i32_0 : i32, i32
  }
  func.func @transform_10(%arg0: i32) -> (i32, i32) {
    %c0_i32 = arith.constant 0 : i32
    %c0_i32_0 = arith.constant 0 : i32
    %c0_i32_1 = arith.constant 0 : i32
    return %c0_i32, %c0_i32_0 : i32, i32
  }
  func.func @transform_11(%arg0: i32) -> (i32, i32) {
    %c0_i32 = arith.constant 0 : i32
    %c0_i32_0 = arith.constant 0 : i32
    %c0_i32_1 = arith.constant 0 : i32
    return %c0_i32, %c0_i32_0 : i32, i32
  }
  func.func @transform_12(%arg0: i32) -> (i32, i32) {
    %c0_i32 = arith.constant 0 : i32
    %c0_i32_0 = arith.constant 0 : i32
    %c0_i32_1 = arith.constant 0 : i32
    return %c0_i32, %c0_i32_0 : i32, i32
  }
  func.func @transform_13(%arg0: i32) -> (i32, i32) {
    %c0_i32 = arith.constant 0 : i32
    %c0_i32_0 = arith.constant 0 : i32
    %c0_i32_1 = arith.constant 0 : i32
    return %c0_i32, %c0_i32_0 : i32, i32
  }
  func.func @transform_14(%arg0: i32) -> (i32, i32) {
    %c0_i32 = arith.constant 0 : i32
    %c0_i32_0 = arith.constant 0 : i32
    %c0_i32_1 = arith.constant 0 : i32
    return %c0_i32, %c0_i32_0 : i32, i32
  }
  func.func @transform_15(%arg0: i32) -> (i32, i32) {
    %c0_i32 = arith.constant 0 : i32
    %c0_i32_0 = arith.constant 0 : i32
    %c0_i32_1 = arith.constant 0 : i32
    return %c0_i32, %c0_i32_0 : i32, i32
  }
  func.func @transform_16(%arg0: i32) -> (i32, i32) {
    %c0_i32 = arith.constant 0 : i32
    %c0_i32_0 = arith.constant 0 : i32
    %c0_i32_1 = arith.constant 0 : i32
    return %c0_i32, %c0_i32_0 : i32, i32
  }
  func.func @transform_17(%arg0: i32) -> (i32, i32) {
    %c0_i32 = arith.constant 0 : i32
    %c0_i32_0 = arith.constant 0 : i32
    %c0_i32_1 = arith.constant 0 : i32
    return %c0_i32, %c0_i32_0 : i32, i32
  }
  func.func @transform_18(%arg0: i32) -> (i32, i32) {
    %c0_i32 = arith.constant 0 : i32
    %c0_i32_0 = arith.constant 0 : i32
    %c0_i32_1 = arith.constant 0 : i32
    return %c0_i32, %c0_i32_0 : i32, i32
  }
  func.func @transform_19(%arg0: i32) -> (i32, i32) {
    %c0_i32 = arith.constant 0 : i32
    %c0_i32_0 = arith.constant 0 : i32
    %c0_i32_1 = arith.constant 0 : i32
    return %c0_i32, %c0_i32_0 : i32, i32
  }
  func.func @transform_20(%arg0: i32) -> (i32, i32) {
    %c0_i32 = arith.constant 0 : i32
    %c0_i32_0 = arith.constant 0 : i32
    %c0_i32_1 = arith.constant 0 : i32
    return %c0_i32, %c0_i32_0 : i32, i32
  }
  func.func @transform_21(%arg0: i32) -> (i32, i32) {
    %c0_i32 = arith.constant 0 : i32
    %c0_i32_0 = arith.constant 0 : i32
    %c0_i32_1 = arith.constant 0 : i32
    return %c0_i32, %c0_i32_0 : i32, i32
  }
  func.func @transform_22(%arg0: i32) -> (i32, i32) {
    %c0_i32 = arith.constant 0 : i32
    %c0_i32_0 = arith.constant 0 : i32
    %c0_i32_1 = arith.constant 0 : i32
    return %c0_i32, %c0_i32_0 : i32, i32
  }
  func.func @transform_23(%arg0: i32) -> (i32, i32, i32) {
    %c0_i32 = arith.constant 0 : i32
    %c0_i32_0 = arith.constant 0 : i32
    %c0_i32_1 = arith.constant 0 : i32
    return %arg0, %c0_i32, %c0_i32_0 : i32, i32, i32
  }
}

module attributes {stable_mosaic.version = 11 : i64} {
  func.func @dwf_kernel_split(%arg0: i32, %arg1: memref<1x8x32xf32, #tpu.memory_space<vmem>>, %arg2: memref<32x32xf32, #tpu.memory_space<vmem>>, %arg3: memref<1x32xf32, #tpu.memory_space<vmem>>, %arg4: memref<1x32xf32, #tpu.memory_space<vmem>>, %arg5: memref<1x32xf32, #tpu.memory_space<vmem>>, %arg6: memref<32x32xf32, #tpu.memory_space<vmem>>, %arg7: memref<1x32xf32, #tpu.memory_space<vmem>>, %arg8: memref<1x32xf32, #tpu.memory_space<vmem>>, %arg9: memref<1x32xf32, #tpu.memory_space<vmem>>, %arg10: memref<32x32xf32, #tpu.memory_space<vmem>>, %arg11: memref<1x32xf32, #tpu.memory_space<vmem>>, %arg12: memref<1x32xf32, #tpu.memory_space<vmem>>, %arg13: memref<1x32xf32, #tpu.memory_space<vmem>>, %arg14: memref<32x32xf32, #tpu.memory_space<vmem>>, %arg15: memref<1x32xf32, #tpu.memory_space<vmem>>, %arg16: memref<1x32xf32, #tpu.memory_space<vmem>>, %arg17: memref<1x32xf32, #tpu.memory_space<vmem>>, %arg18: memref<8x16xf32, #tpu.memory_space<vmem>>, %arg19: memref<1x16xf32, #tpu.memory_space<vmem>>, %arg20: memref<16x8xf32, #tpu.memory_space<vmem>>, %arg21: memref<1x8xf32, #tpu.memory_space<vmem>>, %arg22: memref<32x32xf32, #tpu.memory_space<vmem>>, %arg23: memref<1x32xf32, #tpu.memory_space<vmem>>, %arg24: memref<1x8x32xf32, #tpu.memory_space<vmem>>) attributes {dimension_semantics = [#tpu.dimension_semantics<parallel>], iteration_bounds = array<i64: 2>, scalar_prefetch = 0 : i64, scratch_operands = 0 : i64, tpu.core_type = #tpu.core_type<tc>, window_params = [{transform_indices = @transform_0, window_bounds = array<i64: 1, 8, 32>}, {pipeline_mode = #tpu.pipeline_mode<synchronous>, transform_indices = @transform_1, window_bounds = array<i64: 32, 32>}, {pipeline_mode = #tpu.pipeline_mode<synchronous>, transform_indices = @transform_2, window_bounds = array<i64: 1, 32>}, {pipeline_mode = #tpu.pipeline_mode<synchronous>, transform_indices = @transform_3, window_bounds = array<i64: 1, 32>}, {pipeline_mode = #tpu.pipeline_mode<synchronous>, transform_indices = @transform_4, window_bounds = array<i64: 1, 32>}, {pipeline_mode = #tpu.pipeline_mode<synchronous>, transform_indices = @transform_5, window_bounds = array<i64: 32, 32>}, {pipeline_mode = #tpu.pipeline_mode<synchronous>, transform_indices = @transform_6, window_bounds = array<i64: 1, 32>}, {pipeline_mode = #tpu.pipeline_mode<synchronous>, transform_indices = @transform_7, window_bounds = array<i64: 1, 32>}, {pipeline_mode = #tpu.pipeline_mode<synchronous>, transform_indices = @transform_8, window_bounds = array<i64: 1, 32>}, {pipeline_mode = #tpu.pipeline_mode<synchronous>, transform_indices = @transform_9, window_bounds = array<i64: 32, 32>}, {pipeline_mode = #tpu.pipeline_mode<synchronous>, transform_indices = @transform_10, window_bounds = array<i64: 1, 32>}, {pipeline_mode = #tpu.pipeline_mode<synchronous>, transform_indices = @transform_11, window_bounds = array<i64: 1, 32>}, {pipeline_mode = #tpu.pipeline_mode<synchronous>, transform_indices = @transform_12, window_bounds = array<i64: 1, 32>}, {pipeline_mode = #tpu.pipeline_mode<synchronous>, transform_indices = @transform_13, window_bounds = array<i64: 32, 32>}, {pipeline_mode = #tpu.pipeline_mode<synchronous>, transform_indices = @transform_14, window_bounds = array<i64: 1, 32>}, {pipeline_mode = #tpu.pipeline_mode<synchronous>, transform_indices = @transform_15, window_bounds = array<i64: 1, 32>}, {pipeline_mode = #tpu.pipeline_mode<synchronous>, transform_indices = @transform_16, window_bounds = array<i64: 1, 32>}, {pipeline_mode = #tpu.pipeline_mode<synchronous>, transform_indices = @transform_17, window_bounds = array<i64: 8, 16>}, {pipeline_mode = #tpu.pipeline_mode<synchronous>, transform_indices = @transform_18, window_bounds = array<i64: 1, 16>}, {pipeline_mode = #tpu.pipeline_mode<synchronous>, transform_indices = @transform_19, window_bounds = array<i64: 16, 8>}, {pipeline_mode = #tpu.pipeline_mode<synchronous>, transform_indices = @transform_20, window_bounds = array<i64: 1, 8>}, {pipeline_mode = #tpu.pipeline_mode<synchronous>, transform_indices = @transform_21, window_bounds = array<i64: 32, 32>}, {pipeline_mode = #tpu.pipeline_mode<synchronous>, transform_indices = @transform_22, window_bounds = array<i64: 1, 32>}, {transform_indices = @transform_23, window_bounds = array<i64: 1, 8, 32>}]} {
    %c0 = arith.constant 0 : index
    %c0_0 = arith.constant 0 : index
    %c0_1 = arith.constant 0 : index
    %0 = vector.load %arg1[%c0, %c0_0, %c0_1] : memref<1x8x32xf32, #tpu.memory_space<vmem>>, vector<1x8x32xf32>
    %1 = vector.shape_cast %0 : vector<1x8x32xf32> to vector<8x32xf32>
    %c0_2 = arith.constant 0 : index
    %c0_3 = arith.constant 0 : index
    %2 = vector.load %arg2[%c0_2, %c0_3] : memref<32x32xf32, #tpu.memory_space<vmem>>, vector<32x32xf32>
    %cst = arith.constant dense<0.000000e+00> : vector<8x32xf32>
    %3 = tpu.matmul %1, %2, %cst {dimension_numbers = #tpu.dot_dimension_numbers<[1], [0], [0], [1], [0, 0, 1, 1], [], []>} : vector<8x32xf32>, vector<32x32xf32>, vector<8x32xf32> -> vector<8x32xf32>
    %c0_4 = arith.constant 0 : index
    %c0_5 = arith.constant 0 : index
    %4 = vector.load %arg3[%c0_4, %c0_5] : memref<1x32xf32, #tpu.memory_space<vmem>>, vector<1x32xf32>
    %5 = vector.broadcast %4 : vector<1x32xf32> to vector<8x32xf32>
    %6 = arith.addf %3, %5 : vector<8x32xf32>
    %c0_6 = arith.constant 0 : index
    %c0_7 = arith.constant 0 : index
    %7 = vector.load %arg4[%c0_6, %c0_7] : memref<1x32xf32, #tpu.memory_space<vmem>>, vector<1x32xf32>
    %c0_8 = arith.constant 0 : index
    %c0_9 = arith.constant 0 : index
    %8 = vector.load %arg5[%c0_8, %c0_9] : memref<1x32xf32, #tpu.memory_space<vmem>>, vector<1x32xf32>
    %cst_10 = arith.constant dense<0.000000e+00> : vector<8xf32>
    %9 = vector.multi_reduction <add>, %6, %cst_10 [1] : vector<8x32xf32> to vector<8xf32>
    %10 = vector.shape_cast %9 : vector<8xf32> to vector<8x1xf32>
    %11 = arith.mulf %6, %6 : vector<8x32xf32>
    %cst_11 = arith.constant dense<0.000000e+00> : vector<8xf32>
    %12 = vector.multi_reduction <add>, %11, %cst_11 [1] : vector<8x32xf32> to vector<8xf32>
    %13 = vector.shape_cast %12 : vector<8xf32> to vector<8x1xf32>
    %cst_12 = arith.constant 3.125000e-02 : f32
    %14 = vector.broadcast %cst_12 : f32 to vector<8x1xf32>
    %15 = arith.mulf %10, %14 : vector<8x1xf32>
    %cst_13 = arith.constant 3.125000e-02 : f32
    %16 = vector.broadcast %cst_13 : f32 to vector<8x1xf32>
    %17 = arith.mulf %13, %16 : vector<8x1xf32>
    %18 = arith.mulf %15, %15 : vector<8x1xf32>
    %19 = arith.subf %17, %18 : vector<8x1xf32>
    %cst_14 = arith.constant 9.99999974E-6 : f32
    %20 = vector.broadcast %cst_14 : f32 to vector<8x1xf32>
    %21 = arith.addf %19, %20 : vector<8x1xf32>
    %22 = math.rsqrt %21 : vector<8x1xf32>
    %23 = vector.broadcast %7 : vector<1x32xf32> to vector<8x32xf32>
    %24 = vector.broadcast %22 : vector<8x1xf32> to vector<8x32xf32>
    %25 = arith.mulf %23, %24 : vector<8x32xf32>
    %26 = vector.broadcast %15 : vector<8x1xf32> to vector<8x32xf32>
    %27 = arith.mulf %26, %25 : vector<8x32xf32>
    %28 = vector.broadcast %8 : vector<1x32xf32> to vector<8x32xf32>
    %29 = arith.subf %28, %27 : vector<8x32xf32>
    %30 = arith.mulf %6, %25 : vector<8x32xf32>
    %31 = arith.addf %30, %29 : vector<8x32xf32>
    %cst_15 = arith.constant 0.000000e+00 : f32
    %32 = vector.broadcast %cst_15 : f32 to vector<8x32xf32>
    %33 = arith.maximumf %31, %32 : vector<8x32xf32>
    %c0_16 = arith.constant 0 : index
    %c0_17 = arith.constant 0 : index
    %34 = vector.load %arg6[%c0_16, %c0_17] : memref<32x32xf32, #tpu.memory_space<vmem>>, vector<32x32xf32>
    %cst_18 = arith.constant dense<0.000000e+00> : vector<8x32xf32>
    %35 = tpu.matmul %1, %34, %cst_18 {dimension_numbers = #tpu.dot_dimension_numbers<[1], [0], [0], [1], [0, 0, 1, 1], [], []>} : vector<8x32xf32>, vector<32x32xf32>, vector<8x32xf32> -> vector<8x32xf32>
    %c0_19 = arith.constant 0 : index
    %c0_20 = arith.constant 0 : index
    %36 = vector.load %arg7[%c0_19, %c0_20] : memref<1x32xf32, #tpu.memory_space<vmem>>, vector<1x32xf32>
    %37 = vector.broadcast %36 : vector<1x32xf32> to vector<8x32xf32>
    %38 = arith.addf %35, %37 : vector<8x32xf32>
    %c0_21 = arith.constant 0 : index
    %c0_22 = arith.constant 0 : index
    %39 = vector.load %arg8[%c0_21, %c0_22] : memref<1x32xf32, #tpu.memory_space<vmem>>, vector<1x32xf32>
    %c0_23 = arith.constant 0 : index
    %c0_24 = arith.constant 0 : index
    %40 = vector.load %arg9[%c0_23, %c0_24] : memref<1x32xf32, #tpu.memory_space<vmem>>, vector<1x32xf32>
    %cst_25 = arith.constant dense<0.000000e+00> : vector<8xf32>
    %41 = vector.multi_reduction <add>, %38, %cst_25 [1] : vector<8x32xf32> to vector<8xf32>
    %42 = vector.shape_cast %41 : vector<8xf32> to vector<8x1xf32>
    %43 = arith.mulf %38, %38 : vector<8x32xf32>
    %cst_26 = arith.constant dense<0.000000e+00> : vector<8xf32>
    %44 = vector.multi_reduction <add>, %43, %cst_26 [1] : vector<8x32xf32> to vector<8xf32>
    %45 = vector.shape_cast %44 : vector<8xf32> to vector<8x1xf32>
    %cst_27 = arith.constant 3.125000e-02 : f32
    %46 = vector.broadcast %cst_27 : f32 to vector<8x1xf32>
    %47 = arith.mulf %42, %46 : vector<8x1xf32>
    %cst_28 = arith.constant 3.125000e-02 : f32
    %48 = vector.broadcast %cst_28 : f32 to vector<8x1xf32>
    %49 = arith.mulf %45, %48 : vector<8x1xf32>
    %50 = arith.mulf %47, %47 : vector<8x1xf32>
    %51 = arith.subf %49, %50 : vector<8x1xf32>
    %cst_29 = arith.constant 9.99999974E-6 : f32
    %52 = vector.broadcast %cst_29 : f32 to vector<8x1xf32>
    %53 = arith.addf %51, %52 : vector<8x1xf32>
    %54 = math.rsqrt %53 : vector<8x1xf32>
    %55 = vector.broadcast %39 : vector<1x32xf32> to vector<8x32xf32>
    %56 = vector.broadcast %54 : vector<8x1xf32> to vector<8x32xf32>
    %57 = arith.mulf %55, %56 : vector<8x32xf32>
    %58 = vector.broadcast %47 : vector<8x1xf32> to vector<8x32xf32>
    %59 = arith.mulf %58, %57 : vector<8x32xf32>
    %60 = vector.broadcast %40 : vector<1x32xf32> to vector<8x32xf32>
    %61 = arith.subf %60, %59 : vector<8x32xf32>
    %62 = arith.mulf %38, %57 : vector<8x32xf32>
    %63 = arith.addf %62, %61 : vector<8x32xf32>
    %cst_30 = arith.constant 0.000000e+00 : f32
    %64 = vector.broadcast %cst_30 : f32 to vector<8x32xf32>
    %65 = arith.maximumf %63, %64 : vector<8x32xf32>
    %c0_31 = arith.constant 0 : index
    %c0_32 = arith.constant 0 : index
    %66 = vector.load %arg10[%c0_31, %c0_32] : memref<32x32xf32, #tpu.memory_space<vmem>>, vector<32x32xf32>
    %cst_33 = arith.constant dense<0.000000e+00> : vector<8x32xf32>
    %67 = tpu.matmul %1, %66, %cst_33 {dimension_numbers = #tpu.dot_dimension_numbers<[1], [0], [0], [1], [0, 0, 1, 1], [], []>} : vector<8x32xf32>, vector<32x32xf32>, vector<8x32xf32> -> vector<8x32xf32>
    %c0_34 = arith.constant 0 : index
    %c0_35 = arith.constant 0 : index
    %68 = vector.load %arg11[%c0_34, %c0_35] : memref<1x32xf32, #tpu.memory_space<vmem>>, vector<1x32xf32>
    %69 = vector.broadcast %68 : vector<1x32xf32> to vector<8x32xf32>
    %70 = arith.addf %67, %69 : vector<8x32xf32>
    %c0_36 = arith.constant 0 : index
    %c0_37 = arith.constant 0 : index
    %71 = vector.load %arg12[%c0_36, %c0_37] : memref<1x32xf32, #tpu.memory_space<vmem>>, vector<1x32xf32>
    %c0_38 = arith.constant 0 : index
    %c0_39 = arith.constant 0 : index
    %72 = vector.load %arg13[%c0_38, %c0_39] : memref<1x32xf32, #tpu.memory_space<vmem>>, vector<1x32xf32>
    %cst_40 = arith.constant dense<0.000000e+00> : vector<8xf32>
    %73 = vector.multi_reduction <add>, %70, %cst_40 [1] : vector<8x32xf32> to vector<8xf32>
    %74 = vector.shape_cast %73 : vector<8xf32> to vector<8x1xf32>
    %75 = arith.mulf %70, %70 : vector<8x32xf32>
    %cst_41 = arith.constant dense<0.000000e+00> : vector<8xf32>
    %76 = vector.multi_reduction <add>, %75, %cst_41 [1] : vector<8x32xf32> to vector<8xf32>
    %77 = vector.shape_cast %76 : vector<8xf32> to vector<8x1xf32>
    %cst_42 = arith.constant 3.125000e-02 : f32
    %78 = vector.broadcast %cst_42 : f32 to vector<8x1xf32>
    %79 = arith.mulf %74, %78 : vector<8x1xf32>
    %cst_43 = arith.constant 3.125000e-02 : f32
    %80 = vector.broadcast %cst_43 : f32 to vector<8x1xf32>
    %81 = arith.mulf %77, %80 : vector<8x1xf32>
    %82 = arith.mulf %79, %79 : vector<8x1xf32>
    %83 = arith.subf %81, %82 : vector<8x1xf32>
    %cst_44 = arith.constant 9.99999974E-6 : f32
    %84 = vector.broadcast %cst_44 : f32 to vector<8x1xf32>
    %85 = arith.addf %83, %84 : vector<8x1xf32>
    %86 = math.rsqrt %85 : vector<8x1xf32>
    %87 = vector.broadcast %71 : vector<1x32xf32> to vector<8x32xf32>
    %88 = vector.broadcast %86 : vector<8x1xf32> to vector<8x32xf32>
    %89 = arith.mulf %87, %88 : vector<8x32xf32>
    %90 = vector.broadcast %79 : vector<8x1xf32> to vector<8x32xf32>
    %91 = arith.mulf %90, %89 : vector<8x32xf32>
    %92 = vector.broadcast %72 : vector<1x32xf32> to vector<8x32xf32>
    %93 = arith.subf %92, %91 : vector<8x32xf32>
    %94 = arith.mulf %70, %89 : vector<8x32xf32>
    %95 = arith.addf %94, %93 : vector<8x32xf32>
    %cst_45 = arith.constant 0.000000e+00 : f32
    %96 = vector.broadcast %cst_45 : f32 to vector<8x32xf32>
    %97 = arith.maximumf %95, %96 : vector<8x32xf32>
    %c0_46 = arith.constant 0 : index
    %c0_47 = arith.constant 0 : index
    %98 = vector.load %arg14[%c0_46, %c0_47] : memref<32x32xf32, #tpu.memory_space<vmem>>, vector<32x32xf32>
    %c0_48 = arith.constant 0 : index
    %c0_49 = arith.constant 0 : index
    %99 = vector.load %arg15[%c0_48, %c0_49] : memref<1x32xf32, #tpu.memory_space<vmem>>, vector<1x32xf32>
    %c0_50 = arith.constant 0 : index
    %c0_51 = arith.constant 0 : index
    %100 = vector.load %arg16[%c0_50, %c0_51] : memref<1x32xf32, #tpu.memory_space<vmem>>, vector<1x32xf32>
    %c0_52 = arith.constant 0 : index
    %c0_53 = arith.constant 0 : index
    %101 = vector.load %arg17[%c0_52, %c0_53] : memref<1x32xf32, #tpu.memory_space<vmem>>, vector<1x32xf32>
    %c0_54 = arith.constant 0 : index
    %c0_55 = arith.constant 0 : index
    %102 = vector.load %arg18[%c0_54, %c0_55] : memref<8x16xf32, #tpu.memory_space<vmem>>, vector<8x16xf32>
    %c0_56 = arith.constant 0 : index
    %c0_57 = arith.constant 0 : index
    %103 = vector.load %arg19[%c0_56, %c0_57] : memref<1x16xf32, #tpu.memory_space<vmem>>, vector<1x16xf32>
    %c0_58 = arith.constant 0 : index
    %c0_59 = arith.constant 0 : index
    %104 = vector.load %arg20[%c0_58, %c0_59] : memref<16x8xf32, #tpu.memory_space<vmem>>, vector<16x8xf32>
    %c0_60 = arith.constant 0 : index
    %c0_61 = arith.constant 0 : index
    %105 = vector.load %arg21[%c0_60, %c0_61] : memref<1x8xf32, #tpu.memory_space<vmem>>, vector<1x8xf32>
    %c0_62 = arith.constant 0 : index
    %c0_63 = arith.constant 0 : index
    %106 = vector.load %arg22[%c0_62, %c0_63] : memref<32x32xf32, #tpu.memory_space<vmem>>, vector<32x32xf32>
    %c0_64 = arith.constant 0 : index
    %c0_65 = arith.constant 0 : index
    %107 = vector.load %arg23[%c0_64, %c0_65] : memref<1x32xf32, #tpu.memory_space<vmem>>, vector<1x32xf32>
    %108 = math.cos %33 : vector<8x32xf32>
    %109 = arith.mulf %65, %108 : vector<8x32xf32>
    %110 = math.sin %33 : vector<8x32xf32>
    %111 = arith.mulf %97, %110 : vector<8x32xf32>
    %112 = arith.addf %109, %111 : vector<8x32xf32>
    %cst_66 = arith.constant dense<0.000000e+00> : vector<8x32xf32>
    %113 = tpu.matmul %112, %98, %cst_66 {dimension_numbers = #tpu.dot_dimension_numbers<[1], [0], [0], [1], [0, 0, 1, 1], [], []>} : vector<8x32xf32>, vector<32x32xf32>, vector<8x32xf32> -> vector<8x32xf32>
    %114 = vector.broadcast %99 : vector<1x32xf32> to vector<8x32xf32>
    %115 = arith.addf %113, %114 : vector<8x32xf32>
    %cst_67 = arith.constant dense<0.000000e+00> : vector<8xf32>
    %116 = vector.multi_reduction <add>, %115, %cst_67 [1] : vector<8x32xf32> to vector<8xf32>
    %117 = vector.shape_cast %116 : vector<8xf32> to vector<8x1xf32>
    %118 = arith.mulf %115, %115 : vector<8x32xf32>
    %cst_68 = arith.constant dense<0.000000e+00> : vector<8xf32>
    %119 = vector.multi_reduction <add>, %118, %cst_68 [1] : vector<8x32xf32> to vector<8xf32>
    %120 = vector.shape_cast %119 : vector<8xf32> to vector<8x1xf32>
    %cst_69 = arith.constant 3.125000e-02 : f32
    %121 = vector.broadcast %cst_69 : f32 to vector<8x1xf32>
    %122 = arith.mulf %117, %121 : vector<8x1xf32>
    %cst_70 = arith.constant 3.125000e-02 : f32
    %123 = vector.broadcast %cst_70 : f32 to vector<8x1xf32>
    %124 = arith.mulf %120, %123 : vector<8x1xf32>
    %125 = arith.mulf %122, %122 : vector<8x1xf32>
    %126 = arith.subf %124, %125 : vector<8x1xf32>
    %cst_71 = arith.constant 9.99999974E-6 : f32
    %127 = vector.broadcast %cst_71 : f32 to vector<8x1xf32>
    %128 = arith.addf %126, %127 : vector<8x1xf32>
    %129 = math.rsqrt %128 : vector<8x1xf32>
    %130 = vector.broadcast %100 : vector<1x32xf32> to vector<8x32xf32>
    %131 = vector.broadcast %129 : vector<8x1xf32> to vector<8x32xf32>
    %132 = arith.mulf %130, %131 : vector<8x32xf32>
    %133 = vector.broadcast %122 : vector<8x1xf32> to vector<8x32xf32>
    %134 = arith.mulf %133, %132 : vector<8x32xf32>
    %135 = vector.broadcast %101 : vector<1x32xf32> to vector<8x32xf32>
    %136 = arith.subf %135, %134 : vector<8x32xf32>
    %137 = arith.mulf %115, %132 : vector<8x32xf32>
    %138 = arith.addf %137, %136 : vector<8x32xf32>
    %cst_72 = arith.constant 0.000000e+00 : f32
    %139 = vector.broadcast %cst_72 : f32 to vector<8x32xf32>
    %140 = arith.maximumf %138, %139 : vector<8x32xf32>
    %141 = vector.shape_cast %140 : vector<8x32xf32> to vector<1x8x32xf32>
    %cst_73 = arith.constant dense<0.000000e+00> : vector<1x8xf32>
    %142 = vector.multi_reduction <add>, %141, %cst_73 [2] : vector<1x8x32xf32> to vector<1x8xf32>
    %cst_74 = arith.constant 3.200000e+01 : f32
    %143 = vector.broadcast %cst_74 : f32 to vector<1x8xf32>
    %144 = arith.divf %142, %143 : vector<1x8xf32>
    %cst_75 = arith.constant dense<0.000000e+00> : vector<1x16xf32>
    %145 = tpu.matmul %144, %102, %cst_75 {dimension_numbers = #tpu.dot_dimension_numbers<[1], [0], [0], [1], [0, 0, 1, 1], [], []>} : vector<1x8xf32>, vector<8x16xf32>, vector<1x16xf32> -> vector<1x16xf32>
    %146 = arith.addf %145, %103 : vector<1x16xf32>
    %cst_76 = arith.constant 0.000000e+00 : f32
    %147 = vector.broadcast %cst_76 : f32 to vector<1x16xf32>
    %148 = arith.maximumf %146, %147 : vector<1x16xf32>
    %cst_77 = arith.constant dense<0.000000e+00> : vector<1x8xf32>
    %149 = tpu.matmul %148, %104, %cst_77 {dimension_numbers = #tpu.dot_dimension_numbers<[1], [0], [0], [1], [0, 0, 1, 1], [], []>} : vector<1x16xf32>, vector<16x8xf32>, vector<1x8xf32> -> vector<1x8xf32>
    %150 = arith.addf %149, %105 : vector<1x8xf32>
    %cst_78 = arith.constant dense<0xFF800000> : vector<1xf32>
    %151 = vector.multi_reduction <maximumf>, %150, %cst_78 [1] : vector<1x8xf32> to vector<1xf32>
    %152 = vector.shape_cast %151 : vector<1xf32> to vector<1x1xf32>
    %153 = vector.broadcast %152 : vector<1x1xf32> to vector<1x8xf32>
    %154 = arith.subf %150, %153 : vector<1x8xf32>
    %155 = math.exp %154 : vector<1x8xf32>
    %cst_79 = arith.constant dense<0.000000e+00> : vector<1xf32>
    %156 = vector.multi_reduction <add>, %155, %cst_79 [1] : vector<1x8xf32> to vector<1xf32>
    %157 = vector.shape_cast %156 : vector<1xf32> to vector<1x1xf32>
    %158 = tpu.reciprocal %157 {approx = true} : vector<1x1xf32> -> vector<1x1xf32>
    %159 = vector.broadcast %158 : vector<1x1xf32> to vector<1x8xf32>
    %160 = arith.mulf %155, %159 : vector<1x8xf32>
    %161 = vector.shape_cast %160 : vector<1x8xf32> to vector<1x8x1xf32>
    %162 = vector.broadcast %161 : vector<1x8x1xf32> to vector<1x8x32xf32>
    %163 = arith.mulf %141, %162 : vector<1x8x32xf32>
    %164 = vector.shape_cast %163 : vector<1x8x32xf32> to vector<8x32xf32>
    %cst_80 = arith.constant dense<0.000000e+00> : vector<8x32xf32>
    %165 = tpu.matmul %164, %106, %cst_80 {dimension_numbers = #tpu.dot_dimension_numbers<[1], [0], [0], [1], [0, 0, 1, 1], [], []>} : vector<8x32xf32>, vector<32x32xf32>, vector<8x32xf32> -> vector<8x32xf32>
    %166 = vector.broadcast %107 : vector<1x32xf32> to vector<8x32xf32>
    %167 = arith.addf %165, %166 : vector<8x32xf32>
    %168 = vector.shape_cast %167 : vector<8x32xf32> to vector<1x8x32xf32>
    %c0_81 = arith.constant 0 : index
    %c0_82 = arith.constant 0 : index
    %c0_83 = arith.constant 0 : index
    %169 = vector.load %arg24[%c0_81, %c0_82, %c0_83] : memref<1x8x32xf32, #tpu.memory_space<vmem>>, vector<1x8x32xf32>
    tpu.vector_store %arg24[%c0_81, %c0_82, %c0_83], %168 {strides = array<i32>} : memref<1x8x32xf32, #tpu.memory_space<vmem>>, vector<1x8x32xf32>,
    return
  }
  func.func @transform_0(%arg0: i32) -> (i32, i32, i32) {
    %c0_i32 = arith.constant 0 : i32
    %c0_i32_0 = arith.constant 0 : i32
    %c0_i32_1 = arith.constant 0 : i32
    return %arg0, %c0_i32, %c0_i32_0 : i32, i32, i32
  }
  func.func @transform_1(%arg0: i32) -> (i32, i32) {
    %c0_i32 = arith.constant 0 : i32
    %c0_i32_0 = arith.constant 0 : i32
    %c0_i32_1 = arith.constant 0 : i32
    return %c0_i32, %c0_i32_0 : i32, i32
  }
  func.func @transform_2(%arg0: i32) -> (i32, i32) {
    %c0_i32 = arith.constant 0 : i32
    %c0_i32_0 = arith.constant 0 : i32
    %c0_i32_1 = arith.constant 0 : i32
    return %c0_i32, %c0_i32_0 : i32, i32
  }
  func.func @transform_3(%arg0: i32) -> (i32, i32) {
    %c0_i32 = arith.constant 0 : i32
    %c0_i32_0 = arith.constant 0 : i32
    %c0_i32_1 = arith.constant 0 : i32
    return %c0_i32, %c0_i32_0 : i32, i32
  }
  func.func @transform_4(%arg0: i32) -> (i32, i32) {
    %c0_i32 = arith.constant 0 : i32
    %c0_i32_0 = arith.constant 0 : i32
    %c0_i32_1 = arith.constant 0 : i32
    return %c0_i32, %c0_i32_0 : i32, i32
  }
  func.func @transform_5(%arg0: i32) -> (i32, i32) {
    %c0_i32 = arith.constant 0 : i32
    %c0_i32_0 = arith.constant 0 : i32
    %c0_i32_1 = arith.constant 0 : i32
    return %c0_i32, %c0_i32_0 : i32, i32
  }
  func.func @transform_6(%arg0: i32) -> (i32, i32) {
    %c0_i32 = arith.constant 0 : i32
    %c0_i32_0 = arith.constant 0 : i32
    %c0_i32_1 = arith.constant 0 : i32
    return %c0_i32, %c0_i32_0 : i32, i32
  }
  func.func @transform_7(%arg0: i32) -> (i32, i32) {
    %c0_i32 = arith.constant 0 : i32
    %c0_i32_0 = arith.constant 0 : i32
    %c0_i32_1 = arith.constant 0 : i32
    return %c0_i32, %c0_i32_0 : i32, i32
  }
  func.func @transform_8(%arg0: i32) -> (i32, i32) {
    %c0_i32 = arith.constant 0 : i32
    %c0_i32_0 = arith.constant 0 : i32
    %c0_i32_1 = arith.constant 0 : i32
    return %c0_i32, %c0_i32_0 : i32, i32
  }
  func.func @transform_9(%arg0: i32) -> (i32, i32) {
    %c0_i32 = arith.constant 0 : i32
    %c0_i32_0 = arith.constant 0 : i32
    %c0_i32_1 = arith.constant 0 : i32
    return %c0_i32, %c0_i32_0 : i32, i32
  }
  func.func @transform_10(%arg0: i32) -> (i32, i32) {
    %c0_i32 = arith.constant 0 : i32
    %c0_i32_0 = arith.constant 0 : i32
    %c0_i32_1 = arith.constant 0 : i32
    return %c0_i32, %c0_i32_0 : i32, i32
  }
  func.func @transform_11(%arg0: i32) -> (i32, i32) {
    %c0_i32 = arith.constant 0 : i32
    %c0_i32_0 = arith.constant 0 : i32
    %c0_i32_1 = arith.constant 0 : i32
    return %c0_i32, %c0_i32_0 : i32, i32
  }
  func.func @transform_12(%arg0: i32) -> (i32, i32) {
    %c0_i32 = arith.constant 0 : i32
    %c0_i32_0 = arith.constant 0 : i32
    %c0_i32_1 = arith.constant 0 : i32
    return %c0_i32, %c0_i32_0 : i32, i32
  }
  func.func @transform_13(%arg0: i32) -> (i32, i32) {
    %c0_i32 = arith.constant 0 : i32
    %c0_i32_0 = arith.constant 0 : i32
    %c0_i32_1 = arith.constant 0 : i32
    return %c0_i32, %c0_i32_0 : i32, i32
  }
  func.func @transform_14(%arg0: i32) -> (i32, i32) {
    %c0_i32 = arith.constant 0 : i32
    %c0_i32_0 = arith.constant 0 : i32
    %c0_i32_1 = arith.constant 0 : i32
    return %c0_i32, %c0_i32_0 : i32, i32
  }
  func.func @transform_15(%arg0: i32) -> (i32, i32) {
    %c0_i32 = arith.constant 0 : i32
    %c0_i32_0 = arith.constant 0 : i32
    %c0_i32_1 = arith.constant 0 : i32
    return %c0_i32, %c0_i32_0 : i32, i32
  }
  func.func @transform_16(%arg0: i32) -> (i32, i32) {
    %c0_i32 = arith.constant 0 : i32
    %c0_i32_0 = arith.constant 0 : i32
    %c0_i32_1 = arith.constant 0 : i32
    return %c0_i32, %c0_i32_0 : i32, i32
  }
  func.func @transform_17(%arg0: i32) -> (i32, i32) {
    %c0_i32 = arith.constant 0 : i32
    %c0_i32_0 = arith.constant 0 : i32
    %c0_i32_1 = arith.constant 0 : i32
    return %c0_i32, %c0_i32_0 : i32, i32
  }
  func.func @transform_18(%arg0: i32) -> (i32, i32) {
    %c0_i32 = arith.constant 0 : i32
    %c0_i32_0 = arith.constant 0 : i32
    %c0_i32_1 = arith.constant 0 : i32
    return %c0_i32, %c0_i32_0 : i32, i32
  }
  func.func @transform_19(%arg0: i32) -> (i32, i32) {
    %c0_i32 = arith.constant 0 : i32
    %c0_i32_0 = arith.constant 0 : i32
    %c0_i32_1 = arith.constant 0 : i32
    return %c0_i32, %c0_i32_0 : i32, i32
  }
  func.func @transform_20(%arg0: i32) -> (i32, i32) {
    %c0_i32 = arith.constant 0 : i32
    %c0_i32_0 = arith.constant 0 : i32
    %c0_i32_1 = arith.constant 0 : i32
    return %c0_i32, %c0_i32_0 : i32, i32
  }
  func.func @transform_21(%arg0: i32) -> (i32, i32) {
    %c0_i32 = arith.constant 0 : i32
    %c0_i32_0 = arith.constant 0 : i32
    %c0_i32_1 = arith.constant 0 : i32
    return %c0_i32, %c0_i32_0 : i32, i32
  }
  func.func @transform_22(%arg0: i32) -> (i32, i32) {
    %c0_i32 = arith.constant 0 : i32
    %c0_i32_0 = arith.constant 0 : i32
    %c0_i32_1 = arith.constant 0 : i32
    return %c0_i32, %c0_i32_0 : i32, i32
  }
  func.func @transform_23(%arg0: i32) -> (i32, i32, i32) {
    %c0_i32 = arith.constant 0 : i32
    %c0_i32_0 = arith.constant 0 : i32
    %c0_i32_1 = arith.constant 0 : i32
    return %arg0, %c0_i32, %c0_i32_0 : i32, i32, i32
  }
}

</mosaic_0001>

<llo_original>
// kernel: tpu_custom_call.1
$region0: #{tpu_custom_call.1}
  #allocation0 [shape = 'u32[]', space=smem, size = 0x4, offset = 0x4, fixed_abs, tag = 'smem constant byte address 0x4 - core index']
  #allocation1 [shape = 'u32[144,128]{1,0:T(1,128)}', space=vmem, size = 0x12000, scoped, tag = 'internal scratch']
  %s0 = inlined_call_operand.hbm [shape: f32[2,8,32], index: 0, kind: input, shape index: {}]
  %s1 = inlined_call_operand.hbm [shape: f32[32,32], index: 1, kind: input, shape index: {}]
  %s2 = inlined_call_operand.vmem [shape: f32[1,32], index: 2, kind: input, shape index: {}]
  %s3 = inlined_call_operand.hbm [shape: f32[1,32], index: 3, kind: input, shape index: {}]
  %s4 = inlined_call_operand.hbm [shape: f32[1,32], index: 4, kind: input, shape index: {}]
  %s5 = inlined_call_operand.vmem [shape: f32[32,32], index: 5, kind: input, shape index: {}]
  %s6 = inlined_call_operand.hbm [shape: f32[1,32], index: 6, kind: input, shape index: {}]
  %s7 = inlined_call_operand.hbm [shape: f32[1,32], index: 7, kind: input, shape index: {}]
  %s8 = inlined_call_operand.hbm [shape: f32[1,32], index: 8, kind: input, shape index: {}]
  %s9 = inlined_call_operand.hbm [shape: f32[32,32], index: 9, kind: input, shape index: {}]
  %s10 = inlined_call_operand.hbm [shape: f32[1,32], index: 10, kind: input, shape index: {}]
  %s11 = inlined_call_operand.hbm [shape: f32[1,32], index: 11, kind: input, shape index: {}]
  %s12 = inlined_call_operand.vmem [shape: f32[1,32], index: 12, kind: input, shape index: {}]
  %s13 = inlined_call_operand.vmem [shape: f32[32,32], index: 13, kind: input, shape index: {}]
  %s14 = inlined_call_operand.vmem [shape: f32[1,32], index: 14, kind: input, shape index: {}]
  %s15 = inlined_call_operand.hbm [shape: f32[1,32], index: 15, kind: input, shape index: {}]
  %s16 = inlined_call_operand.hbm [shape: f32[1,32], index: 16, kind: input, shape index: {}]
  %s17 = inlined_call_operand.hbm [shape: f32[8,16], index: 17, kind: input, shape index: {}]
  %s18 = inlined_call_operand.hbm [shape: f32[1,16], index: 18, kind: input, shape index: {}]
  %s19 = inlined_call_operand.vmem [shape: f32[16,8], index: 19, kind: input, shape index: {}]
  %s20 = inlined_call_operand.hbm [shape: f32[1,8], index: 20, kind: input, shape index: {}]
  %s21 = inlined_call_operand.vmem [shape: f32[32,32], index: 21, kind: input, shape index: {}]
  %s22 = inlined_call_operand.vmem [shape: f32[1,32], index: 22, kind: input, shape index: {}]
  %s23 = inlined_call_operand.hbm [shape: f32[2,8,32], index: 23, kind: output, shape index: {}]
  %s24 = sld [smem:[#allocation0]]
  $region185: #{tpu_custom_call.1} parent=0
    _
  %s26 = ssub.s32 1, %s24
  %s27 = scalar_select 0, %s26, %s24
  $region1: #{tpu_custom_call.1} parent=0
    #allocation2 [shape = 'u8[8192]{0}', space=vmem, size = 0x2000, scoped, tag = 'input window, operand 0']
    #allocation3 [shape = 's32[2]{0}', space=sflag, size = 0x8, scoped, tag = 'scoped memory for tpu_custom_call.1']
    #allocation4 [shape = 's32[2]{0}', space=sflag, size = 0x8, scoped, tag = 'scoped memory for tpu_custom_call.1']
    #allocation5 [shape = 'u8[16384]{0}', space=vmem, size = 0x4000, scoped, tag = 'input window, operand 1, single buffered']
    #allocation6 [shape = 's32[1]{0}', space=sflag, size = 0x4, scoped, tag = 'scoped memory for tpu_custom_call.1']
    #allocation7 [shape = 'u8[512]{0}', space=vmem, size = 0x400, scoped, tag = 'input window, operand 3, single buffered']
    #allocation8 [shape = 'u8[512]{0}', space=vmem, size = 0x400, scoped, tag = 'input window, operand 4, single buffered']
    #allocation9 [shape = 's32[1]{0}', space=sflag, size = 0x4, scoped, tag = 'scoped memory for tpu_custom_call.1']
    #allocation10 [shape = 'u8[512]{0}', space=vmem, size = 0x400, scoped, tag = 'input window, operand 6, single buffered']
    #allocation11 [shape = 'u8[512]{0}', space=vmem, size = 0x400, scoped, tag = 'input window, operand 7, single buffered']
    #allocation12 [shape = 's32[1]{0}', space=sflag, size = 0x4, scoped, tag = 'scoped memory for tpu_custom_call.1']
    #allocation13 [shape = 'u8[512]{0}', space=vmem, size = 0x400, scoped, tag = 'input window, operand 8, single buffered']
    #allocation14 [shape = 'u8[16384]{0}', space=vmem, size = 0x4000, scoped, tag = 'input window, operand 9, single buffered']
    #allocation15 [shape = 's32[1]{0}', space=sflag, size = 0x4, scoped, tag = 'scoped memory for tpu_custom_call.1']
    #allocation16 [shape = 'u8[512]{0}', space=vmem, size = 0x400, scoped, tag = 'input window, operand 10, single buffered']
    #allocation17 [shape = 'u8[512]{0}', space=vmem, size = 0x400, scoped, tag = 'input window, operand 11, single buffered']
    #allocation18 [shape = 's32[1]{0}', space=sflag, size = 0x4, scoped, tag = 'scoped memory for tpu_custom_call.1']
    #allocation19 [shape = 'u8[512]{0}', space=vmem, size = 0x400, scoped, tag = 'input window, operand 15, single buffered']
    #allocation20 [shape = 'u8[512]{0}', space=vmem, size = 0x400, scoped, tag = 'input window, operand 16, single buffered']
    #allocation21 [shape = 's32[1]{0}', space=sflag, size = 0x4, scoped, tag = 'scoped memory for tpu_custom_call.1']
    #allocation22 [shape = 'u8[4096]{0}', space=vmem, size = 0x1000, scoped, tag = 'input window, operand 17, single buffered']
    #allocation23 [shape = 'u8[512]{0}', space=vmem, size = 0x400, scoped, tag = 'input window, operand 18, single buffered']
    #allocation24 [shape = 's32[1]{0}', space=sflag, size = 0x4, scoped, tag = 'scoped memory for tpu_custom_call.1']
    #allocation25 [shape = 'u8[512]{0}', space=vmem, size = 0x400, scoped, tag = 'input window, operand 20, single buffered']
    #allocation26 [shape = 'u8[8192]{0}', space=vmem, size = 0x2000, scoped, tag = 'output window, operand 0']
    %28 = vsyncpa [#allocation3], 0
    %s29 = scalar_lea.sflag [#allocation3], 1
    %30 = vsyncpa %s29, 0
    %31 = vsyncpa [#allocation6], 0
    %32 = vsyncpa [#allocation9], 0
    %33 = vsyncpa [#allocation12], 0
    %34 = vsyncpa [#allocation15], 0
    %35 = vsyncpa [#allocation18], 0
    %36 = vsyncpa [#allocation21], 0
    %37 = vsyncpa [#allocation24], 0
    %38 = vsyncpa [#allocation4], 0
    %s39 = scalar_lea.sflag [#allocation4], 1
    %40 = vsyncpa %s39, 0
    loop: start=0, step=1, limit=4
    $region2: #{tpu_custom_call.1} parent=1 // loop_pre_header
      _
    $region3: #{tpu_custom_call.1} parent=1 // loop_header
      %s42 = sphi 0, %s46
      %p43 = scmp.ge.s32.totalorder %s42, 4
      %s52 = sphi 0, %s54
      %s55 = sphi 0, %s52
      %s56 = sphi 0, %s55
      %s72 = sphi 0, %s56
      %s76 = sphi 0, %s76
      %s78 = sphi 0, %s76
      %s79 = sphi 0, %s78
      %s93 = sphi 0, %s79
      %s97 = sphi 0, %s97
      %s99 = sphi 0, %s97
      %s100 = sphi 0, %s99
      %s114 = sphi 0, %s100
      %s118 = sphi 0, %s118
      %s120 = sphi 0, %s118
      %s121 = sphi 0, %s120
      %s135 = sphi 0, %s121
      %s139 = sphi 0, %s139
      %s141 = sphi 0, %s139
      %s142 = sphi 0, %s141
      %s156 = sphi 0, %s142
      %s160 = sphi 0, %s160
      %s162 = sphi 0, %s160
      %s163 = sphi 0, %s162
      %s177 = sphi 0, %s163
      %s181 = sphi 0, %s181
      %s183 = sphi 0, %s181
      %s184 = sphi 0, %s183
      %s198 = sphi 0, %s184
      %s202 = sphi 0, %s202
      %s204 = sphi 0, %s202
      %s205 = sphi 0, %s204
      %s219 = sphi 0, %s205
      %s223 = sphi 0, %s223
      %s225 = sphi 0, %s223
      %s226 = sphi 0, %s225
      %s240 = sphi 0, %s226
      %s244 = sphi 0, %s244
      %s246 = sphi 0, %s244
      %s247 = sphi 0, %s246
      %s261 = sphi 0, %s247
      %s265 = sphi 0, %s265
      %s267 = sphi 0, %s265
      %s268 = sphi 0, %s267
      %s282 = sphi 0, %s268
      %s286 = sphi 0, %s286
      %s288 = sphi 0, %s286
      %s289 = sphi 0, %s288
      %s303 = sphi 0, %s289
      %s307 = sphi 0, %s307
      %s309 = sphi 0, %s307
      %s310 = sphi 0, %s309
      %s324 = sphi 0, %s310
      %s328 = sphi 0, %s328
      %s330 = sphi 0, %s328
      %s331 = sphi 0, %s330
      %s345 = sphi 0, %s331
      %s349 = sphi 0, %s349
      %s351 = sphi 0, %s349
      %s352 = sphi 0, %s351
      %s366 = sphi 0, %s352
      %s370 = sphi 0, %s370
      %s372 = sphi 0, %s370
      %s373 = sphi 0, %s372
      %s387 = sphi 0, %s373
      %s391 = sphi 0, %s391
      %s393 = sphi 0, %s391
      %s394 = sphi 0, %s393
      %s408 = sphi 0, %s394
      %s412 = sphi 0, %s412
      %s414 = sphi 0, %s412
      %s415 = sphi 0, %s414
      %s429 = sphi 0, %s415
      %s433 = sphi 0, %s433
      %s435 = sphi 0, %s433
      %s436 = sphi 0, %s435
      %s450 = sphi 0, %s436
      %s454 = sphi 0, %s454
      %s456 = sphi 0, %s454
      %s457 = sphi 0, %s456
      %s471 = sphi 0, %s457
      %s475 = sphi 0, %s475
      %s477 = sphi 0, %s475
      %s478 = sphi 0, %s477
      %s492 = sphi 0, %s478
      %s496 = sphi 0, %s496
      %s498 = sphi 0, %s496
      %s499 = sphi 0, %s498
      %s513 = sphi 0, %s499
      %s517 = sphi 0, %s517
      %s519 = sphi 0, %s517
      %s520 = sphi 0, %s519
      %s534 = sphi 0, %s520
      %s540 = sphi 0, %s542
      %s543 = sphi 0, %s540
      %s544 = sphi 0, %s543
      %s560 = sphi 0, %s544
    $region4: #{tpu_custom_call.1} parent=1 // loop_header_branch
      %45 = sbr.rel (%p43) target = $region8
    $region5: #{tpu_custom_call.1} parent=1 // loop_body
      %s47 = ssub.s32 %s42, 1
      %s48 = ssub.s32 %s42, 2
      %s49 = sadd.s32 %s42, 1
      %s50 = ssub.s32 %s42, %s49
      %p51 = scmp.eq.s32.totalorder %s50, 0
      %s53 = sadd.s32 %s52, 1
      %s54 = scalar_select %p51, %s52, %s53
      %p57 = pneg %p51
      %p58 = scmp.eq.s32.totalorder %s42, 1
      %p59 = por %p57, %p58
      %p60 = scmp.ne.s32.totalorder %s52, %s55
      %p61 = scmp.eq.s32.totalorder %s42, 0
      %p62 = por %p60, %p61
      %p63 = scmp.ne.s32.totalorder %s52, %s55
      %p64 = scmp.eq.s32.totalorder %s47, 1
      %p65 = por %p63, %p64
      %p66 = scmp.ne.s32.totalorder %s55, %s56
      %p67 = scmp.eq.s32.totalorder %s47, 0
      %p68 = por %p66, %p67
      %p69 = scmp.ne.s32.totalorder %s55, %s56
      %p70 = scmp.eq.s32.totalorder %s48, 1
      %p71 = por %p69, %p70
      %p73 = scmp.ne.s32.totalorder %s56, %s72
      %p74 = scmp.eq.s32.totalorder %s48, 0
      %p75 = por %p73, %p74
      %s77 = sadd.s32 %s76, 1
      %p80 = scmp.eq.s32.totalorder %s42, 1
      %p81 = scmp.ne.s32.totalorder %s76, %s78
      %p82 = scmp.eq.s32.totalorder %s42, 0
      %p83 = por %p81, %p82
      %p84 = scmp.ne.s32.totalorder %s76, %s78
      %p85 = scmp.eq.s32.totalorder %s47, 1
      %p86 = por %p84, %p85
      %p87 = scmp.ne.s32.totalorder %s78, %s79
      %p88 = scmp.eq.s32.totalorder %s47, 0
      %p89 = por %p87, %p88
      %p90 = scmp.ne.s32.totalorder %s78, %s79
      %p91 = scmp.eq.s32.totalorder %s48, 1
      %p92 = por %p90, %p91
      %p94 = scmp.ne.s32.totalorder %s79, %s93
      %p95 = scmp.eq.s32.totalorder %s48, 0
      %p96 = por %p94, %p95
      %s98 = sadd.s32 %s97, 1
      %p101 = scmp.eq.s32.totalorder %s42, 1
      %p102 = scmp.ne.s32.totalorder %s97, %s99
      %p103 = scmp.eq.s32.totalorder %s42, 0
      %p104 = por %p102, %p103
      %p105 = scmp.ne.s32.totalorder %s97, %s99
      %p106 = scmp.eq.s32.totalorder %s47, 1
      %p107 = por %p105, %p106
      %p108 = scmp.ne.s32.totalorder %s99, %s100
      %p109 = scmp.eq.s32.totalorder %s47, 0
      %p110 = por %p108, %p109
      %p111 = scmp.ne.s32.totalorder %s99, %s100
      %p112 = scmp.eq.s32.totalorder %s48, 1
      %p113 = por %p111, %p112
      %p115 = scmp.ne.s32.totalorder %s100, %s114
      %p116 = scmp.eq.s32.totalorder %s48, 0
      %p117 = por %p115, %p116
      %s119 = sadd.s32 %s118, 1
      %p122 = scmp.eq.s32.totalorder %s42, 1
      %p123 = scmp.ne.s32.totalorder %s118, %s120
      %p124 = scmp.eq.s32.totalorder %s42, 0
      %p125 = por %p123, %p124
      %p126 = scmp.ne.s32.totalorder %s118, %s120
      %p127 = scmp.eq.s32.totalorder %s47, 1
      %p128 = por %p126, %p127
      %p129 = scmp.ne.s32.totalorder %s120, %s121
      %p130 = scmp.eq.s32.totalorder %s47, 0
      %p131 = por %p129, %p130
      %p132 = scmp.ne.s32.totalorder %s120, %s121
      %p133 = scmp.eq.s32.totalorder %s48, 1
      %p134 = por %p132, %p133
      %p136 = scmp.ne.s32.totalorder %s121, %s135
      %p137 = scmp.eq.s32.totalorder %s48, 0
      %p138 = por %p136, %p137
      %s140 = sadd.s32 %s139, 1
      %p143 = scmp.eq.s32.totalorder %s42, 1
      %p144 = scmp.ne.s32.totalorder %s139, %s141
      %p145 = scmp.eq.s32.totalorder %s42, 0
      %p146 = por %p144, %p145
      %p147 = scmp.ne.s32.totalorder %s139, %s141
      %p148 = scmp.eq.s32.totalorder %s47, 1
      %p149 = por %p147, %p148
      %p150 = scmp.ne.s32.totalorder %s141, %s142
      %p151 = scmp.eq.s32.totalorder %s47, 0
      %p152 = por %p150, %p151
      %p153 = scmp.ne.s32.totalorder %s141, %s142
      %p154 = scmp.eq.s32.totalorder %s48, 1
      %p155 = por %p153, %p154
      %p157 = scmp.ne.s32.totalorder %s142, %s156
      %p158 = scmp.eq.s32.totalorder %s48, 0
      %p159 = por %p157, %p158
      %s161 = sadd.s32 %s160, 1
      %p164 = scmp.eq.s32.totalorder %s42, 1
      %p165 = scmp.ne.s32.totalorder %s160, %s162
      %p166 = scmp.eq.s32.totalorder %s42, 0
      %p167 = por %p165, %p166
      %p168 = scmp.ne.s32.totalorder %s160, %s162
      %p169 = scmp.eq.s32.totalorder %s47, 1
      %p170 = por %p168, %p169
      %p171 = scmp.ne.s32.totalorder %s162, %s163
      %p172 = scmp.eq.s32.totalorder %s47, 0
      %p173 = por %p171, %p172
      %p174 = scmp.ne.s32.totalorder %s162, %s163
      %p175 = scmp.eq.s32.totalorder %s48, 1
      %p176 = por %p174, %p175
      %p178 = scmp.ne.s32.totalorder %s163, %s177
      %p179 = scmp.eq.s32.totalorder %s48, 0
      %p180 = por %p178, %p179
      %s182 = sadd.s32 %s181, 1
      %p185 = scmp.eq.s32.totalorder %s42, 1
      %p186 = scmp.ne.s32.totalorder %s181, %s183
      %p187 = scmp.eq.s32.totalorder %s42, 0
      %p188 = por %p186, %p187
      %p189 = scmp.ne.s32.totalorder %s181, %s183
      %p190 = scmp.eq.s32.totalorder %s47, 1
      %p191 = por %p189, %p190
      %p192 = scmp.ne.s32.totalorder %s183, %s184
      %p193 = scmp.eq.s32.totalorder %s47, 0
      %p194 = por %p192, %p193
      %p195 = scmp.ne.s32.totalorder %s183, %s184
      %p196 = scmp.eq.s32.totalorder %s48, 1
      %p197 = por %p195, %p196
      %p199 = scmp.ne.s32.totalorder %s184, %s198
      %p200 = scmp.eq.s32.totalorder %s48, 0
      %p201 = por %p199, %p200
      %s203 = sadd.s32 %s202, 1
      %p206 = scmp.eq.s32.totalorder %s42, 1
      %p207 = scmp.ne.s32.totalorder %s202, %s204
      %p208 = scmp.eq.s32.totalorder %s42, 0
      %p209 = por %p207, %p208
      %p210 = scmp.ne.s32.totalorder %s202, %s204
      %p211 = scmp.eq.s32.totalorder %s47, 1
      %p212 = por %p210, %p211
      %p213 = scmp.ne.s32.totalorder %s204, %s205
      %p214 = scmp.eq.s32.totalorder %s47, 0
      %p215 = por %p213, %p214
      %p216 = scmp.ne.s32.totalorder %s204, %s205
      %p217 = scmp.eq.s32.totalorder %s48, 1
      %p218 = por %p216, %p217
      %p220 = scmp.ne.s32.totalorder %s205, %s219
      %p221 = scmp.eq.s32.totalorder %s48, 0
      %p222 = por %p220, %p221
      %s224 = sadd.s32 %s223, 1
      %p227 = scmp.eq.s32.totalorder %s42, 1
      %p228 = scmp.ne.s32.totalorder %s223, %s225
      %p229 = scmp.eq.s32.totalorder %s42, 0
      %p230 = por %p228, %p229
      %p231 = scmp.ne.s32.totalorder %s223, %s225
      %p232 = scmp.eq.s32.totalorder %s47, 1
      %p233 = por %p231, %p232
      %p234 = scmp.ne.s32.totalorder %s225, %s226
      %p235 = scmp.eq.s32.totalorder %s47, 0
      %p236 = por %p234, %p235
      %p237 = scmp.ne.s32.totalorder %s225, %s226
      %p238 = scmp.eq.s32.totalorder %s48, 1
      %p239 = por %p237, %p238
      %p241 = scmp.ne.s32.totalorder %s226, %s240
      %p242 = scmp.eq.s32.totalorder %s48, 0
      %p243 = por %p241, %p242
      %s245 = sadd.s32 %s244, 1
      %p248 = scmp.eq.s32.totalorder %s42, 1
      %p249 = scmp.ne.s32.totalorder %s244, %s246
      %p250 = scmp.eq.s32.totalorder %s42, 0
      %p251 = por %p249, %p250
      %p252 = scmp.ne.s32.totalorder %s244, %s246
      %p253 = scmp.eq.s32.totalorder %s47, 1
      %p254 = por %p252, %p253
      %p255 = scmp.ne.s32.totalorder %s246, %s247
      %p256 = scmp.eq.s32.totalorder %s47, 0
      %p257 = por %p255, %p256
      %p258 = scmp.ne.s32.totalorder %s246, %s247
      %p259 = scmp.eq.s32.totalorder %s48, 1
      %p260 = por %p258, %p259
      %p262 = scmp.ne.s32.totalorder %s247, %s261
      %p263 = scmp.eq.s32.totalorder %s48, 0
      %p264 = por %p262, %p263
      %s266 = sadd.s32 %s265, 1
      %p269 = scmp.eq.s32.totalorder %s42, 1
      %p270 = scmp.ne.s32.totalorder %s265, %s267
      %p271 = scmp.eq.s32.totalorder %s42, 0
      %p272 = por %p270, %p271
      %p273 = scmp.ne.s32.totalorder %s265, %s267
      %p274 = scmp.eq.s32.totalorder %s47, 1
      %p275 = por %p273, %p274
      %p276 = scmp.ne.s32.totalorder %s267, %s268
      %p277 = scmp.eq.s32.totalorder %s47, 0
      %p278 = por %p276, %p277
      %p279 = scmp.ne.s32.totalorder %s267, %s268
      %p280 = scmp.eq.s32.totalorder %s48, 1
      %p281 = por %p279, %p280
      %p283 = scmp.ne.s32.totalorder %s268, %s282
      %p284 = scmp.eq.s32.totalorder %s48, 0
      %p285 = por %p283, %p284
      %s287 = sadd.s32 %s286, 1
      %p290 = scmp.eq.s32.totalorder %s42, 1
      %p291 = scmp.ne.s32.totalorder %s286, %s288
      %p292 = scmp.eq.s32.totalorder %s42, 0
      %p293 = por %p291, %p292
      %p294 = scmp.ne.s32.totalorder %s286, %s288
      %p295 = scmp.eq.s32.totalorder %s47, 1
      %p296 = por %p294, %p295
      %p297 = scmp.ne.s32.totalorder %s288, %s289
      %p298 = scmp.eq.s32.totalorder %s47, 0
      %p299 = por %p297, %p298
      %p300 = scmp.ne.s32.totalorder %s288, %s289
      %p301 = scmp.eq.s32.totalorder %s48, 1
      %p302 = por %p300, %p301
      %p304 = scmp.ne.s32.totalorder %s289, %s303
      %p305 = scmp.eq.s32.totalorder %s48, 0
      %p306 = por %p304, %p305
      %s308 = sadd.s32 %s307, 1
      %p311 = scmp.eq.s32.totalorder %s42, 1
      %p312 = scmp.ne.s32.totalorder %s307, %s309
      %p313 = scmp.eq.s32.totalorder %s42, 0
      %p314 = por %p312, %p313
      %p315 = scmp.ne.s32.totalorder %s307, %s309
      %p316 = scmp.eq.s32.totalorder %s47, 1
      %p317 = por %p315, %p316
      %p318 = scmp.ne.s32.totalorder %s309, %s310
      %p319 = scmp.eq.s32.totalorder %s47, 0
      %p320 = por %p318, %p319
      %p321 = scmp.ne.s32.totalorder %s309, %s310
      %p322 = scmp.eq.s32.totalorder %s48, 1
      %p323 = por %p321, %p322
      %p325 = scmp.ne.s32.totalorder %s310, %s324
      %p326 = scmp.eq.s32.totalorder %s48, 0
      %p327 = por %p325, %p326
      %s329 = sadd.s32 %s328, 1
      %p332 = scmp.eq.s32.totalorder %s42, 1
      %p333 = scmp.ne.s32.totalorder %s328, %s330
      %p334 = scmp.eq.s32.totalorder %s42, 0
      %p335 = por %p333, %p334
      %p336 = scmp.ne.s32.totalorder %s328, %s330
      %p337 = scmp.eq.s32.totalorder %s47, 1
      %p338 = por %p336, %p337
      %p339 = scmp.ne.s32.totalorder %s330, %s331
      %p340 = scmp.eq.s32.totalorder %s47, 0
      %p341 = por %p339, %p340
      %p342 = scmp.ne.s32.totalorder %s330, %s331
      %p343 = scmp.eq.s32.totalorder %s48, 1
      %p344 = por %p342, %p343
      %p346 = scmp.ne.s32.totalorder %s331, %s345
      %p347 = scmp.eq.s32.totalorder %s48, 0
      %p348 = por %p346, %p347
      %s350 = sadd.s32 %s349, 1
      %p353 = scmp.eq.s32.totalorder %s42, 1
      %p354 = scmp.ne.s32.totalorder %s349, %s351
      %p355 = scmp.eq.s32.totalorder %s42, 0
      %p356 = por %p354, %p355
      %p357 = scmp.ne.s32.totalorder %s349, %s351
      %p358 = scmp.eq.s32.totalorder %s47, 1
      %p359 = por %p357, %p358
      %p360 = scmp.ne.s32.totalorder %s351, %s352
      %p361 = scmp.eq.s32.totalorder %s47, 0
      %p362 = por %p360, %p361
      %p363 = scmp.ne.s32.totalorder %s351, %s352
      %p364 = scmp.eq.s32.totalorder %s48, 1
      %p365 = por %p363, %p364
      %p367 = scmp.ne.s32.totalorder %s352, %s366
      %p368 = scmp.eq.s32.totalorder %s48, 0
      %p369 = por %p367, %p368
      %s371 = sadd.s32 %s370, 1
      %p374 = scmp.eq.s32.totalorder %s42, 1
      %p375 = scmp.ne.s32.totalorder %s370, %s372
      %p376 = scmp.eq.s32.totalorder %s42, 0
      %p377 = por %p375, %p376
      %p378 = scmp.ne.s32.totalorder %s370, %s372
      %p379 = scmp.eq.s32.totalorder %s47, 1
      %p380 = por %p378, %p379
      %p381 = scmp.ne.s32.totalorder %s372, %s373
      %p382 = scmp.eq.s32.totalorder %s47, 0
      %p383 = por %p381, %p382
      %p384 = scmp.ne.s32.totalorder %s372, %s373
      %p385 = scmp.eq.s32.totalorder %s48, 1
      %p386 = por %p384, %p385
      %p388 = scmp.ne.s32.totalorder %s373, %s387
      %p389 = scmp.eq.s32.totalorder %s48, 0
      %p390 = por %p388, %p389
      %s392 = sadd.s32 %s391, 1
      %p395 = scmp.eq.s32.totalorder %s42, 1
      %p396 = scmp.ne.s32.totalorder %s391, %s393
      %p397 = scmp.eq.s32.totalorder %s42, 0
      %p398 = por %p396, %p397
      %p399 = scmp.ne.s32.totalorder %s391, %s393
      %p400 = scmp.eq.s32.totalorder %s47, 1
      %p401 = por %p399, %p400
      %p402 = scmp.ne.s32.totalorder %s393, %s394
      %p403 = scmp.eq.s32.totalorder %s47, 0
      %p404 = por %p402, %p403
      %p405 = scmp.ne.s32.totalorder %s393, %s394
      %p406 = scmp.eq.s32.totalorder %s48, 1
      %p407 = por %p405, %p406
      %p409 = scmp.ne.s32.totalorder %s394, %s408
      %p410 = scmp.eq.s32.totalorder %s48, 0
      %p411 = por %p409, %p410
      %s413 = sadd.s32 %s412, 1
      %p416 = scmp.eq.s32.totalorder %s42, 1
      %p417 = scmp.ne.s32.totalorder %s412, %s414
      %p418 = scmp.eq.s32.totalorder %s42, 0
      %p419 = por %p417, %p418
      %p420 = scmp.ne.s32.totalorder %s412, %s414
      %p421 = scmp.eq.s32.totalorder %s47, 1
      %p422 = por %p420, %p421
      %p423 = scmp.ne.s32.totalorder %s414, %s415
      %p424 = scmp.eq.s32.totalorder %s47, 0
      %p425 = por %p423, %p424
      %p426 = scmp.ne.s32.totalorder %s414, %s415
      %p427 = scmp.eq.s32.totalorder %s48, 1
      %p428 = por %p426, %p427
      %p430 = scmp.ne.s32.totalorder %s415, %s429
      %p431 = scmp.eq.s32.totalorder %s48, 0
      %p432 = por %p430, %p431
      %s434 = sadd.s32 %s433, 1
      %p437 = scmp.eq.s32.totalorder %s42, 1
      %p438 = scmp.ne.s32.totalorder %s433, %s435
      %p439 = scmp.eq.s32.totalorder %s42, 0
      %p440 = por %p438, %p439
      %p441 = scmp.ne.s32.totalorder %s433, %s435
      %p442 = scmp.eq.s32.totalorder %s47, 1
      %p443 = por %p441, %p442
      %p444 = scmp.ne.s32.totalorder %s435, %s436
      %p445 = scmp.eq.s32.totalorder %s47, 0
      %p446 = por %p444, %p445
      %p447 = scmp.ne.s32.totalorder %s435, %s436
      %p448 = scmp.eq.s32.totalorder %s48, 1
      %p449 = por %p447, %p448
      %p451 = scmp.ne.s32.totalorder %s436, %s450
      %p452 = scmp.eq.s32.totalorder %s48, 0
      %p453 = por %p451, %p452
      %s455 = sadd.s32 %s454, 1
      %p458 = scmp.eq.s32.totalorder %s42, 1
      %p459 = scmp.ne.s32.totalorder %s454, %s456
      %p460 = scmp.eq.s32.totalorder %s42, 0
      %p461 = por %p459, %p460
      %p462 = scmp.ne.s32.totalorder %s454, %s456
      %p463 = scmp.eq.s32.totalorder %s47, 1
      %p464 = por %p462, %p463
      %p465 = scmp.ne.s32.totalorder %s456, %s457
      %p466 = scmp.eq.s32.totalorder %s47, 0
      %p467 = por %p465, %p466
      %p468 = scmp.ne.s32.totalorder %s456, %s457
      %p469 = scmp.eq.s32.totalorder %s48, 1
      %p470 = por %p468, %p469
      %p472 = scmp.ne.s32.totalorder %s457, %s471
      %p473 = scmp.eq.s32.totalorder %s48, 0
      %p474 = por %p472, %p473
      %s476 = sadd.s32 %s475, 1
      %p479 = scmp.eq.s32.totalorder %s42, 1
      %p480 = scmp.ne.s32.totalorder %s475, %s477
      %p481 = scmp.eq.s32.totalorder %s42, 0
      %p482 = por %p480, %p481
      %p483 = scmp.ne.s32.totalorder %s475, %s477
      %p484 = scmp.eq.s32.totalorder %s47, 1
      %p485 = por %p483, %p484
      %p486 = scmp.ne.s32.totalorder %s477, %s478
      %p487 = scmp.eq.s32.totalorder %s47, 0
      %p488 = por %p486, %p487
      %p489 = scmp.ne.s32.totalorder %s477, %s478
      %p490 = scmp.eq.s32.totalorder %s48, 1
      %p491 = por %p489, %p490
      %p493 = scmp.ne.s32.totalorder %s478, %s492
      %p494 = scmp.eq.s32.totalorder %s48, 0
      %p495 = por %p493, %p494
      %s497 = sadd.s32 %s496, 1
      %p500 = scmp.eq.s32.totalorder %s42, 1
      %p501 = scmp.ne.s32.totalorder %s496, %s498
      %p502 = scmp.eq.s32.totalorder %s42, 0
      %p503 = por %p501, %p502
      %p504 = scmp.ne.s32.totalorder %s496, %s498
      %p505 = scmp.eq.s32.totalorder %s47, 1
      %p506 = por %p504, %p505
      %p507 = scmp.ne.s32.totalorder %s498, %s499
      %p508 = scmp.eq.s32.totalorder %s47, 0
      %p509 = por %p507, %p508
      %p510 = scmp.ne.s32.totalorder %s498, %s499
      %p511 = scmp.eq.s32.totalorder %s48, 1
      %p512 = por %p510, %p511
      %p514 = scmp.ne.s32.totalorder %s499, %s513
      %p515 = scmp.eq.s32.totalorder %s48, 0
      %p516 = por %p514, %p515
      %s518 = sadd.s32 %s517, 1
      %p521 = scmp.eq.s32.totalorder %s42, 1
      %p522 = scmp.ne.s32.totalorder %s517, %s519
      %p523 = scmp.eq.s32.totalorder %s42, 0
      %p524 = por %p522, %p523
      %p525 = scmp.ne.s32.totalorder %s517, %s519
      %p526 = scmp.eq.s32.totalorder %s47, 1
      %p527 = por %p525, %p526
      %p528 = scmp.ne.s32.totalorder %s519, %s520
      %p529 = scmp.eq.s32.totalorder %s47, 0
      %p530 = por %p528, %p529
      %p531 = scmp.ne.s32.totalorder %s519, %s520
      %p532 = scmp.eq.s32.totalorder %s48, 1
      %p533 = por %p531, %p532
      %p535 = scmp.ne.s32.totalorder %s520, %s534
      %p536 = scmp.eq.s32.totalorder %s48, 0
      %p537 = por %p535, %p536
      %s538 = ssub.s32 %s42, %s49
      %p539 = scmp.eq.s32.totalorder %s538, 0
      %s541 = sadd.s32 %s540, 1
      %s542 = scalar_select %p539, %s540, %s541
      %p545 = pneg %p539
      %p546 = scmp.eq.s32.totalorder %s42, 1
      %p547 = por %p545, %p546
      %p548 = scmp.ne.s32.totalorder %s540, %s543
      %p549 = scmp.eq.s32.totalorder %s42, 0
      %p550 = por %p548, %p549
      %p551 = scmp.ne.s32.totalorder %s540, %s543
      %p552 = scmp.eq.s32.totalorder %s47, 1
      %p553 = por %p551, %p552
      %p554 = scmp.ne.s32.totalorder %s543, %s544
      %p555 = scmp.eq.s32.totalorder %s47, 0
      %p556 = por %p554, %p555
      %p557 = scmp.ne.s32.totalorder %s543, %s544
      %p558 = scmp.eq.s32.totalorder %s48, 1
      %p559 = por %p557, %p558
      %p561 = scmp.ne.s32.totalorder %s544, %s560
      %p562 = scmp.eq.s32.totalorder %s48, 0
      %p563 = por %p561, %p562
      %p564 = scmp.le.s32.totalorder 1, %s42
      %p565 = scmp.lt.s32.totalorder %s42, 3
      %p566 = pnand %p564, %p565
      %p567 = pneg %p566
      // Predicated region
      $region9: #{tpu_custom_call.1} parent=5 // pred_check
        _
      $region10: #{tpu_custom_call.1} parent=5 // pred_check_branch
        %569 = sbr.rel (%p566) target = $region12
      $region11: #{tpu_custom_call.1} parent=5 // pred_region
        %s570 = ssub.s32 %s42, 1
        // Predicated region
        $region13: #{tpu_custom_call.1} parent=11 // pred_check
          %p571 = pneg %p89
        $region14: #{tpu_custom_call.1} parent=11 // pred_check_branch
          %573 = sbr.rel (%p571) target = $region16
        $region15: #{tpu_custom_call.1} parent=11 // pred_region
          %s575 = ssub.s32 512, 512
          %576 = vsyncadd [#allocation6], %s575
          %s577 = sshll.u32 [#allocation5], 4
          %s578 = int_to_ptr.vmem [resolvable:$true] %s577
          %583 = dma.hbm_to_vmem [thread:$0]  %s1, 512, %s578, [#allocation6], 128, 128, 8
        $region16: #{tpu_custom_call.1} parent=11 // pred_fallthru
          _
        // Predicated region
        $region17: #{tpu_custom_call.1} parent=11 // pred_check
          %p584 = pneg %p110
        $region18: #{tpu_custom_call.1} parent=11 // pred_check_branch
          %586 = sbr.rel (%p584) target = $region20
        $region19: #{tpu_custom_call.1} parent=11 // pred_region
          _
        $region20: #{tpu_custom_call.1} parent=11 // pred_fallthru
          _
        // Predicated region
        $region21: #{tpu_custom_call.1} parent=11 // pred_check
          %p587 = pneg %p131
        $region22: #{tpu_custom_call.1} parent=11 // pred_check_branch
          %589 = sbr.rel (%p587) target = $region24
        $region23: #{tpu_custom_call.1} parent=11 // pred_region
          %s591 = ssub.s32 16, 16
          %592 = vsyncadd [#allocation6], %s591
          %s594 = sshll.u32 [#allocation7], 4
          %s595 = int_to_ptr.vmem [resolvable:$true] %s594
          %597 = dma.hbm_to_vmem [thread:$0]  %s3, 16, %s595, [#allocation6]
        $region24: #{tpu_custom_call.1} parent=11 // pred_fallthru
          _
        // Predicated region
        $region25: #{tpu_custom_call.1} parent=11 // pred_check
          %p598 = pneg %p152
        $region26: #{tpu_custom_call.1} parent=11 // pred_check_branch
          %600 = sbr.rel (%p598) target = $region28
        $region27: #{tpu_custom_call.1} parent=11 // pred_region
          %s602 = ssub.s32 16, 16
          %603 = vsyncadd [#allocation9], %s602
          %s605 = sshll.u32 [#allocation8], 4
          %s606 = int_to_ptr.vmem [resolvable:$true] %s605
          %608 = dma.hbm_to_vmem [thread:$0]  %s4, 16, %s606, [#allocation9]
        $region28: #{tpu_custom_call.1} parent=11 // pred_fallthru
          _
        // Predicated region
        $region29: #{tpu_custom_call.1} parent=11 // pred_check
          %p609 = pneg %p173
        $region30: #{tpu_custom_call.1} parent=11 // pred_check_branch
          %611 = sbr.rel (%p609) target = $region32
        $region31: #{tpu_custom_call.1} parent=11 // pred_region
          _
        $region32: #{tpu_custom_call.1} parent=11 // pred_fallthru
          _
        // Predicated region
        $region33: #{tpu_custom_call.1} parent=11 // pred_check
          %p612 = pneg %p194
        $region34: #{tpu_custom_call.1} parent=11 // pred_check_branch
          %614 = sbr.rel (%p612) target = $region36
        $region35: #{tpu_custom_call.1} parent=11 // pred_region
          %s616 = ssub.s32 16, 16
          %617 = vsyncadd [#allocation9], %s616
          %s619 = sshll.u32 [#allocation10], 4
          %s620 = int_to_ptr.vmem [resolvable:$true] %s619
          %622 = dma.hbm_to_vmem [thread:$0]  %s6, 16, %s620, [#allocation9]
        $region36: #{tpu_custom_call.1} parent=11 // pred_fallthru
          _
        // Predicated region
        $region37: #{tpu_custom_call.1} parent=11 // pred_check
          %p623 = pneg %p215
        $region38: #{tpu_custom_call.1} parent=11 // pred_check_branch
          %625 = sbr.rel (%p623) target = $region40
        $region39: #{tpu_custom_call.1} parent=11 // pred_region
          %s627 = ssub.s32 16, 16
          %628 = vsyncadd [#allocation12], %s627
          %s630 = sshll.u32 [#allocation11], 4
          %s631 = int_to_ptr.vmem [resolvable:$true] %s630
          %633 = dma.hbm_to_vmem [thread:$0]  %s7, 16, %s631, [#allocation12]
        $region40: #{tpu_custom_call.1} parent=11 // pred_fallthru
          _
        // Predicated region
        $region41: #{tpu_custom_call.1} parent=11 // pred_check
          %p634 = pneg %p236
        $region42: #{tpu_custom_call.1} parent=11 // pred_check_branch
          %636 = sbr.rel (%p634) target = $region44
        $region43: #{tpu_custom_call.1} parent=11 // pred_region
          %s638 = ssub.s32 16, 16
          %639 = vsyncadd [#allocation12], %s638
          %s641 = sshll.u32 [#allocation13], 4
          %s642 = int_to_ptr.vmem [resolvable:$true] %s641
          %644 = dma.hbm_to_vmem [thread:$0]  %s8, 16, %s642, [#allocation12]
        $region44: #{tpu_custom_call.1} parent=11 // pred_fallthru
          _
        // Predicated region
        $region45: #{tpu_custom_call.1} parent=11 // pred_check
          %p645 = pneg %p257
        $region46: #{tpu_custom_call.1} parent=11 // pred_check_branch
          %647 = sbr.rel (%p645) target = $region48
        $region47: #{tpu_custom_call.1} parent=11 // pred_region
          %s649 = ssub.s32 512, 512
          %650 = vsyncadd [#allocation15], %s649
          %s651 = sshll.u32 [#allocation14], 4
          %s652 = int_to_ptr.vmem [resolvable:$true] %s651
          %657 = dma.hbm_to_vmem [thread:$0]  %s9, 512, %s652, [#allocation15], 128, 128, 8
        $region48: #{tpu_custom_call.1} parent=11 // pred_fallthru
          _
        // Predicated region
        $region49: #{tpu_custom_call.1} parent=11 // pred_check
          %p658 = pneg %p278
        $region50: #{tpu_custom_call.1} parent=11 // pred_check_branch
          %660 = sbr.rel (%p658) target = $region52
        $region51: #{tpu_custom_call.1} parent=11 // pred_region
          %s662 = ssub.s32 16, 16
          %663 = vsyncadd [#allocation15], %s662
          %s665 = sshll.u32 [#allocation16], 4
          %s666 = int_to_ptr.vmem [resolvable:$true] %s665
          %668 = dma.hbm_to_vmem [thread:$0]  %s10, 16, %s666, [#allocation15]
        $region52: #{tpu_custom_call.1} parent=11 // pred_fallthru
          _
        // Predicated region
        $region53: #{tpu_custom_call.1} parent=11 // pred_check
          %p669 = pneg %p299
        $region54: #{tpu_custom_call.1} parent=11 // pred_check_branch
          %671 = sbr.rel (%p669) target = $region56
        $region55: #{tpu_custom_call.1} parent=11 // pred_region
          %s673 = ssub.s32 16, 16
          %674 = vsyncadd [#allocation18], %s673
          %s676 = sshll.u32 [#allocation17], 4
          %s677 = int_to_ptr.vmem [resolvable:$true] %s676
          %679 = dma.hbm_to_vmem [thread:$0]  %s11, 16, %s677, [#allocation18]
        $region56: #{tpu_custom_call.1} parent=11 // pred_fallthru
          _
        // Predicated region
        $region57: #{tpu_custom_call.1} parent=11 // pred_check
          %p680 = pneg %p320
        $region58: #{tpu_custom_call.1} parent=11 // pred_check_branch
          %682 = sbr.rel (%p680) target = $region60
        $region59: #{tpu_custom_call.1} parent=11 // pred_region
          _
        $region60: #{tpu_custom_call.1} parent=11 // pred_fallthru
          _
        // Predicated region
        $region61: #{tpu_custom_call.1} parent=11 // pred_check
          %p683 = pneg %p341
        $region62: #{tpu_custom_call.1} parent=11 // pred_check_branch
          %685 = sbr.rel (%p683) target = $region64
        $region63: #{tpu_custom_call.1} parent=11 // pred_region
          _
        $region64: #{tpu_custom_call.1} parent=11 // pred_fallthru
          _
        // Predicated region
        $region65: #{tpu_custom_call.1} parent=11 // pred_check
          %p686 = pneg %p362
        $region66: #{tpu_custom_call.1} parent=11 // pred_check_branch
          %688 = sbr.rel (%p686) target = $region68
        $region67: #{tpu_custom_call.1} parent=11 // pred_region
          _
        $region68: #{tpu_custom_call.1} parent=11 // pred_fallthru
          _
        // Predicated region
        $region69: #{tpu_custom_call.1} parent=11 // pred_check
          %p689 = pneg %p383
        $region70: #{tpu_custom_call.1} parent=11 // pred_check_branch
          %691 = sbr.rel (%p689) target = $region72
        $region71: #{tpu_custom_call.1} parent=11 // pred_region
          %s693 = ssub.s32 16, 16
          %694 = vsyncadd [#allocation18], %s693
          %s696 = sshll.u32 [#allocation19], 4
          %s697 = int_to_ptr.vmem [resolvable:$true] %s696
          %699 = dma.hbm_to_vmem [thread:$0]  %s15, 16, %s697, [#allocation18]
        $region72: #{tpu_custom_call.1} parent=11 // pred_fallthru
          _
        // Predicated region
        $region73: #{tpu_custom_call.1} parent=11 // pred_check
          %p700 = pneg %p404
        $region74: #{tpu_custom_call.1} parent=11 // pred_check_branch
          %702 = sbr.rel (%p700) target = $region76
        $region75: #{tpu_custom_call.1} parent=11 // pred_region
          %s704 = ssub.s32 16, 16
          %705 = vsyncadd [#allocation21], %s704
          %s707 = sshll.u32 [#allocation20], 4
          %s708 = int_to_ptr.vmem [resolvable:$true] %s707
          %710 = dma.hbm_to_vmem [thread:$0]  %s16, 16, %s708, [#allocation21]
        $region76: #{tpu_custom_call.1} parent=11 // pred_fallthru
          _
        // Predicated region
        $region77: #{tpu_custom_call.1} parent=11 // pred_check
          %p711 = pneg %p425
        $region78: #{tpu_custom_call.1} parent=11 // pred_check_branch
          %713 = sbr.rel (%p711) target = $region80
        $region79: #{tpu_custom_call.1} parent=11 // pred_region
          %s715 = ssub.s32 128, 128
          %716 = vsyncadd [#allocation21], %s715
          %s718 = sshll.u32 [#allocation22], 4
          %s719 = int_to_ptr.vmem [resolvable:$true] %s718
          %721 = dma.hbm_to_vmem [thread:$0]  %s17, 128, %s719, [#allocation21]
        $region80: #{tpu_custom_call.1} parent=11 // pred_fallthru
          _
        // Predicated region
        $region81: #{tpu_custom_call.1} parent=11 // pred_check
          %p722 = pneg %p446
        $region82: #{tpu_custom_call.1} parent=11 // pred_check_branch
          %724 = sbr.rel (%p722) target = $region84
        $region83: #{tpu_custom_call.1} parent=11 // pred_region
          %s726 = ssub.s32 16, 16
          %727 = vsyncadd [#allocation24], %s726
          %s729 = sshll.u32 [#allocation23], 4
          %s730 = int_to_ptr.vmem [resolvable:$true] %s729
          %732 = dma.hbm_to_vmem [thread:$0]  %s18, 16, %s730, [#allocation24]
        $region84: #{tpu_custom_call.1} parent=11 // pred_fallthru
          _
        // Predicated region
        $region85: #{tpu_custom_call.1} parent=11 // pred_check
          %p733 = pneg %p467
        $region86: #{tpu_custom_call.1} parent=11 // pred_check_branch
          %735 = sbr.rel (%p733) target = $region88
        $region87: #{tpu_custom_call.1} parent=11 // pred_region
          _
        $region88: #{tpu_custom_call.1} parent=11 // pred_fallthru
          _
        // Predicated region
        $region89: #{tpu_custom_call.1} parent=11 // pred_check
          %p736 = pneg %p488
        $region90: #{tpu_custom_call.1} parent=11 // pred_check_branch
          %738 = sbr.rel (%p736) target = $region92
        $region91: #{tpu_custom_call.1} parent=11 // pred_region
          %s740 = ssub.s32 16, 16
          %741 = vsyncadd [#allocation24], %s740
          %s743 = sshll.u32 [#allocation25], 4
          %s744 = int_to_ptr.vmem [resolvable:$true] %s743
          %746 = dma.hbm_to_vmem [thread:$0]  %s20, 16, %s744, [#allocation24]
        $region92: #{tpu_custom_call.1} parent=11 // pred_fallthru
          _
        // Predicated region
        $region93: #{tpu_custom_call.1} parent=11 // pred_check
          %p747 = pneg %p509
        $region94: #{tpu_custom_call.1} parent=11 // pred_check_branch
          %749 = sbr.rel (%p747) target = $region96
        $region95: #{tpu_custom_call.1} parent=11 // pred_region
          _
        $region96: #{tpu_custom_call.1} parent=11 // pred_fallthru
          _
        // Predicated region
        $region97: #{tpu_custom_call.1} parent=11 // pred_check
          %p750 = pneg %p530
        $region98: #{tpu_custom_call.1} parent=11 // pred_check_branch
          %752 = sbr.rel (%p750) target = $region100
        $region99: #{tpu_custom_call.1} parent=11 // pred_region
          _
        $region100: #{tpu_custom_call.1} parent=11 // pred_fallthru
          _
      $region12: #{tpu_custom_call.1} parent=5 // pred_fallthru
        _
      %p753 = scmp.lt.s32.totalorder %s42, 2
      // Predicated region
      $region101: #{tpu_custom_call.1} parent=5 // pred_check
        %p754 = pneg %p753
      $region102: #{tpu_custom_call.1} parent=5 // pred_check_branch
        %756 = sbr.rel (%p754) target = $region104
      $region103: #{tpu_custom_call.1} parent=5 // pred_region
        // Predicated region
        $region105: #{tpu_custom_call.1} parent=103 // pred_check
          %p757 = pneg %p62
        $region106: #{tpu_custom_call.1} parent=103 // pred_check_branch
          %759 = sbr.rel (%p757) target = $region108
        $region107: #{tpu_custom_call.1} parent=103 // pred_region
          %s760 = sand.u32 %s52, 1
          %s761 = scalar_lea.sflag [#allocation3], %s760
          %s762 = sand.u32 %s52, 1
          %s763 = smul.addr %s762, 8
          %s764 = scalar_lea.vmem [#allocation2], %s763
          %s766 = ssub.s32 128, 128
          %767 = vsyncadd %s761, %s766
          %s768 = smul.addr %s42, 128
          %s769 = scalar_lea.hbm %s0, %s768
          %s771 = sshll.u32 %s764, 4
          %s772 = int_to_ptr.vmem [resolvable:$true] %s771
          %774 = dma.hbm_to_vmem [thread:$0]  %s769, 128, %s772, %s761
        $region108: #{tpu_custom_call.1} parent=103 // pred_fallthru
          _
      $region104: #{tpu_custom_call.1} parent=5 // pred_fallthru
        _
      %p775 = scmp.le.s32.totalorder 1, %s42
      %p776 = scmp.lt.s32.totalorder %s42, 3
      %p777 = pnand %p775, %p776
      %p778 = pneg %p777
      // Predicated region
      $region109: #{tpu_custom_call.1} parent=5 // pred_check
        _
      $region110: #{tpu_custom_call.1} parent=5 // pred_check_branch
        %780 = sbr.rel (%p777) target = $region112
      $region111: #{tpu_custom_call.1} parent=5 // pred_region
        %s781 = ssub.s32 %s42, 1
        %s782 = sand.u32 %s55, 1
        %s783 = scalar_lea.sflag [#allocation3], %s782
        %s784 = sand.u32 %s55, 1
        %s785 = smul.addr %s784, 8
        %s786 = scalar_lea.vmem [#allocation2], %s785
        // Predicated region
        $region113: #{tpu_custom_call.1} parent=111 // pred_check
          %p787 = pneg %p68
        $region114: #{tpu_custom_call.1} parent=111 // pred_check_branch
          %789 = sbr.rel (%p787) target = $region116
        $region115: #{tpu_custom_call.1} parent=111 // pred_region
          %790 = dma.done %s783, 128
        $region116: #{tpu_custom_call.1} parent=111 // pred_fallthru
          _
        // Predicated region
        $region117: #{tpu_custom_call.1} parent=111 // pred_check
          %p791 = pneg %p89
        $region118: #{tpu_custom_call.1} parent=111 // pred_check_branch
          %793 = sbr.rel (%p791) target = $region120
        $region119: #{tpu_custom_call.1} parent=111 // pred_region
          %794 = dma.done [#allocation6], 512
        $region120: #{tpu_custom_call.1} parent=111 // pred_fallthru
          _
        // Predicated region
        $region121: #{tpu_custom_call.1} parent=111 // pred_check
          %p795 = pneg %p131
        $region122: #{tpu_custom_call.1} parent=111 // pred_check_branch
          %797 = sbr.rel (%p795) target = $region124
        $region123: #{tpu_custom_call.1} parent=111 // pred_region
          %798 = dma.done [#allocation6], 16
        $region124: #{tpu_custom_call.1} parent=111 // pred_fallthru
          _
        // Predicated region
        $region125: #{tpu_custom_call.1} parent=111 // pred_check
          %p799 = pneg %p152
        $region126: #{tpu_custom_call.1} parent=111 // pred_check_branch
          %801 = sbr.rel (%p799) target = $region128
        $region127: #{tpu_custom_call.1} parent=111 // pred_region
          %802 = dma.done [#allocation9], 16
        $region128: #{tpu_custom_call.1} parent=111 // pred_fallthru
          _
        // Predicated region
        $region129: #{tpu_custom_call.1} parent=111 // pred_check
          %p803 = pneg %p194
        $region130: #{tpu_custom_call.1} parent=111 // pred_check_branch
          %805 = sbr.rel (%p803) target = $region132
        $region131: #{tpu_custom_call.1} parent=111 // pred_region
          %806 = dma.done [#allocation9], 16
        $region132: #{tpu_custom_call.1} parent=111 // pred_fallthru
          _
        // Predicated region
        $region133: #{tpu_custom_call.1} parent=111 // pred_check
          %p807 = pneg %p215
        $region134: #{tpu_custom_call.1} parent=111 // pred_check_branch
          %809 = sbr.rel (%p807) target = $region136
        $region135: #{tpu_custom_call.1} parent=111 // pred_region
          %810 = dma.done [#allocation12], 16
        $region136: #{tpu_custom_call.1} parent=111 // pred_fallthru
          _
        // Predicated region
        $region137: #{tpu_custom_call.1} parent=111 // pred_check
          %p811 = pneg %p236
        $region138: #{tpu_custom_call.1} parent=111 // pred_check_branch
          %813 = sbr.rel (%p811) target = $region140
        $region139: #{tpu_custom_call.1} parent=111 // pred_region
          %814 = dma.done [#allocation12], 16
        $region140: #{tpu_custom_call.1} parent=111 // pred_fallthru
          _
        // Predicated region
        $region141: #{tpu_custom_call.1} parent=111 // pred_check
          %p815 = pneg %p257
        $region142: #{tpu_custom_call.1} parent=111 // pred_check_branch
          %817 = sbr.rel (%p815) target = $region144
        $region143: #{tpu_custom_call.1} parent=111 // pred_region
          %818 = dma.done [#allocation15], 512
        $region144: #{tpu_custom_call.1} parent=111 // pred_fallthru
          _
        // Predicated region
        $region145: #{tpu_custom_call.1} parent=111 // pred_check
          %p819 = pneg %p278
        $region146: #{tpu_custom_call.1} parent=111 // pred_check_branch
          %821 = sbr.rel (%p819) target = $region148
        $region147: #{tpu_custom_call.1} parent=111 // pred_region
          %822 = dma.done [#allocation15], 16
        $region148: #{tpu_custom_call.1} parent=111 // pred_fallthru
          _
        // Predicated region
        $region149: #{tpu_custom_call.1} parent=111 // pred_check
          %p823 = pneg %p299
        $region150: #{tpu_custom_call.1} parent=111 // pred_check_branch
          %825 = sbr.rel (%p823) target = $region152
        $region151: #{tpu_custom_call.1} parent=111 // pred_region
          %826 = dma.done [#allocation18], 16
        $region152: #{tpu_custom_call.1} parent=111 // pred_fallthru
          _
        // Predicated region
        $region153: #{tpu_custom_call.1} parent=111 // pred_check
          %p827 = pneg %p383
        $region154: #{tpu_custom_call.1} parent=111 // pred_check_branch
          %829 = sbr.rel (%p827) target = $region156
        $region155: #{tpu_custom_call.1} parent=111 // pred_region
          %830 = dma.done [#allocation18], 16
        $region156: #{tpu_custom_call.1} parent=111 // pred_fallthru
          _
        // Predicated region
        $region157: #{tpu_custom_call.1} parent=111 // pred_check
          %p831 = pneg %p404
        $region158: #{tpu_custom_call.1} parent=111 // pred_check_branch
          %833 = sbr.rel (%p831) target = $region160
        $region159: #{tpu_custom_call.1} parent=111 // pred_region
          %834 = dma.done [#allocation21], 16
        $region160: #{tpu_custom_call.1} parent=111 // pred_fallthru
          _
        // Predicated region
        $region161: #{tpu_custom_call.1} parent=111 // pred_check
          %p835 = pneg %p425
        $region162: #{tpu_custom_call.1} parent=111 // pred_check_branch
          %837 = sbr.rel (%p835) target = $region164
        $region163: #{tpu_custom_call.1} parent=111 // pred_region
          %838 = dma.done [#allocation21], 128
        $region164: #{tpu_custom_call.1} parent=111 // pred_fallthru
          _
        // Predicated region
        $region165: #{tpu_custom_call.1} parent=111 // pred_check
          %p839 = pneg %p446
        $region166: #{tpu_custom_call.1} parent=111 // pred_check_branch
          %841 = sbr.rel (%p839) target = $region168
        $region167: #{tpu_custom_call.1} parent=111 // pred_region
          %842 = dma.done [#allocation24], 16
        $region168: #{tpu_custom_call.1} parent=111 // pred_fallthru
          _
        // Predicated region
        $region169: #{tpu_custom_call.1} parent=111 // pred_check
          %p843 = pneg %p488
        $region170: #{tpu_custom_call.1} parent=111 // pred_check_branch
          %845 = sbr.rel (%p843) target = $region172
        $region171: #{tpu_custom_call.1} parent=111 // pred_region
          %846 = dma.done [#allocation24], 16
        $region172: #{tpu_custom_call.1} parent=111 // pred_fallthru
          _
        %s847 = sand.u32 %s55, 1
        %s848 = scalar_lea.sflag [#allocation3], %s847
        %s849 = sand.u32 %s55, 1
        %s850 = smul.addr %s849, 8
        %s851 = scalar_lea.vmem [#allocation2], %s850
        %p852 = pneg %p68
        %p853 = pneg %p65
        %p854 = pneg %p89
        %p855 = pneg %p86
        %p856 = pneg %p110
        %p857 = pneg %p107
        %p858 = pneg %p131
        %p859 = pneg %p128
        %p860 = pneg %p152
        %p861 = pneg %p149
        %p862 = pneg %p173
        %p863 = pneg %p170
        %p864 = pneg %p194
        %p865 = pneg %p191
        %p866 = pneg %p215
        %p867 = pneg %p212
        %p868 = pneg %p236
        %p869 = pneg %p233
        %p870 = pneg %p257
        %p871 = pneg %p254
        %p872 = pneg %p278
        %p873 = pneg %p275
        %p874 = pneg %p299
        %p875 = pneg %p296
        %p876 = pneg %p320
        %p877 = pneg %p317
        %p878 = pneg %p341
        %p879 = pneg %p338
        %p880 = pneg %p362
        %p881 = pneg %p359
        %p882 = pneg %p383
        %p883 = pneg %p380
        %p884 = pneg %p404
        %p885 = pneg %p401
        %p886 = pneg %p425
        %p887 = pneg %p422
        %p888 = pneg %p446
        %p889 = pneg %p443
        %p890 = pneg %p467
        %p891 = pneg %p464
        %p892 = pneg %p488
        %p893 = pneg %p485
        %p894 = pneg %p509
        %p895 = pneg %p506
        %p896 = pneg %p530
        %p897 = pneg %p527
        %p898 = pneg %p556
        %p899 = pneg %p553
        %s900 = sand.u32 %s543, 1
        %s901 = scalar_lea.sflag [#allocation4], %s900
        %s902 = sand.u32 %s543, 1
        %s903 = smul.addr %s902, 8
        %s904 = scalar_lea.vmem [#allocation26], %s903
        %v905 = vld [vmem:[%s786] sm:$0xff]
        %v906 = vld [vmem:[#allocation5] sm:$0xff]
        %v907 = vld [vmem:[#allocation5 + $0x8] sm:$0xff]
        %v908 = vld [vmem:[#allocation5 + $0x10] sm:$0xff]
        %v909 = vld [vmem:[#allocation5 + $0x18] sm:$0xff]
        %v910 = vld [vmem:[%s2] sm:$0x1]
        %v912 = vlaneseq
        %v913 = vshrl.u32 %v912, 7
        %v914 = vsub.s32 0, %v913
        %v915 = vrot.slane %v910, %v914
        %vm917 = vcmask 261120
        %v919 = vsel %vm917, %v905, 0
        %921 = vmatprep.subr.mxu0 0.0
        %922 = vmatpush1.msra.mxu0 %v906
        %923 = vmatprep.subr.mxu0 0.0
        %924 = vmatpush1.msra.mxu0 %v907
        %925 = vmatprep.subr.mxu0 0.0
        %926 = vmatpush1.msra.mxu0 %v908
        %927 = vmatprep.subr.mxu0 0.0
        %928 = vmatpush1.msra.mxu0 %v909
        %929 = vmatprep.subr.mxu0 0.0
        %930 = vmatpush1.msra.mxu0 0.0
        %931 = vmatprep.subr.mxu0 0.0
        %932 = vmatpush1.msra.mxu0 0.0
        %933 = vmatprep.subr.mxu0 0.0
        %934 = vmatpush1.msra.mxu0 0.0
        %935 = vmatprep.subr.mxu0 0.0
        %936 = vmatpush1.msra.mxu0 0.0
        %937 = vmatprep.subr.mxu0 0.0
        %938 = vmatpush1.msra.mxu0 0.0
        %939 = vmatprep.subr.mxu0 0.0
        %940 = vmatpush1.msra.mxu0 0.0
        %941 = vmatprep.subr.mxu0 0.0
        %942 = vmatpush1.msra.mxu0 0.0
        %943 = vmatprep.subr.mxu0 0.0
        %944 = vmatpush1.msra.mxu0 0.0
        %945 = vmatprep.subr.mxu0 0.0
        %946 = vmatpush1.msra.mxu0 0.0
        %947 = vmatprep.subr.mxu0 0.0
        %948 = vmatpush1.msra.mxu0 0.0
        %949 = vmatprep.subr.mxu0 0.0
        %950 = vmatpush1.msra.mxu0 0.0
        %951 = vmatprep.subr.mxu0 0.0
        %952 = vmatpush1.msra.mxu0 0.0
        %953 = vmatprep.subr.mxu0 0.0
        %954 = vmatpush1.msra.mxu0 0.0
        %955 = vmatprep.subr.mxu0 0.0
        %956 = vmatpush1.msra.mxu0 0.0
        %957 = vmatprep.subr.mxu0 0.0
        %958 = vmatpush1.msra.mxu0 0.0
        %959 = vmatprep.subr.mxu0 0.0
        %960 = vmatpush1.msra.mxu0 0.0
        %961 = vmatprep.subr.mxu0 0.0
        %962 = vmatpush1.msra.mxu0 0.0
        %963 = vmatprep.subr.mxu0 0.0
        %964 = vmatpush1.msra.mxu0 0.0
        %965 = vmatprep.subr.mxu0 0.0
        %966 = vmatpush1.msra.mxu0 0.0
        %967 = vmatprep.subr.mxu0 0.0
        %968 = vmatpush1.msra.mxu0 0.0
        %969 = vmatprep.subr.mxu0 0.0
        %970 = vmatpush1.msra.mxu0 0.0
        %971 = vmatprep.subr.mxu0 0.0
        %972 = vmatpush1.msra.mxu0 0.0
        %973 = vmatprep.subr.mxu0 0.0
        %974 = vmatpush1.msra.mxu0 0.0
        %975 = vmatprep.subr.mxu0 0.0
        %976 = vmatpush1.msra.mxu0 0.0
        %977 = vmatprep.subr.mxu0 0.0
        %978 = vmatpush1.msra.mxu0 0.0
        %979 = vmatprep.subr.mxu0 0.0
        %980 = vmatpush1.msra.mxu0 0.0
        %981 = vmatprep.subr.mxu0 0.0
        %982 = vmatpush1.msra.mxu0 0.0
        %983 = vmatprep.subr.mxu0 0.0
        %984 = vmatpush1.msra.mxu0 0.0
        %985 = vmatprep.mubr.f32.mxu0 0.0
        %986 = vmatmul.mubr.f32.gmra.mrb[0].mxu0 %v919
        %v987 = vpop.f32.mrb[0].mxu0
        %v988 = vadd.f32 %v915, %v987
        %v989 = vpop.f32.mrb[0].mxu0
        %990 = vdwg.mxu0
        %v991 = vld [vmem:[#allocation7] sm:$0x1]
        %v992 = vld [vmem:[#allocation8] sm:$0x1]
        %v993 = vsel %vm917, %v988, 0.0
        %994 = vadd.xlane.f32.xlu0 %v993
        %v995 = vpop.xlane.xlu0 %994
        %v996 = vmul.f32 %v988, %v988
        %v997 = vsel %vm917, %v996, 0.0
        %998 = vadd.xlane.f32.xlu0 %v997
        %v999 = vpop.xlane.xlu0 %998
        %v1000 = vmul.f32 %v995, 0.03125
        %v1001 = vmul.f32 %v999, 0.03125
        %v1002 = vmul.f32 %v1000, %v1000
        %v1003 = vsub.f32 %v1001, %v1002
        %v1004 = vadd.f32 %v1003, 1e-05
        %v1005 = vrsqrt.pop %v1004
        %v1007 = vlaneseq
        %v1008 = vshrl.u32 %v1007, 7
        %v1009 = vsub.s32 0, %v1008
        %v1010 = vrot.slane %v991, %v1009
        %v1012 = vmul.f32 %v1010, %v1005
        %v1013 = vmul.f32 %v1000, %v1012
        %v1015 = vlaneseq
        %v1016 = vshrl.u32 %v1015, 7
        %v1017 = vsub.s32 0, %v1016
        %v1018 = vrot.slane %v992, %v1017
        %v1020 = vsub.f32 %v1018, %v1013
        %v1021 = vmul.f32 %v988, %v1012
        %v1022 = vadd.f32 %v1021, %v1020
        %v1023 = vmax.f32 %v1022, 0.0
        %v1024 = vld [vmem:[%s5] sm:$0xff]
        %v1025 = vld [vmem:[%s5 + $0x8] sm:$0xff]
        %v1026 = vld [vmem:[%s5 + $0x10] sm:$0xff]
        %v1027 = vld [vmem:[%s5 + $0x18] sm:$0xff]
        %v1028 = vld [vmem:[#allocation10] sm:$0x1]
        %v1030 = vlaneseq
        %v1031 = vshrl.u32 %v1030, 7
        %v1032 = vsub.s32 0, %v1031
        %v1033 = vrot.slane %v1028, %v1032
        %1035 = vmatprep.subr.mxu0 0.0
        %1036 = vmatpush1.msra.mxu0 %v1024
        %1037 = vmatprep.subr.mxu0 0.0
        %1038 = vmatpush1.msra.mxu0 %v1025
        %1039 = vmatprep.subr.mxu0 0.0
        %1040 = vmatpush1.msra.mxu0 %v1026
        %1041 = vmatprep.subr.mxu0 0.0
        %1042 = vmatpush1.msra.mxu0 %v1027
        %1043 = vmatprep.subr.mxu0 0.0
        %1044 = vmatpush1.msra.mxu0 0.0
        %1045 = vmatprep.subr.mxu0 0.0
        %1046 = vmatpush1.msra.mxu0 0.0
        %1047 = vmatprep.subr.mxu0 0.0
        %1048 = vmatpush1.msra.mxu0 0.0
        %1049 = vmatprep.subr.mxu0 0.0
        %1050 = vmatpush1.msra.mxu0 0.0
        %1051 = vmatprep.subr.mxu0 0.0
        %1052 = vmatpush1.msra.mxu0 0.0
        %1053 = vmatprep.subr.mxu0 0.0
        %1054 = vmatpush1.msra.mxu0 0.0
        %1055 = vmatprep.subr.mxu0 0.0
        %1056 = vmatpush1.msra.mxu0 0.0
        %1057 = vmatprep.subr.mxu0 0.0
        %1058 = vmatpush1.msra.mxu0 0.0
        %1059 = vmatprep.subr.mxu0 0.0
        %1060 = vmatpush1.msra.mxu0 0.0
        %1061 = vmatprep.subr.mxu0 0.0
        %1062 = vmatpush1.msra.mxu0 0.0
        %1063 = vmatprep.subr.mxu0 0.0
        %1064 = vmatpush1.msra.mxu0 0.0
        %1065 = vmatprep.subr.mxu0 0.0
        %1066 = vmatpush1.msra.mxu0 0.0
        %1067 = vmatprep.subr.mxu0 0.0
        %1068 = vmatpush1.msra.mxu0 0.0
        %1069 = vmatprep.subr.mxu0 0.0
        %1070 = vmatpush1.msra.mxu0 0.0
        %1071 = vmatprep.subr.mxu0 0.0
        %1072 = vmatpush1.msra.mxu0 0.0
        %1073 = vmatprep.subr.mxu0 0.0
        %1074 = vmatpush1.msra.mxu0 0.0
        %1075 = vmatprep.subr.mxu0 0.0
        %1076 = vmatpush1.msra.mxu0 0.0
        %1077 = vmatprep.subr.mxu0 0.0
        %1078 = vmatpush1.msra.mxu0 0.0
        %1079 = vmatprep.subr.mxu0 0.0
        %1080 = vmatpush1.msra.mxu0 0.0
        %1081 = vmatprep.subr.mxu0 0.0
        %1082 = vmatpush1.msra.mxu0 0.0
        %1083 = vmatprep.subr.mxu0 0.0
        %1084 = vmatpush1.msra.mxu0 0.0
        %1085 = vmatprep.subr.mxu0 0.0
        %1086 = vmatpush1.msra.mxu0 0.0
        %1087 = vmatprep.subr.mxu0 0.0
        %1088 = vmatpush1.msra.mxu0 0.0
        %1089 = vmatprep.subr.mxu0 0.0
        %1090 = vmatpush1.msra.mxu0 0.0
        %1091 = vmatprep.subr.mxu0 0.0
        %1092 = vmatpush1.msra.mxu0 0.0
        %1093 = vmatprep.subr.mxu0 0.0
        %1094 = vmatpush1.msra.mxu0 0.0
        %1095 = vmatprep.subr.mxu0 0.0
        %1096 = vmatpush1.msra.mxu0 0.0
        %1097 = vmatprep.subr.mxu0 0.0
        %1098 = vmatpush1.msra.mxu0 0.0
        %1099 = vmatprep.mubr.f32.mxu0 0.0
        %1100 = vmatmul.mubr.f32.gmra.mrb[0].mxu0 %v919
        %v1101 = vpop.f32.mrb[0].mxu0
        %v1102 = vadd.f32 %v1033, %v1101
        %v1103 = vpop.f32.mrb[0].mxu0
        %1104 = vdwg.mxu0
        %v1105 = vld [vmem:[#allocation11] sm:$0x1]
        %v1106 = vld [vmem:[#allocation13] sm:$0x1]
        %v1107 = vsel %vm917, %v1102, 0.0
        %1108 = vadd.xlane.f32.xlu0 %v1107
        %v1109 = vpop.xlane.xlu0 %1108
        %v1110 = vmul.f32 %v1102, %v1102
        %v1111 = vsel %vm917, %v1110, 0.0
        %1112 = vadd.xlane.f32.xlu0 %v1111
        %v1113 = vpop.xlane.xlu0 %1112
        %v1114 = vmul.f32 %v1109, 0.03125
        %v1115 = vmul.f32 %v1113, 0.03125
        %v1116 = vmul.f32 %v1114, %v1114
        %v1117 = vsub.f32 %v1115, %v1116
        %v1118 = vadd.f32 %v1117, 1e-05
        %v1119 = vrsqrt.pop %v1118
        %v1121 = vlaneseq
        %v1122 = vshrl.u32 %v1121, 7
        %v1123 = vsub.s32 0, %v1122
        %v1124 = vrot.slane %v1105, %v1123
        %v1126 = vmul.f32 %v1124, %v1119
        %v1127 = vmul.f32 %v1114, %v1126
        %v1129 = vlaneseq
        %v1130 = vshrl.u32 %v1129, 7
        %v1131 = vsub.s32 0, %v1130
        %v1132 = vrot.slane %v1106, %v1131
        %v1134 = vsub.f32 %v1132, %v1127
        %v1135 = vmul.f32 %v1102, %v1126
        %v1136 = vadd.f32 %v1135, %v1134
        %v1137 = vmax.f32 %v1136, 0.0
        %v1138 = vld [vmem:[#allocation14] sm:$0xff]
        %v1139 = vld [vmem:[#allocation14 + $0x8] sm:$0xff]
        %v1140 = vld [vmem:[#allocation14 + $0x10] sm:$0xff]
        %v1141 = vld [vmem:[#allocation14 + $0x18] sm:$0xff]
        %v1142 = vld [vmem:[#allocation16] sm:$0x1]
        %v1144 = vlaneseq
        %v1145 = vshrl.u32 %v1144, 7
        %v1146 = vsub.s32 0, %v1145
        %v1147 = vrot.slane %v1142, %v1146
        %1149 = vmatprep.subr.mxu0 0.0
        %1150 = vmatpush1.msra.mxu0 %v1138
        %1151 = vmatprep.subr.mxu0 0.0
        %1152 = vmatpush1.msra.mxu0 %v1139
        %1153 = vmatprep.subr.mxu0 0.0
        %1154 = vmatpush1.msra.mxu0 %v1140
        %1155 = vmatprep.subr.mxu0 0.0
        %1156 = vmatpush1.msra.mxu0 %v1141
        %1157 = vmatprep.subr.mxu0 0.0
        %1158 = vmatpush1.msra.mxu0 0.0
        %1159 = vmatprep.subr.mxu0 0.0
        %1160 = vmatpush1.msra.mxu0 0.0
        %1161 = vmatprep.subr.mxu0 0.0
        %1162 = vmatpush1.msra.mxu0 0.0
        %1163 = vmatprep.subr.mxu0 0.0
        %1164 = vmatpush1.msra.mxu0 0.0
        %1165 = vmatprep.subr.mxu0 0.0
        %1166 = vmatpush1.msra.mxu0 0.0
        %1167 = vmatprep.subr.mxu0 0.0
        %1168 = vmatpush1.msra.mxu0 0.0
        %1169 = vmatprep.subr.mxu0 0.0
        %1170 = vmatpush1.msra.mxu0 0.0
        %1171 = vmatprep.subr.mxu0 0.0
        %1172 = vmatpush1.msra.mxu0 0.0
        %1173 = vmatprep.subr.mxu0 0.0
        %1174 = vmatpush1.msra.mxu0 0.0
        %1175 = vmatprep.subr.mxu0 0.0
        %1176 = vmatpush1.msra.mxu0 0.0
        %1177 = vmatprep.subr.mxu0 0.0
        %1178 = vmatpush1.msra.mxu0 0.0
        %1179 = vmatprep.subr.mxu0 0.0
        %1180 = vmatpush1.msra.mxu0 0.0
        %1181 = vmatprep.subr.mxu0 0.0
        %1182 = vmatpush1.msra.mxu0 0.0
        %1183 = vmatprep.subr.mxu0 0.0
        %1184 = vmatpush1.msra.mxu0 0.0
        %1185 = vmatprep.subr.mxu0 0.0
        %1186 = vmatpush1.msra.mxu0 0.0
        %1187 = vmatprep.subr.mxu0 0.0
        %1188 = vmatpush1.msra.mxu0 0.0
        %1189 = vmatprep.subr.mxu0 0.0
        %1190 = vmatpush1.msra.mxu0 0.0
        %1191 = vmatprep.subr.mxu0 0.0
        %1192 = vmatpush1.msra.mxu0 0.0
        %1193 = vmatprep.subr.mxu0 0.0
        %1194 = vmatpush1.msra.mxu0 0.0
        %1195 = vmatprep.subr.mxu0 0.0
        %1196 = vmatpush1.msra.mxu0 0.0
        %1197 = vmatprep.subr.mxu0 0.0
        %1198 = vmatpush1.msra.mxu0 0.0
        %1199 = vmatprep.subr.mxu0 0.0
        %1200 = vmatpush1.msra.mxu0 0.0
        %1201 = vmatprep.subr.mxu0 0.0
        %1202 = vmatpush1.msra.mxu0 0.0
        %1203 = vmatprep.subr.mxu0 0.0
        %1204 = vmatpush1.msra.mxu0 0.0
        %1205 = vmatprep.subr.mxu0 0.0
        %1206 = vmatpush1.msra.mxu0 0.0
        %1207 = vmatprep.subr.mxu0 0.0
        %1208 = vmatpush1.msra.mxu0 0.0
        %1209 = vmatprep.subr.mxu0 0.0
        %1210 = vmatpush1.msra.mxu0 0.0
        %1211 = vmatprep.subr.mxu0 0.0
        %1212 = vmatpush1.msra.mxu0 0.0
        %1213 = vmatprep.mubr.f32.mxu0 0.0
        %1214 = vmatmul.mubr.f32.gmra.mrb[0].mxu0 %v919
        %v1215 = vpop.f32.mrb[0].mxu0
        %v1216 = vadd.f32 %v1147, %v1215
        %v1217 = vpop.f32.mrb[0].mxu0
        %1218 = vdwg.mxu0
        %v1219 = vld [vmem:[#allocation17] sm:$0x1]
        %v1220 = vld [vmem:[%s12] sm:$0x1]
        %v1221 = vsel %vm917, %v1216, 0.0
        %1222 = vadd.xlane.f32.xlu0 %v1221
        %v1223 = vpop.xlane.xlu0 %1222
        %v1224 = vmul.f32 %v1216, %v1216
        %v1225 = vsel %vm917, %v1224, 0.0
        %1226 = vadd.xlane.f32.xlu0 %v1225
        %v1227 = vpop.xlane.xlu0 %1226
        %v1228 = vmul.f32 %v1223, 0.03125
        %v1229 = vmul.f32 %v1227, 0.03125
        %v1230 = vmul.f32 %v1228, %v1228
        %v1231 = vsub.f32 %v1229, %v1230
        %v1232 = vadd.f32 %v1231, 1e-05
        %v1233 = vrsqrt.pop %v1232
        %v1235 = vlaneseq
        %v1236 = vshrl.u32 %v1235, 7
        %v1237 = vsub.s32 0, %v1236
        %v1238 = vrot.slane %v1219, %v1237
        %v1240 = vmul.f32 %v1238, %v1233
        %v1241 = vmul.f32 %v1228, %v1240
        %v1243 = vlaneseq
        %v1244 = vshrl.u32 %v1243, 7
        %v1245 = vsub.s32 0, %v1244
        %v1246 = vrot.slane %v1220, %v1245
        %v1248 = vsub.f32 %v1246, %v1241
        %v1249 = vmul.f32 %v1216, %v1240
        %v1250 = vadd.f32 %v1249, %v1248
        %v1251 = vmax.f32 %v1250, 0.0
        %v1252 = vld [vmem:[%s13] sm:$0xff]
        %v1253 = vld [vmem:[%s13 + $0x8] sm:$0xff]
        %v1254 = vld [vmem:[%s13 + $0x10] sm:$0xff]
        %v1255 = vld [vmem:[%s13 + $0x18] sm:$0xff]
        %v1256 = vld [vmem:[%s14] sm:$0x1]
        %v1257 = vld [vmem:[#allocation19] sm:$0x1]
        %v1258 = vld [vmem:[#allocation20] sm:$0x1]
        %v1259 = vld [vmem:[#allocation22] sm:$0xff]
        %v1260 = vld [vmem:[#allocation23] sm:$0x1]
        %v1261 = vld [vmem:[%s19] sm:$0xff]
        %v1262 = vld [vmem:[%s19 + $0x8] sm:$0xff]
        %v1263 = vld [vmem:[#allocation25] sm:$0x1]
        %v1264 = vld [vmem:[%s21] sm:$0xff]
        %v1265 = vld [vmem:[%s21 + $0x8] sm:$0xff]
        %v1266 = vld [vmem:[%s21 + $0x10] sm:$0xff]
        %v1267 = vld [vmem:[%s21 + $0x18] sm:$0xff]
        %v1268 = vld [vmem:[%s22] sm:$0x1]
        %v1269 = vand.u32 2147483647, %v1023
        %vm1270 = vcmp.le.f32.partialorder %v1269, 0.7853982
        %vm1271 = vcmp.lt.s32.totalorder %v1023, 0
        %v1272 = vand.u32 %v1023, 2139095040
        %v1273 = vshrl.u32 %v1272, 23
        %v1274 = vsub.s32 %v1273, 127
        %v1275 = vand.u32 2147483647, %v1023
        %v1276 = vand.u32 %v1275, 8388607
        %v1277 = vor.u32 %v1276, 8388608
        %v1278 = vsub.s32 0, %v1277
        %v1279 = vadd.s32 %v1274, 1
        %vm1280 = vcmp.gt.s32.totalorder %v1279, 0
        %v1281 = vsel %vm1280, %v1279, 0
        %v1282 = vshrl.u32 %v1281, 5
        %v1283 = vand.u32 %v1281, 31
        %v1284 = vsub.s32 32, %v1283
        %v1285 = vshrl.u32 683565275, %v1284
        %v1286 = vshll.u32 683565275, %v1283
        %v1287 = vshrl.u32 2475754826, %v1284
        %v1288 = vor.u32 %v1286, %v1287
        %v1289 = vshll.u32 2475754826, %v1283
        %v1290 = vshrl.u32 2131351028, %v1284
        %v1291 = vor.u32 %v1289, %v1290
        %v1292 = vshll.u32 2131351028, %v1283
        %v1293 = vshrl.u32 2102212464, %v1284
        %v1294 = vor.u32 %v1292, %v1293
        %v1295 = vshll.u32 2102212464, %v1283
        %v1296 = vshrl.u32 920167782, %v1284
        %v1297 = vor.u32 %v1295, %v1296
        %v1298 = vshll.u32 920167782, %v1283
        %v1299 = vshrl.u32 1326507024, %v1284
        %v1300 = vor.u32 %v1298, %v1299
        %vm1301 = vcmp.lt.s32.totalorder %v1282, 1
        %vm1302 = vcmp.lt.s32.totalorder %v1282, 2
        %vm1303 = vcmp.lt.s32.totalorder %v1282, 3
        %vm1304 = vcmp.lt.s32.totalorder %v1282, 4
        %v1305 = vsel %vm1301, %v1285, %v1288
        %v1306 = vsel %vm1304, %v1294, 2102212464
        %v1307 = vsel %vm1303, %v1291, %v1306
        %v1308 = vsel %vm1302, %v1305, %v1307
        %v1309 = vsel %vm1301, %v1288, %v1291
        %v1310 = vsel %vm1304, %v1297, 920167782
        %v1311 = vsel %vm1303, %v1294, %v1310
        %v1312 = vsel %vm1302, %v1309, %v1311
        %v1313 = vsel %vm1301, %v1291, %v1294
        %v1314 = vsel %vm1304, %v1300, 1326507024
        %v1315 = vsel %vm1303, %v1297, %v1314
        %v1316 = vsel %vm1302, %v1313, %v1315
        %v1317 = vshll.u32 %v1277, 8
        %v1318 = vmul.u32.u64.compose %v1317, %v1316
        %v1319 = vextract.low.u32 %v1318
        %v1320 = vextract.high.u32 %v1318
        %v1321 = vmul.u32.u64.compose %v1317, %v1312
        %v1322 = vextract.low.u32 %v1321
        %v1323 = vextract.high.u32 %v1321
        %v1324 = vmul.u32 %v1317, %v1308
        %v1325 = vadd.s32 %v1320, %v1322
        %vm1326 = vc.u32 %v1320, %v1322
        %v1327 = vadd.s32 %v1323, 1
        %v1328 = vsel %vm1326, %v1327, %v1323
        %v1329 = vadd.s32 %v1324, %v1328
        %v1330 = vadd.s32 %v1329, 536870912
        %v1331 = vshrl.u32 %v1330, 30
        %v1332 = vshll.u32 %v1331, 30
        %v1333 = vsub.s32 %v1329, %v1332
        %vm1334 = vcmp.lt.s32.totalorder %v1333, 0
        %v1335 = vsub.s32 0, %v1333
        %v1336 = vsel %vm1334, %v1335, %v1333
        %v1337 = vclz %v1336
        %v1338 = vsub.s32 %v1337, 2
        %vm1339 = vcmp.gt.s32.totalorder 0, %v1338
        %v1340 = vsel %vm1339, 0, %v1338
        %v1341 = vsub.s32 32, %v1340
        %v1342 = vshll.u32 %v1333, %v1340
        %v1343 = vshrl.u32 %v1325, %v1341
        %v1344 = vor.u32 %v1342, %v1343
        %v1345 = vsub.s32 4294967266, %v1340
        %v1346 = vadd.s32 %v1345, 127
        %v1347 = vshll.u32 %v1346, 23
        %v1348 = vor.u32 4788187, %v1347
        %v1349 = vand.u32 2147483647, %v1348
        %v1351 = vcvt.s32.f32 %v1344
        %v1352 = vmul.f32 %v1351, %v1349
        %v1353 = vxor.u32 %v1352, 2147483648
        %v1354 = vsel %vm1271, %v1353, %v1352
        %v1355 = vsub.s32 4, %v1331
        %v1356 = vsel %vm1271, %v1355, %v1331
        %v1357 = vsel %vm1270, %v1023, %v1354
        %v1358 = vsel %vm1270, 0, %v1356
        %v1359 = vcosq.f32.pop %v1357
        %v1360 = vsinq.f32.pop %v1357
        %vm1361 = vweird.f32 %v1023
        %v1362 = vand.u32 %v1358, 3
        %vm1363 = vcmp.lt.s32.totalorder %v1362, 2
        %vm1364 = vcmp.eq.s32.totalorder %v1362, 0
        %v1365 = vxor.u32 %v1360, 2147483648
        %v1366 = vsel %vm1364, %v1359, %v1365
        %vm1367 = vcmp.eq.s32.totalorder %v1362, 2
        %v1368 = vxor.u32 %v1359, 2147483648
        %v1369 = vsel %vm1367, %v1368, %v1360
        %v1370 = vsel %vm1363, %v1366, %v1369
        %v1371 = vsel %vm1361, nan, %v1370
        %v1372 = vmul.f32 %v1137, %v1371
        %v1373 = vand.u32 2147483647, %v1023
        %vm1374 = vcmp.le.f32.partialorder %v1373, 0.7853982
        %vm1375 = vcmp.lt.s32.totalorder %v1023, 0
        %v1376 = vand.u32 %v1023, 2139095040
        %v1377 = vshrl.u32 %v1376, 23
        %v1378 = vsub.s32 %v1377, 127
        %v1379 = vand.u32 2147483647, %v1023
        %v1380 = vand.u32 %v1379, 8388607
        %v1381 = vor.u32 %v1380, 8388608
        %v1382 = vsub.s32 0, %v1381
        %v1383 = vadd.s32 %v1378, 1
        %vm1384 = vcmp.gt.s32.totalorder %v1383, 0
        %v1385 = vsel %vm1384, %v1383, 0
        %v1386 = vshrl.u32 %v1385, 5
        %v1387 = vand.u32 %v1385, 31
        %v1388 = vsub.s32 32, %v1387
        %v1389 = vshrl.u32 683565275, %v1388
        %v1390 = vshll.u32 683565275, %v1387
        %v1391 = vshrl.u32 2475754826, %v1388
        %v1392 = vor.u32 %v1390, %v1391
        %v1393 = vshll.u32 2475754826, %v1387
        %v1394 = vshrl.u32 2131351028, %v1388
        %v1395 = vor.u32 %v1393, %v1394
        %v1396 = vshll.u32 2131351028, %v1387
        %v1397 = vshrl.u32 2102212464, %v1388
        %v1398 = vor.u32 %v1396, %v1397
        %v1399 = vshll.u32 2102212464, %v1387
        %v1400 = vshrl.u32 920167782, %v1388
        %v1401 = vor.u32 %v1399, %v1400
        %v1402 = vshll.u32 920167782, %v1387
        %v1403 = vshrl.u32 1326507024, %v1388
        %v1404 = vor.u32 %v1402, %v1403
        %vm1405 = vcmp.lt.s32.totalorder %v1386, 1
        %vm1406 = vcmp.lt.s32.totalorder %v1386, 2
        %vm1407 = vcmp.lt.s32.totalorder %v1386, 3
        %vm1408 = vcmp.lt.s32.totalorder %v1386, 4
        %v1409 = vsel %vm1405, %v1389, %v1392
        %v1410 = vsel %vm1408, %v1398, 2102212464
        %v1411 = vsel %vm1407, %v1395, %v1410
        %v1412 = vsel %vm1406, %v1409, %v1411
        %v1413 = vsel %vm1405, %v1392, %v1395
        %v1414 = vsel %vm1408, %v1401, 920167782
        %v1415 = vsel %vm1407, %v1398, %v1414
        %v1416 = vsel %vm1406, %v1413, %v1415
        %v1417 = vsel %vm1405, %v1395, %v1398
        %v1418 = vsel %vm1408, %v1404, 1326507024
        %v1419 = vsel %vm1407, %v1401, %v1418
        %v1420 = vsel %vm1406, %v1417, %v1419
        %v1421 = vshll.u32 %v1381, 8
        %v1422 = vmul.u32.u64.compose %v1421, %v1420
        %v1423 = vextract.low.u32 %v1422
        %v1424 = vextract.high.u32 %v1422
        %v1425 = vmul.u32.u64.compose %v1421, %v1416
        %v1426 = vextract.low.u32 %v1425
        %v1427 = vextract.high.u32 %v1425
        %v1428 = vmul.u32 %v1421, %v1412
        %v1429 = vadd.s32 %v1424, %v1426
        %vm1430 = vc.u32 %v1424, %v1426
        %v1431 = vadd.s32 %v1427, 1
        %v1432 = vsel %vm1430, %v1431, %v1427
        %v1433 = vadd.s32 %v1428, %v1432
        %v1434 = vadd.s32 %v1433, 536870912
        %v1435 = vshrl.u32 %v1434, 30
        %v1436 = vshll.u32 %v1435, 30
        %v1437 = vsub.s32 %v1433, %v1436
        %vm1438 = vcmp.lt.s32.totalorder %v1437, 0
        %v1439 = vsub.s32 0, %v1437
        %v1440 = vsel %vm1438, %v1439, %v1437
        %v1441 = vclz %v1440
        %v1442 = vsub.s32 %v1441, 2
        %vm1443 = vcmp.gt.s32.totalorder 0, %v1442
        %v1444 = vsel %vm1443, 0, %v1442
        %v1445 = vsub.s32 32, %v1444
        %v1446 = vshll.u32 %v1437, %v1444
        %v1447 = vshrl.u32 %v1429, %v1445
        %v1448 = vor.u32 %v1446, %v1447
        %v1449 = vsub.s32 4294967266, %v1444
        %v1450 = vadd.s32 %v1449, 127
        %v1451 = vshll.u32 %v1450, 23
        %v1452 = vor.u32 4788187, %v1451
        %v1453 = vand.u32 2147483647, %v1452
        %v1455 = vcvt.s32.f32 %v1448
        %v1456 = vmul.f32 %v1455, %v1453
        %v1457 = vxor.u32 %v1456, 2147483648
        %v1458 = vsel %vm1375, %v1457, %v1456
        %v1459 = vsub.s32 4, %v1435
        %v1460 = vsel %vm1375, %v1459, %v1435
        %v1461 = vsel %vm1374, %v1023, %v1458
        %v1462 = vsel %vm1374, 0, %v1460
        %v1463 = vcosq.f32.pop %v1461
        %v1464 = vsinq.f32.pop %v1461
        %vm1465 = vweird.f32 %v1023
        %v1466 = vadd.s32 %v1462, 3
        %v1467 = vand.u32 %v1466, 3
        %vm1468 = vcmp.lt.s32.totalorder %v1467, 2
        %vm1469 = vcmp.eq.s32.totalorder %v1467, 0
        %v1470 = vxor.u32 %v1464, 2147483648
        %v1471 = vsel %vm1469, %v1463, %v1470
        %vm1472 = vcmp.eq.s32.totalorder %v1467, 2
        %v1473 = vxor.u32 %v1463, 2147483648
        %v1474 = vsel %vm1472, %v1473, %v1464
        %v1475 = vsel %vm1468, %v1471, %v1474
        %v1476 = vsel %vm1465, nan, %v1475
        %v1477 = vmul.f32 %v1251, %v1476
        %v1478 = vadd.f32 %v1372, %v1477
        %v1480 = vlaneseq
        %v1481 = vshrl.u32 %v1480, 7
        %v1482 = vsub.s32 0, %v1481
        %v1483 = vrot.slane %v1256, %v1482
        %v1486 = vsel %vm917, %v1478, 0
        %1488 = vmatprep.subr.mxu0 0.0
        %1489 = vmatpush1.msra.mxu0 %v1252
        %1490 = vmatprep.subr.mxu0 0.0
        %1491 = vmatpush1.msra.mxu0 %v1253
        %1492 = vmatprep.subr.mxu0 0.0
        %1493 = vmatpush1.msra.mxu0 %v1254
        %1494 = vmatprep.subr.mxu0 0.0
        %1495 = vmatpush1.msra.mxu0 %v1255
        %1496 = vmatprep.subr.mxu0 0.0
        %1497 = vmatpush1.msra.mxu0 0.0
        %1498 = vmatprep.subr.mxu0 0.0
        %1499 = vmatpush1.msra.mxu0 0.0
        %1500 = vmatprep.subr.mxu0 0.0
        %1501 = vmatpush1.msra.mxu0 0.0
        %1502 = vmatprep.subr.mxu0 0.0
        %1503 = vmatpush1.msra.mxu0 0.0
        %1504 = vmatprep.subr.mxu0 0.0
        %1505 = vmatpush1.msra.mxu0 0.0
        %1506 = vmatprep.subr.mxu0 0.0
        %1507 = vmatpush1.msra.mxu0 0.0
        %1508 = vmatprep.subr.mxu0 0.0
        %1509 = vmatpush1.msra.mxu0 0.0
        %1510 = vmatprep.subr.mxu0 0.0
        %1511 = vmatpush1.msra.mxu0 0.0
        %1512 = vmatprep.subr.mxu0 0.0
        %1513 = vmatpush1.msra.mxu0 0.0
        %1514 = vmatprep.subr.mxu0 0.0
        %1515 = vmatpush1.msra.mxu0 0.0
        %1516 = vmatprep.subr.mxu0 0.0
        %1517 = vmatpush1.msra.mxu0 0.0
        %1518 = vmatprep.subr.mxu0 0.0
        %1519 = vmatpush1.msra.mxu0 0.0
        %1520 = vmatprep.subr.mxu0 0.0
        %1521 = vmatpush1.msra.mxu0 0.0
        %1522 = vmatprep.subr.mxu0 0.0
        %1523 = vmatpush1.msra.mxu0 0.0
        %1524 = vmatprep.subr.mxu0 0.0
        %1525 = vmatpush1.msra.mxu0 0.0
        %1526 = vmatprep.subr.mxu0 0.0
        %1527 = vmatpush1.msra.mxu0 0.0
        %1528 = vmatprep.subr.mxu0 0.0
        %1529 = vmatpush1.msra.mxu0 0.0
        %1530 = vmatprep.subr.mxu0 0.0
        %1531 = vmatpush1.msra.mxu0 0.0
        %1532 = vmatprep.subr.mxu0 0.0
        %1533 = vmatpush1.msra.mxu0 0.0
        %1534 = vmatprep.subr.mxu0 0.0
        %1535 = vmatpush1.msra.mxu0 0.0
        %1536 = vmatprep.subr.mxu0 0.0
        %1537 = vmatpush1.msra.mxu0 0.0
        %1538 = vmatprep.subr.mxu0 0.0
        %1539 = vmatpush1.msra.mxu0 0.0
        %1540 = vmatprep.subr.mxu0 0.0
        %1541 = vmatpush1.msra.mxu0 0.0
        %1542 = vmatprep.subr.mxu0 0.0
        %1543 = vmatpush1.msra.mxu0 0.0
        %1544 = vmatprep.subr.mxu0 0.0
        %1545 = vmatpush1.msra.mxu0 0.0
        %1546 = vmatprep.subr.mxu0 0.0
        %1547 = vmatpush1.msra.mxu0 0.0
        %1548 = vmatprep.subr.mxu0 0.0
        %1549 = vmatpush1.msra.mxu0 0.0
        %1550 = vmatprep.subr.mxu0 0.0
        %1551 = vmatpush1.msra.mxu0 0.0
        %1552 = vmatprep.mubr.f32.mxu0 0.0
        %1553 = vmatmul.mubr.f32.gmra.mrb[0].mxu0 %v1486
        %v1554 = vpop.f32.mrb[0].mxu0
        %v1555 = vadd.f32 %v1483, %v1554
        %v1556 = vpop.f32.mrb[0].mxu0
        %1557 = vdwg.mxu0
        %v1558 = vsel %vm917, %v1555, 0.0
        %1559 = vadd.xlane.f32.xlu0 %v1558
        %v1560 = vpop.xlane.xlu0 %1559
        %v1561 = vmul.f32 %v1555, %v1555
        %v1562 = vsel %vm917, %v1561, 0.0
        %1563 = vadd.xlane.f32.xlu0 %v1562
        %v1564 = vpop.xlane.xlu0 %1563
        %v1565 = vmul.f32 %v1560, 0.03125
        %v1566 = vmul.f32 %v1564, 0.03125
        %v1567 = vmul.f32 %v1565, %v1565
        %v1568 = vsub.f32 %v1566, %v1567
        %v1569 = vadd.f32 %v1568, 1e-05
        %v1570 = vrsqrt.pop %v1569
        %v1572 = vlaneseq
        %v1573 = vshrl.u32 %v1572, 7
        %v1574 = vsub.s32 0, %v1573
        %v1575 = vrot.slane %v1257, %v1574
        %v1577 = vmul.f32 %v1575, %v1570
        %v1578 = vmul.f32 %v1565, %v1577
        %v1580 = vlaneseq
        %v1581 = vshrl.u32 %v1580, 7
        %v1582 = vsub.s32 0, %v1581
        %v1583 = vrot.slane %v1258, %v1582
        %v1585 = vsub.f32 %v1583, %v1578
        %v1586 = vmul.f32 %v1555, %v1577
        %v1587 = vadd.f32 %v1586, %v1585
        %v1588 = vmax.f32 %v1587, 0.0
        %v1589 = vsel %vm917, %v1588, 0.0
        %1590 = vadd.xlane.f32.xlu0 %v1589
        %v1591 = vpop.xlane.xlu0 %1590
        %v1592 = vrcp.pop 32.0
        %v1593 = vmul.f32 %v1591, %v1592
        %v1595 = vlaneseq
        %v1596 = vand.u32 %v1595, 127
        %v1597 = vlaneseq
        %v1598 = vshrl.u32 %v1597, 7
        %v1599 = vsub.s32 %v1596, %v1598
        %v1600 = vrot.slane %v1593, %v1599
        %vm1601 = vcmask 64512
        %v1602 = vsel %vm1601, %v1600, 0
        %1604 = vmatprep.subr.mxu0 0.0
        %1605 = vmatpush1.msra.mxu0 %v1259
        %1606 = vmatprep.subr.mxu0 0.0
        %1607 = vmatpush1.msra.mxu0 0.0
        %1608 = vmatprep.subr.mxu0 0.0
        %1609 = vmatpush1.msra.mxu0 0.0
        %1610 = vmatprep.subr.mxu0 0.0
        %1611 = vmatpush1.msra.mxu0 0.0
        %1612 = vmatprep.subr.mxu0 0.0
        %1613 = vmatpush1.msra.mxu0 0.0
        %1614 = vmatprep.subr.mxu0 0.0
        %1615 = vmatpush1.msra.mxu0 0.0
        %1616 = vmatprep.subr.mxu0 0.0
        %1617 = vmatpush1.msra.mxu0 0.0
        %1618 = vmatprep.subr.mxu0 0.0
        %1619 = vmatpush1.msra.mxu0 0.0
        %1620 = vmatprep.subr.mxu0 0.0
        %1621 = vmatpush1.msra.mxu0 0.0
        %1622 = vmatprep.subr.mxu0 0.0
        %1623 = vmatpush1.msra.mxu0 0.0
        %1624 = vmatprep.subr.mxu0 0.0
        %1625 = vmatpush1.msra.mxu0 0.0
        %1626 = vmatprep.subr.mxu0 0.0
        %1627 = vmatpush1.msra.mxu0 0.0
        %1628 = vmatprep.subr.mxu0 0.0
        %1629 = vmatpush1.msra.mxu0 0.0
        %1630 = vmatprep.subr.mxu0 0.0
        %1631 = vmatpush1.msra.mxu0 0.0
        %1632 = vmatprep.subr.mxu0 0.0
        %1633 = vmatpush1.msra.mxu0 0.0
        %1634 = vmatprep.subr.mxu0 0.0
        %1635 = vmatpush1.msra.mxu0 0.0
        %1636 = vmatprep.subr.mxu0 0.0
        %1637 = vmatpush1.msra.mxu0 0.0
        %1638 = vmatprep.subr.mxu0 0.0
        %1639 = vmatpush1.msra.mxu0 0.0
        %1640 = vmatprep.subr.mxu0 0.0
        %1641 = vmatpush1.msra.mxu0 0.0
        %1642 = vmatprep.subr.mxu0 0.0
        %1643 = vmatpush1.msra.mxu0 0.0
        %1644 = vmatprep.subr.mxu0 0.0
        %1645 = vmatpush1.msra.mxu0 0.0
        %1646 = vmatprep.subr.mxu0 0.0
        %1647 = vmatpush1.msra.mxu0 0.0
        %1648 = vmatprep.subr.mxu0 0.0
        %1649 = vmatpush1.msra.mxu0 0.0
        %1650 = vmatprep.subr.mxu0 0.0
        %1651 = vmatpush1.msra.mxu0 0.0
        %1652 = vmatprep.subr.mxu0 0.0
        %1653 = vmatpush1.msra.mxu0 0.0
        %1654 = vmatprep.subr.mxu0 0.0
        %1655 = vmatpush1.msra.mxu0 0.0
        %1656 = vmatprep.subr.mxu0 0.0
        %1657 = vmatpush1.msra.mxu0 0.0
        %1658 = vmatprep.subr.mxu0 0.0
        %1659 = vmatpush1.msra.mxu0 0.0
        %1660 = vmatprep.subr.mxu0 0.0
        %1661 = vmatpush1.msra.mxu0 0.0
        %1662 = vmatprep.subr.mxu0 0.0
        %1663 = vmatpush1.msra.mxu0 0.0
        %1664 = vmatprep.subr.mxu0 0.0
        %1665 = vmatpush1.msra.mxu0 0.0
        %1666 = vmatprep.subr.mxu0 0.0
        %1667 = vmatpush1.msra.mxu0 0.0
        %1668 = vmatprep.mubr.f32.mxu0 0.0
        %1669 = vmatmul.mubr.f32.gmra.mrb[0].mxu0 %v1602
        %v1670 = vpop.f32.mrb[0].mxu0
        %v1671 = vadd.f32 %v1260, %v1670
        %v1672 = vpop.f32.mrb[0].mxu0
        %1673 = vdwg.mxu0
        %v1674 = vmax.f32 %v1671, 0.0
        %vm1675 = vcmask 130048
        %v1677 = vsel %vm1675, %v1674, 0
        %1679 = vmatprep.subr.mxu0 0.0
        %1680 = vmatpush1.msra.mxu0 %v1261
        %1681 = vmatprep.subr.mxu0 0.0
        %1682 = vmatpush1.msra.mxu0 %v1262
        %1683 = vmatprep.subr.mxu0 0.0
        %1684 = vmatpush1.msra.mxu0 0.0
        %1685 = vmatprep.subr.mxu0 0.0
        %1686 = vmatpush1.msra.mxu0 0.0
        %1687 = vmatprep.subr.mxu0 0.0
        %1688 = vmatpush1.msra.mxu0 0.0
        %1689 = vmatprep.subr.mxu0 0.0
        %1690 = vmatpush1.msra.mxu0 0.0
        %1691 = vmatprep.subr.mxu0 0.0
        %1692 = vmatpush1.msra.mxu0 0.0
        %1693 = vmatprep.subr.mxu0 0.0
        %1694 = vmatpush1.msra.mxu0 0.0
        %1695 = vmatprep.subr.mxu0 0.0
        %1696 = vmatpush1.msra.mxu0 0.0
        %1697 = vmatprep.subr.mxu0 0.0
        %1698 = vmatpush1.msra.mxu0 0.0
        %1699 = vmatprep.subr.mxu0 0.0
        %1700 = vmatpush1.msra.mxu0 0.0
        %1701 = vmatprep.subr.mxu0 0.0
        %1702 = vmatpush1.msra.mxu0 0.0
        %1703 = vmatprep.subr.mxu0 0.0
        %1704 = vmatpush1.msra.mxu0 0.0
        %1705 = vmatprep.subr.mxu0 0.0
        %1706 = vmatpush1.msra.mxu0 0.0
        %1707 = vmatprep.subr.mxu0 0.0
        %1708 = vmatpush1.msra.mxu0 0.0
        %1709 = vmatprep.subr.mxu0 0.0
        %1710 = vmatpush1.msra.mxu0 0.0
        %1711 = vmatprep.subr.mxu0 0.0
        %1712 = vmatpush1.msra.mxu0 0.0
        %1713 = vmatprep.subr.mxu0 0.0
        %1714 = vmatpush1.msra.mxu0 0.0
        %1715 = vmatprep.subr.mxu0 0.0
        %1716 = vmatpush1.msra.mxu0 0.0
        %1717 = vmatprep.subr.mxu0 0.0
        %1718 = vmatpush1.msra.mxu0 0.0
        %1719 = vmatprep.subr.mxu0 0.0
        %1720 = vmatpush1.msra.mxu0 0.0
        %1721 = vmatprep.subr.mxu0 0.0
        %1722 = vmatpush1.msra.mxu0 0.0
        %1723 = vmatprep.subr.mxu0 0.0
        %1724 = vmatpush1.msra.mxu0 0.0
        %1725 = vmatprep.subr.mxu0 0.0
        %1726 = vmatpush1.msra.mxu0 0.0
        %1727 = vmatprep.subr.mxu0 0.0
        %1728 = vmatpush1.msra.mxu0 0.0
        %1729 = vmatprep.subr.mxu0 0.0
        %1730 = vmatpush1.msra.mxu0 0.0
        %1731 = vmatprep.subr.mxu0 0.0
        %1732 = vmatpush1.msra.mxu0 0.0
        %1733 = vmatprep.subr.mxu0 0.0
        %1734 = vmatpush1.msra.mxu0 0.0
        %1735 = vmatprep.subr.mxu0 0.0
        %1736 = vmatpush1.msra.mxu0 0.0
        %1737 = vmatprep.subr.mxu0 0.0
        %1738 = vmatpush1.msra.mxu0 0.0
        %1739 = vmatprep.subr.mxu0 0.0
        %1740 = vmatpush1.msra.mxu0 0.0
        %1741 = vmatprep.subr.mxu0 0.0
        %1742 = vmatpush1.msra.mxu0 0.0
        %1743 = vmatprep.mubr.f32.mxu0 0.0
        %1744 = vmatmul.mubr.f32.gmra.mrb[0].mxu0 %v1677
        %v1745 = vpop.f32.mrb[0].mxu0
        %v1746 = vadd.f32 %v1263, %v1745
        %v1747 = vpop.f32.mrb[0].mxu0
        %1748 = vdwg.mxu0
        %vm1749 = vcmask 57344
        %v1750 = vsel %vm1749, %v1746, -inf
        %1751 = vmax.xlane.f32.xlu0 %v1750
        %v1752 = vpop.xlane.xlu0 %1751
        %v1753 = vsub.f32 %v1746, %v1752
        %v1754 = vmul.f32 %v1753, 1.442695
        %v1755 = vpow.pop %v1754
        %v1756 = vsel %vm1749, %v1755, 0.0
        %1757 = vadd.xlane.f32.xlu0 %v1756
        %v1758 = vpop.xlane.xlu0 %1757
        %v1759 = vrcp.pop %v1758
        %v1760 = vmul.f32 %v1755, %v1759
        %v1761 = vlaneseq
        %v1762 = vshrl.u32 %v1761, 7
        %v1763 = vsub.s32 0, %v1762
        %v1764 = vrot.slane %v1760, %v1763
        %1766 = vbcast.lane.b32.xlu0 %v1764, 256
        %v1767 = vpop.permute.xlu0 %1766
        %v1768 = vmul.f32 %v1588, %v1767
        %v1770 = vlaneseq
        %v1771 = vshrl.u32 %v1770, 7
        %v1772 = vsub.s32 0, %v1771
        %v1773 = vrot.slane %v1268, %v1772
        %v1776 = vsel %vm917, %v1768, 0
        %1778 = vmatprep.subr.mxu0 0.0
        %1779 = vmatpush1.msra.mxu0 %v1264
        %1780 = vmatprep.subr.mxu0 0.0
        %1781 = vmatpush1.msra.mxu0 %v1265
        %1782 = vmatprep.subr.mxu0 0.0
        %1783 = vmatpush1.msra.mxu0 %v1266
        %1784 = vmatprep.subr.mxu0 0.0
        %1785 = vmatpush1.msra.mxu0 %v1267
        %1786 = vmatprep.subr.mxu0 0.0
        %1787 = vmatpush1.msra.mxu0 0.0
        %1788 = vmatprep.subr.mxu0 0.0
        %1789 = vmatpush1.msra.mxu0 0.0
        %1790 = vmatprep.subr.mxu0 0.0
        %1791 = vmatpush1.msra.mxu0 0.0
        %1792 = vmatprep.subr.mxu0 0.0
        %1793 = vmatpush1.msra.mxu0 0.0
        %1794 = vmatprep.subr.mxu0 0.0
        %1795 = vmatpush1.msra.mxu0 0.0
        %1796 = vmatprep.subr.mxu0 0.0
        %1797 = vmatpush1.msra.mxu0 0.0
        %1798 = vmatprep.subr.mxu0 0.0
        %1799 = vmatpush1.msra.mxu0 0.0
        %1800 = vmatprep.subr.mxu0 0.0
        %1801 = vmatpush1.msra.mxu0 0.0
        %1802 = vmatprep.subr.mxu0 0.0
        %1803 = vmatpush1.msra.mxu0 0.0
        %1804 = vmatprep.subr.mxu0 0.0
        %1805 = vmatpush1.msra.mxu0 0.0
        %1806 = vmatprep.subr.mxu0 0.0
        %1807 = vmatpush1.msra.mxu0 0.0
        %1808 = vmatprep.subr.mxu0 0.0
        %1809 = vmatpush1.msra.mxu0 0.0
        %1810 = vmatprep.subr.mxu0 0.0
        %1811 = vmatpush1.msra.mxu0 0.0
        %1812 = vmatprep.subr.mxu0 0.0
        %1813 = vmatpush1.msra.mxu0 0.0
        %1814 = vmatprep.subr.mxu0 0.0
        %1815 = vmatpush1.msra.mxu0 0.0
        %1816 = vmatprep.subr.mxu0 0.0
        %1817 = vmatpush1.msra.mxu0 0.0
        %1818 = vmatprep.subr.mxu0 0.0
        %1819 = vmatpush1.msra.mxu0 0.0
        %1820 = vmatprep.subr.mxu0 0.0
        %1821 = vmatpush1.msra.mxu0 0.0
        %1822 = vmatprep.subr.mxu0 0.0
        %1823 = vmatpush1.msra.mxu0 0.0
        %1824 = vmatprep.subr.mxu0 0.0
        %1825 = vmatpush1.msra.mxu0 0.0
        %1826 = vmatprep.subr.mxu0 0.0
        %1827 = vmatpush1.msra.mxu0 0.0
        %1828 = vmatprep.subr.mxu0 0.0
        %1829 = vmatpush1.msra.mxu0 0.0
        %1830 = vmatprep.subr.mxu0 0.0
        %1831 = vmatpush1.msra.mxu0 0.0
        %1832 = vmatprep.subr.mxu0 0.0
        %1833 = vmatpush1.msra.mxu0 0.0
        %1834 = vmatprep.subr.mxu0 0.0
        %1835 = vmatpush1.msra.mxu0 0.0
        %1836 = vmatprep.subr.mxu0 0.0
        %1837 = vmatpush1.msra.mxu0 0.0
        %1838 = vmatprep.subr.mxu0 0.0
        %1839 = vmatpush1.msra.mxu0 0.0
        %1840 = vmatprep.subr.mxu0 0.0
        %1841 = vmatpush1.msra.mxu0 0.0
        %1842 = vmatprep.mubr.f32.mxu0 0.0
        %1843 = vmatmul.mubr.f32.gmra.mrb[0].mxu0 %v1776
        %v1844 = vpop.f32.mrb[0].mxu0
        %v1845 = vadd.f32 %v1773, %v1844
        %v1846 = vpop.f32.mrb[0].mxu0
        %1847 = vdwg.mxu0
        %1848 = vst.msk [vmem:[%s904] sm:$0xff] %vm917, %v1845
        %s1849 = sand.u32 %s543, 1
        %s1850 = scalar_lea.sflag [#allocation4], %s1849
        %s1851 = sand.u32 %s543, 1
        %s1852 = smul.addr %s1851, 8
        %s1853 = scalar_lea.vmem [#allocation26], %s1852
        // Predicated region
        $region173: #{tpu_custom_call.1} parent=111 // pred_check
          %p1854 = pneg %p553
        $region174: #{tpu_custom_call.1} parent=111 // pred_check_branch
          %1856 = sbr.rel (%p1854) target = $region176
        $region175: #{tpu_custom_call.1} parent=111 // pred_region
          %s1858 = ssub.s32 128, 128
          %1859 = vsyncadd %s1850, %s1858
          %s1860 = smul.addr %s47, 128
          %s1861 = scalar_lea.hbm %s23, %s1860
          %s1863 = sshll.u32 %s1853, 4
          %s1864 = int_to_ptr.vmem [resolvable:$true] %s1863
          %1866 = dma.vmem_to_hbm [thread:$0]  %s1864, 128, %s1861, %s1850
        $region176: #{tpu_custom_call.1} parent=111 // pred_fallthru
          _
      $region112: #{tpu_custom_call.1} parent=5 // pred_fallthru
        _
      %p1867 = scmp.le.s32.totalorder 2, %s42
      // Predicated region
      $region177: #{tpu_custom_call.1} parent=5 // pred_check
        %p1868 = pneg %p1867
      $region178: #{tpu_custom_call.1} parent=5 // pred_check_branch
        %1870 = sbr.rel (%p1868) target = $region180
      $region179: #{tpu_custom_call.1} parent=5 // pred_region
        %s1871 = ssub.s32 %s42, 2
        // Predicated region
        $region181: #{tpu_custom_call.1} parent=179 // pred_check
          %p1872 = pneg %p559
        $region182: #{tpu_custom_call.1} parent=179 // pred_check_branch
          %1874 = sbr.rel (%p1872) target = $region184
        $region183: #{tpu_custom_call.1} parent=179 // pred_region
          %s1875 = sand.u32 %s544, 1
          %s1876 = scalar_lea.sflag [#allocation4], %s1875
          %s1877 = sand.u32 %s544, 1
          %s1878 = smul.addr %s1877, 8
          %s1879 = scalar_lea.vmem [#allocation26], %s1878
          %1880 = dma.done %s1876, 128
        $region184: #{tpu_custom_call.1} parent=179 // pred_fallthru
          _
      $region180: #{tpu_custom_call.1} parent=5 // pred_fallthru
        _
    $region6: #{tpu_custom_call.1} parent=1 // loop_footer
      %s46 = sadd.s32 1, %s42
    $region7: #{tpu_custom_call.1} parent=1 // loop_footer_branch
      %41 = sbr.rel target = $region3
    $region8: #{tpu_custom_call.1} parent=1 // loop_exit
      _
    %1881 = vsyncpa [#allocation3], 1
    %s1882 = scalar_lea.sflag [#allocation3], 1
    %1883 = vsyncpa %s1882, 1
    %1884 = vsyncpa [#allocation6], 1
    %1885 = vsyncpa [#allocation9], 1
    %1886 = vsyncpa [#allocation12], 1
    %1887 = vsyncpa [#allocation15], 1
    %1888 = vsyncpa [#allocation18], 1
    %1889 = vsyncpa [#allocation21], 1
    %1890 = vsyncpa [#allocation24], 1
    %1891 = vsyncpa [#allocation4], 1
    %s1892 = scalar_lea.sflag [#allocation4], 1
    %1893 = vsyncpa %s1892, 1

// kernel: tpu_custom_call.1
$region0: #{tpu_custom_call.1}
  #allocation0 [shape = 'u32[]', space=smem, size = 0x4, offset = 0x4, fixed_abs, tag = 'smem constant byte address 0x4 - core index']
  #allocation1 [shape = 'u32[144,128]{1,0:T(1,128)}', space=vmem, size = 0x12000, scoped, tag = 'internal scratch']
  %s0 = inlined_call_operand.hbm [shape: f32[2,8,32], index: 0, kind: input, shape index: {}]
  %s1 = inlined_call_operand.hbm [shape: f32[32,32], index: 1, kind: input, shape index: {}]
  %s2 = inlined_call_operand.vmem [shape: f32[1,32], index: 2, kind: input, shape index: {}]
  %s3 = inlined_call_operand.hbm [shape: f32[1,32], index: 3, kind: input, shape index: {}]
  %s4 = inlined_call_operand.hbm [shape: f32[1,32], index: 4, kind: input, shape index: {}]
  %s5 = inlined_call_operand.vmem [shape: f32[32,32], index: 5, kind: input, shape index: {}]
  %s6 = inlined_call_operand.hbm [shape: f32[1,32], index: 6, kind: input, shape index: {}]
  %s7 = inlined_call_operand.hbm [shape: f32[1,32], index: 7, kind: input, shape index: {}]
  %s8 = inlined_call_operand.hbm [shape: f32[1,32], index: 8, kind: input, shape index: {}]
  %s9 = inlined_call_operand.hbm [shape: f32[32,32], index: 9, kind: input, shape index: {}]
  %s10 = inlined_call_operand.hbm [shape: f32[1,32], index: 10, kind: input, shape index: {}]
  %s11 = inlined_call_operand.hbm [shape: f32[1,32], index: 11, kind: input, shape index: {}]
  %s12 = inlined_call_operand.vmem [shape: f32[1,32], index: 12, kind: input, shape index: {}]
  %s13 = inlined_call_operand.vmem [shape: f32[32,32], index: 13, kind: input, shape index: {}]
  %s14 = inlined_call_operand.vmem [shape: f32[1,32], index: 14, kind: input, shape index: {}]
  %s15 = inlined_call_operand.hbm [shape: f32[1,32], index: 15, kind: input, shape index: {}]
  %s16 = inlined_call_operand.hbm [shape: f32[1,32], index: 16, kind: input, shape index: {}]
  %s17 = inlined_call_operand.hbm [shape: f32[8,16], index: 17, kind: input, shape index: {}]
  %s18 = inlined_call_operand.hbm [shape: f32[1,16], index: 18, kind: input, shape index: {}]
  %s19 = inlined_call_operand.vmem [shape: f32[16,8], index: 19, kind: input, shape index: {}]
  %s20 = inlined_call_operand.hbm [shape: f32[1,8], index: 20, kind: input, shape index: {}]
  %s21 = inlined_call_operand.vmem [shape: f32[32,32], index: 21, kind: input, shape index: {}]
  %s22 = inlined_call_operand.vmem [shape: f32[1,32], index: 22, kind: input, shape index: {}]
  %s23 = inlined_call_operand.hbm [shape: f32[2,8,32], index: 23, kind: output, shape index: {}]
  %s24 = sld [smem:[#allocation0]]
  $region185: #{tpu_custom_call.1} parent=0
    _
  %s26 = ssub.s32 1, %s24
  %s27 = scalar_select 0, %s26, %s24
  $region1: #{tpu_custom_call.1} parent=0
    #allocation2 [shape = 'u8[8192]{0}', space=vmem, size = 0x2000, scoped, tag = 'input window, operand 0']
    #allocation3 [shape = 's32[2]{0}', space=sflag, size = 0x8, scoped, tag = 'scoped memory for tpu_custom_call.1']
    #allocation4 [shape = 's32[2]{0}', space=sflag, size = 0x8, scoped, tag = 'scoped memory for tpu_custom_call.1']
    #allocation5 [shape = 'u8[16384]{0}', space=vmem, size = 0x4000, scoped, tag = 'input window, operand 1, single buffered']
    #allocation6 [shape = 's32[1]{0}', space=sflag, size = 0x4, scoped, tag = 'scoped memory for tpu_custom_call.1']
    #allocation7 [shape = 'u8[512]{0}', space=vmem, size = 0x400, scoped, tag = 'input window, operand 3, single buffered']
    #allocation8 [shape = 'u8[512]{0}', space=vmem, size = 0x400, scoped, tag = 'input window, operand 4, single buffered']
    #allocation9 [shape = 's32[1]{0}', space=sflag, size = 0x4, scoped, tag = 'scoped memory for tpu_custom_call.1']
    #allocation10 [shape = 'u8[512]{0}', space=vmem, size = 0x400, scoped, tag = 'input window, operand 6, single buffered']
    #allocation11 [shape = 'u8[512]{0}', space=vmem, size = 0x400, scoped, tag = 'input window, operand 7, single buffered']
    #allocation12 [shape = 's32[1]{0}', space=sflag, size = 0x4, scoped, tag = 'scoped memory for tpu_custom_call.1']
    #allocation13 [shape = 'u8[512]{0}', space=vmem, size = 0x400, scoped, tag = 'input window, operand 8, single buffered']
    #allocation14 [shape = 'u8[16384]{0}', space=vmem, size = 0x4000, scoped, tag = 'input window, operand 9, single buffered']
    #allocation15 [shape = 's32[1]{0}', space=sflag, size = 0x4, scoped, tag = 'scoped memory for tpu_custom_call.1']
    #allocation16 [shape = 'u8[512]{0}', space=vmem, size = 0x400, scoped, tag = 'input window, operand 10, single buffered']
    #allocation17 [shape = 'u8[512]{0}', space=vmem, size = 0x400, scoped, tag = 'input window, operand 11, single buffered']
    #allocation18 [shape = 's32[1]{0}', space=sflag, size = 0x4, scoped, tag = 'scoped memory for tpu_custom_call.1']
    #allocation19 [shape = 'u8[512]{0}', space=vmem, size = 0x400, scoped, tag = 'input window, operand 15, single buffered']
    #allocation20 [shape = 'u8[512]{0}', space=vmem, size = 0x400, scoped, tag = 'input window, operand 16, single buffered']
    #allocation21 [shape = 's32[1]{0}', space=sflag, size = 0x4, scoped, tag = 'scoped memory for tpu_custom_call.1']
    #allocation22 [shape = 'u8[4096]{0}', space=vmem, size = 0x1000, scoped, tag = 'input window, operand 17, single buffered']
    #allocation23 [shape = 'u8[512]{0}', space=vmem, size = 0x400, scoped, tag = 'input window, operand 18, single buffered']
    #allocation24 [shape = 's32[1]{0}', space=sflag, size = 0x4, scoped, tag = 'scoped memory for tpu_custom_call.1']
    #allocation25 [shape = 'u8[512]{0}', space=vmem, size = 0x400, scoped, tag = 'input window, operand 20, single buffered']
    #allocation26 [shape = 'u8[8192]{0}', space=vmem, size = 0x2000, scoped, tag = 'output window, operand 0']
    %28 = vsyncpa [#allocation3], 0
    %s29 = scalar_lea.sflag [#allocation3], 1
    %30 = vsyncpa %s29, 0
    %31 = vsyncpa [#allocation6], 0
    %32 = vsyncpa [#allocation9], 0
    %33 = vsyncpa [#allocation12], 0
    %34 = vsyncpa [#allocation15], 0
    %35 = vsyncpa [#allocation18], 0
    %36 = vsyncpa [#allocation21], 0
    %37 = vsyncpa [#allocation24], 0
    %38 = vsyncpa [#allocation4], 0
    %s39 = scalar_lea.sflag [#allocation4], 1
    %40 = vsyncpa %s39, 0
    loop: start=0, step=1, limit=4
    $region2: #{tpu_custom_call.1} parent=1 // loop_pre_header
      _
    $region3: #{tpu_custom_call.1} parent=1 // loop_header
      %s42 = sphi 0, %s46
      %p43 = scmp.ge.s32.totalorder %s42, 4
      %s52 = sphi 0, %s54
      %s55 = sphi 0, %s52
      %s56 = sphi 0, %s55
      %s72 = sphi 0, %s56
      %s76 = sphi 0, %s76
      %s78 = sphi 0, %s76
      %s79 = sphi 0, %s78
      %s93 = sphi 0, %s79
      %s97 = sphi 0, %s97
      %s99 = sphi 0, %s97
      %s100 = sphi 0, %s99
      %s114 = sphi 0, %s100
      %s118 = sphi 0, %s118
      %s120 = sphi 0, %s118
      %s121 = sphi 0, %s120
      %s135 = sphi 0, %s121
      %s139 = sphi 0, %s139
      %s141 = sphi 0, %s139
      %s142 = sphi 0, %s141
      %s156 = sphi 0, %s142
      %s160 = sphi 0, %s160
      %s162 = sphi 0, %s160
      %s163 = sphi 0, %s162
      %s177 = sphi 0, %s163
      %s181 = sphi 0, %s181
      %s183 = sphi 0, %s181
      %s184 = sphi 0, %s183
      %s198 = sphi 0, %s184
      %s202 = sphi 0, %s202
      %s204 = sphi 0, %s202
      %s205 = sphi 0, %s204
      %s219 = sphi 0, %s205
      %s223 = sphi 0, %s223
      %s225 = sphi 0, %s223
      %s226 = sphi 0, %s225
      %s240 = sphi 0, %s226
      %s244 = sphi 0, %s244
      %s246 = sphi 0, %s244
      %s247 = sphi 0, %s246
      %s261 = sphi 0, %s247
      %s265 = sphi 0, %s265
      %s267 = sphi 0, %s265
      %s268 = sphi 0, %s267
      %s282 = sphi 0, %s268
      %s286 = sphi 0, %s286
      %s288 = sphi 0, %s286
      %s289 = sphi 0, %s288
      %s303 = sphi 0, %s289
      %s307 = sphi 0, %s307
      %s309 = sphi 0, %s307
      %s310 = sphi 0, %s309
      %s324 = sphi 0, %s310
      %s328 = sphi 0, %s328
      %s330 = sphi 0, %s328
      %s331 = sphi 0, %s330
      %s345 = sphi 0, %s331
      %s349 = sphi 0, %s349
      %s351 = sphi 0, %s349
      %s352 = sphi 0, %s351
      %s366 = sphi 0, %s352
      %s370 = sphi 0, %s370
      %s372 = sphi 0, %s370
      %s373 = sphi 0, %s372
      %s387 = sphi 0, %s373
      %s391 = sphi 0, %s391
      %s393 = sphi 0, %s391
      %s394 = sphi 0, %s393
      %s408 = sphi 0, %s394
      %s412 = sphi 0, %s412
      %s414 = sphi 0, %s412
      %s415 = sphi 0, %s414
      %s429 = sphi 0, %s415
      %s433 = sphi 0, %s433
      %s435 = sphi 0, %s433
      %s436 = sphi 0, %s435
      %s450 = sphi 0, %s436
      %s454 = sphi 0, %s454
      %s456 = sphi 0, %s454
      %s457 = sphi 0, %s456
      %s471 = sphi 0, %s457
      %s475 = sphi 0, %s475
      %s477 = sphi 0, %s475
      %s478 = sphi 0, %s477
      %s492 = sphi 0, %s478
      %s496 = sphi 0, %s496
      %s498 = sphi 0, %s496
      %s499 = sphi 0, %s498
      %s513 = sphi 0, %s499
      %s517 = sphi 0, %s517
      %s519 = sphi 0, %s517
      %s520 = sphi 0, %s519
      %s534 = sphi 0, %s520
      %s540 = sphi 0, %s542
      %s543 = sphi 0, %s540
      %s544 = sphi 0, %s543
      %s560 = sphi 0, %s544
    $region4: #{tpu_custom_call.1} parent=1 // loop_header_branch
      %45 = sbr.rel (%p43) target = $region8
    $region5: #{tpu_custom_call.1} parent=1 // loop_body
      %s47 = ssub.s32 %s42, 1
      %s48 = ssub.s32 %s42, 2
      %s49 = sadd.s32 %s42, 1
      %s50 = ssub.s32 %s42, %s49
      %p51 = scmp.eq.s32.totalorder %s50, 0
      %s53 = sadd.s32 %s52, 1
      %s54 = scalar_select %p51, %s52, %s53
      %p57 = pneg %p51
      %p58 = scmp.eq.s32.totalorder %s42, 1
      %p59 = por %p57, %p58
      %p60 = scmp.ne.s32.totalorder %s52, %s55
      %p61 = scmp.eq.s32.totalorder %s42, 0
      %p62 = por %p60, %p61
      %p63 = scmp.ne.s32.totalorder %s52, %s55
      %p64 = scmp.eq.s32.totalorder %s47, 1
      %p65 = por %p63, %p64
      %p66 = scmp.ne.s32.totalorder %s55, %s56
      %p67 = scmp.eq.s32.totalorder %s47, 0
      %p68 = por %p66, %p67
      %p69 = scmp.ne.s32.totalorder %s55, %s56
      %p70 = scmp.eq.s32.totalorder %s48, 1
      %p71 = por %p69, %p70
      %p73 = scmp.ne.s32.totalorder %s56, %s72
      %p74 = scmp.eq.s32.totalorder %s48, 0
      %p75 = por %p73, %p74
      %s77 = sadd.s32 %s76, 1
      %p80 = scmp.eq.s32.totalorder %s42, 1
      %p81 = scmp.ne.s32.totalorder %s76, %s78
      %p82 = scmp.eq.s32.totalorder %s42, 0
      %p83 = por %p81, %p82
      %p84 = scmp.ne.s32.totalorder %s76, %s78
      %p85 = scmp.eq.s32.totalorder %s47, 1
      %p86 = por %p84, %p85
      %p87 = scmp.ne.s32.totalorder %s78, %s79
      %p88 = scmp.eq.s32.totalorder %s47, 0
      %p89 = por %p87, %p88
      %p90 = scmp.ne.s32.totalorder %s78, %s79
      %p91 = scmp.eq.s32.totalorder %s48, 1
      %p92 = por %p90, %p91
      %p94 = scmp.ne.s32.totalorder %s79, %s93
      %p95 = scmp.eq.s32.totalorder %s48, 0
      %p96 = por %p94, %p95
      %s98 = sadd.s32 %s97, 1
      %p101 = scmp.eq.s32.totalorder %s42, 1
      %p102 = scmp.ne.s32.totalorder %s97, %s99
      %p103 = scmp.eq.s32.totalorder %s42, 0
      %p104 = por %p102, %p103
      %p105 = scmp.ne.s32.totalorder %s97, %s99
      %p106 = scmp.eq.s32.totalorder %s47, 1
      %p107 = por %p105, %p106
      %p108 = scmp.ne.s32.totalorder %s99, %s100
      %p109 = scmp.eq.s32.totalorder %s47, 0
      %p110 = por %p108, %p109
      %p111 = scmp.ne.s32.totalorder %s99, %s100
      %p112 = scmp.eq.s32.totalorder %s48, 1
      %p113 = por %p111, %p112
      %p115 = scmp.ne.s32.totalorder %s100, %s114
      %p116 = scmp.eq.s32.totalorder %s48, 0
      %p117 = por %p115, %p116
      %s119 = sadd.s32 %s118, 1
      %p122 = scmp.eq.s32.totalorder %s42, 1
      %p123 = scmp.ne.s32.totalorder %s118, %s120
      %p124 = scmp.eq.s32.totalorder %s42, 0
      %p125 = por %p123, %p124
      %p126 = scmp.ne.s32.totalorder %s118, %s120
      %p127 = scmp.eq.s32.totalorder %s47, 1
      %p128 = por %p126, %p127
      %p129 = scmp.ne.s32.totalorder %s120, %s121
      %p130 = scmp.eq.s32.totalorder %s47, 0
      %p131 = por %p129, %p130
      %p132 = scmp.ne.s32.totalorder %s120, %s121
      %p133 = scmp.eq.s32.totalorder %s48, 1
      %p134 = por %p132, %p133
      %p136 = scmp.ne.s32.totalorder %s121, %s135
      %p137 = scmp.eq.s32.totalorder %s48, 0
      %p138 = por %p136, %p137
      %s140 = sadd.s32 %s139, 1
      %p143 = scmp.eq.s32.totalorder %s42, 1
      %p144 = scmp.ne.s32.totalorder %s139, %s141
      %p145 = scmp.eq.s32.totalorder %s42, 0
      %p146 = por %p144, %p145
      %p147 = scmp.ne.s32.totalorder %s139, %s141
      %p148 = scmp.eq.s32.totalorder %s47, 1
      %p149 = por %p147, %p148
      %p150 = scmp.ne.s32.totalorder %s141, %s142
      %p151 = scmp.eq.s32.totalorder %s47, 0
      %p152 = por %p150, %p151
      %p153 = scmp.ne.s32.totalorder %s141, %s142
      %p154 = scmp.eq.s32.totalorder %s48, 1
      %p155 = por %p153, %p154
      %p157 = scmp.ne.s32.totalorder %s142, %s156
      %p158 = scmp.eq.s32.totalorder %s48, 0
      %p159 = por %p157, %p158
      %s161 = sadd.s32 %s160, 1
      %p164 = scmp.eq.s32.totalorder %s42, 1
      %p165 = scmp.ne.s32.totalorder %s160, %s162
      %p166 = scmp.eq.s32.totalorder %s42, 0
      %p167 = por %p165, %p166
      %p168 = scmp.ne.s32.totalorder %s160, %s162
      %p169 = scmp.eq.s32.totalorder %s47, 1
      %p170 = por %p168, %p169
      %p171 = scmp.ne.s32.totalorder %s162, %s163
      %p172 = scmp.eq.s32.totalorder %s47, 0
      %p173 = por %p171, %p172
      %p174 = scmp.ne.s32.totalorder %s162, %s163
      %p175 = scmp.eq.s32.totalorder %s48, 1
      %p176 = por %p174, %p175
      %p178 = scmp.ne.s32.totalorder %s163, %s177
      %p179 = scmp.eq.s32.totalorder %s48, 0
      %p180 = por %p178, %p179
      %s182 = sadd.s32 %s181, 1
      %p185 = scmp.eq.s32.totalorder %s42, 1
      %p186 = scmp.ne.s32.totalorder %s181, %s183
      %p187 = scmp.eq.s32.totalorder %s42, 0
      %p188 = por %p186, %p187
      %p189 = scmp.ne.s32.totalorder %s181, %s183
      %p190 = scmp.eq.s32.totalorder %s47, 1
      %p191 = por %p189, %p190
      %p192 = scmp.ne.s32.totalorder %s183, %s184
      %p193 = scmp.eq.s32.totalorder %s47, 0
      %p194 = por %p192, %p193
      %p195 = scmp.ne.s32.totalorder %s183, %s184
      %p196 = scmp.eq.s32.totalorder %s48, 1
      %p197 = por %p195, %p196
      %p199 = scmp.ne.s32.totalorder %s184, %s198
      %p200 = scmp.eq.s32.totalorder %s48, 0
      %p201 = por %p199, %p200
      %s203 = sadd.s32 %s202, 1
      %p206 = scmp.eq.s32.totalorder %s42, 1
      %p207 = scmp.ne.s32.totalorder %s202, %s204
      %p208 = scmp.eq.s32.totalorder %s42, 0
      %p209 = por %p207, %p208
      %p210 = scmp.ne.s32.totalorder %s202, %s204
      %p211 = scmp.eq.s32.totalorder %s47, 1
      %p212 = por %p210, %p211
      %p213 = scmp.ne.s32.totalorder %s204, %s205
      %p214 = scmp.eq.s32.totalorder %s47, 0
      %p215 = por %p213, %p214
      %p216 = scmp.ne.s32.totalorder %s204, %s205
      %p217 = scmp.eq.s32.totalorder %s48, 1
      %p218 = por %p216, %p217
      %p220 = scmp.ne.s32.totalorder %s205, %s219
      %p221 = scmp.eq.s32.totalorder %s48, 0
      %p222 = por %p220, %p221
      %s224 = sadd.s32 %s223, 1
      %p227 = scmp.eq.s32.totalorder %s42, 1
      %p228 = scmp.ne.s32.totalorder %s223, %s225
      %p229 = scmp.eq.s32.totalorder %s42, 0
      %p230 = por %p228, %p229
      %p231 = scmp.ne.s32.totalorder %s223, %s225
      %p232 = scmp.eq.s32.totalorder %s47, 1
      %p233 = por %p231, %p232
      %p234 = scmp.ne.s32.totalorder %s225, %s226
      %p235 = scmp.eq.s32.totalorder %s47, 0
      %p236 = por %p234, %p235
      %p237 = scmp.ne.s32.totalorder %s225, %s226
      %p238 = scmp.eq.s32.totalorder %s48, 1
      %p239 = por %p237, %p238
      %p241 = scmp.ne.s32.totalorder %s226, %s240
      %p242 = scmp.eq.s32.totalorder %s48, 0
      %p243 = por %p241, %p242
      %s245 = sadd.s32 %s244, 1
      %p248 = scmp.eq.s32.totalorder %s42, 1
      %p249 = scmp.ne.s32.totalorder %s244, %s246
      %p250 = scmp.eq.s32.totalorder %s42, 0
      %p251 = por %p249, %p250
      %p252 = scmp.ne.s32.totalorder %s244, %s246
      %p253 = scmp.eq.s32.totalorder %s47, 1
      %p254 = por %p252, %p253
      %p255 = scmp.ne.s32.totalorder %s246, %s247
      %p256 = scmp.eq.s32.totalorder %s47, 0
      %p257 = por %p255, %p256
      %p258 = scmp.ne.s32.totalorder %s246, %s247
      %p259 = scmp.eq.s32.totalorder %s48, 1
      %p260 = por %p258, %p259
      %p262 = scmp.ne.s32.totalorder %s247, %s261
      %p263 = scmp.eq.s32.totalorder %s48, 0
      %p264 = por %p262, %p263
      %s266 = sadd.s32 %s265, 1
      %p269 = scmp.eq.s32.totalorder %s42, 1
      %p270 = scmp.ne.s32.totalorder %s265, %s267
      %p271 = scmp.eq.s32.totalorder %s42, 0
      %p272 = por %p270, %p271
      %p273 = scmp.ne.s32.totalorder %s265, %s267
      %p274 = scmp.eq.s32.totalorder %s47, 1
      %p275 = por %p273, %p274
      %p276 = scmp.ne.s32.totalorder %s267, %s268
      %p277 = scmp.eq.s32.totalorder %s47, 0
      %p278 = por %p276, %p277
      %p279 = scmp.ne.s32.totalorder %s267, %s268
      %p280 = scmp.eq.s32.totalorder %s48, 1
      %p281 = por %p279, %p280
      %p283 = scmp.ne.s32.totalorder %s268, %s282
      %p284 = scmp.eq.s32.totalorder %s48, 0
      %p285 = por %p283, %p284
      %s287 = sadd.s32 %s286, 1
      %p290 = scmp.eq.s32.totalorder %s42, 1
      %p291 = scmp.ne.s32.totalorder %s286, %s288
      %p292 = scmp.eq.s32.totalorder %s42, 0
      %p293 = por %p291, %p292
      %p294 = scmp.ne.s32.totalorder %s286, %s288
      %p295 = scmp.eq.s32.totalorder %s47, 1
      %p296 = por %p294, %p295
      %p297 = scmp.ne.s32.totalorder %s288, %s289
      %p298 = scmp.eq.s32.totalorder %s47, 0
      %p299 = por %p297, %p298
      %p300 = scmp.ne.s32.totalorder %s288, %s289
      %p301 = scmp.eq.s32.totalorder %s48, 1
      %p302 = por %p300, %p301
      %p304 = scmp.ne.s32.totalorder %s289, %s303
      %p305 = scmp.eq.s32.totalorder %s48, 0
      %p306 = por %p304, %p305
      %s308 = sadd.s32 %s307, 1
      %p311 = scmp.eq.s32.totalorder %s42, 1
      %p312 = scmp.ne.s32.totalorder %s307, %s309
      %p313 = scmp.eq.s32.totalorder %s42, 0
      %p314 = por %p312, %p313
      %p315 = scmp.ne.s32.totalorder %s307, %s309
      %p316 = scmp.eq.s32.totalorder %s47, 1
      %p317 = por %p315, %p316
      %p318 = scmp.ne.s32.totalorder %s309, %s310
      %p319 = scmp.eq.s32.totalorder %s47, 0
      %p320 = por %p318, %p319
      %p321 = scmp.ne.s32.totalorder %s309, %s310
      %p322 = scmp.eq.s32.totalorder %s48, 1
      %p323 = por %p321, %p322
      %p325 = scmp.ne.s32.totalorder %s310, %s324
      %p326 = scmp.eq.s32.totalorder %s48, 0
      %p327 = por %p325, %p326
      %s329 = sadd.s32 %s328, 1
      %p332 = scmp.eq.s32.totalorder %s42, 1
      %p333 = scmp.ne.s32.totalorder %s328, %s330
      %p334 = scmp.eq.s32.totalorder %s42, 0
      %p335 = por %p333, %p334
      %p336 = scmp.ne.s32.totalorder %s328, %s330
      %p337 = scmp.eq.s32.totalorder %s47, 1
      %p338 = por %p336, %p337
      %p339 = scmp.ne.s32.totalorder %s330, %s331
      %p340 = scmp.eq.s32.totalorder %s47, 0
      %p341 = por %p339, %p340
      %p342 = scmp.ne.s32.totalorder %s330, %s331
      %p343 = scmp.eq.s32.totalorder %s48, 1
      %p344 = por %p342, %p343
      %p346 = scmp.ne.s32.totalorder %s331, %s345
      %p347 = scmp.eq.s32.totalorder %s48, 0
      %p348 = por %p346, %p347
      %s350 = sadd.s32 %s349, 1
      %p353 = scmp.eq.s32.totalorder %s42, 1
      %p354 = scmp.ne.s32.totalorder %s349, %s351
      %p355 = scmp.eq.s32.totalorder %s42, 0
      %p356 = por %p354, %p355
      %p357 = scmp.ne.s32.totalorder %s349, %s351
      %p358 = scmp.eq.s32.totalorder %s47, 1
      %p359 = por %p357, %p358
      %p360 = scmp.ne.s32.totalorder %s351, %s352
      %p361 = scmp.eq.s32.totalorder %s47, 0
      %p362 = por %p360, %p361
      %p363 = scmp.ne.s32.totalorder %s351, %s352
      %p364 = scmp.eq.s32.totalorder %s48, 1
      %p365 = por %p363, %p364
      %p367 = scmp.ne.s32.totalorder %s352, %s366
      %p368 = scmp.eq.s32.totalorder %s48, 0
      %p369 = por %p367, %p368
      %s371 = sadd.s32 %s370, 1
      %p374 = scmp.eq.s32.totalorder %s42, 1
      %p375 = scmp.ne.s32.totalorder %s370, %s372
      %p376 = scmp.eq.s32.totalorder %s42, 0
      %p377 = por %p375, %p376
      %p378 = scmp.ne.s32.totalorder %s370, %s372
      %p379 = scmp.eq.s32.totalorder %s47, 1
      %p380 = por %p378, %p379
      %p381 = scmp.ne.s32.totalorder %s372, %s373
      %p382 = scmp.eq.s32.totalorder %s47, 0
      %p383 = por %p381, %p382
      %p384 = scmp.ne.s32.totalorder %s372, %s373
      %p385 = scmp.eq.s32.totalorder %s48, 1
      %p386 = por %p384, %p385
      %p388 = scmp.ne.s32.totalorder %s373, %s387
      %p389 = scmp.eq.s32.totalorder %s48, 0
      %p390 = por %p388, %p389
      %s392 = sadd.s32 %s391, 1
      %p395 = scmp.eq.s32.totalorder %s42, 1
      %p396 = scmp.ne.s32.totalorder %s391, %s393
      %p397 = scmp.eq.s32.totalorder %s42, 0
      %p398 = por %p396, %p397
      %p399 = scmp.ne.s32.totalorder %s391, %s393
      %p400 = scmp.eq.s32.totalorder %s47, 1
      %p401 = por %p399, %p400
      %p402 = scmp.ne.s32.totalorder %s393, %s394
      %p403 = scmp.eq.s32.totalorder %s47, 0
      %p404 = por %p402, %p403
      %p405 = scmp.ne.s32.totalorder %s393, %s394
      %p406 = scmp.eq.s32.totalorder %s48, 1
      %p407 = por %p405, %p406
      %p409 = scmp.ne.s32.totalorder %s394, %s408
      %p410 = scmp.eq.s32.totalorder %s48, 0
      %p411 = por %p409, %p410
      %s413 = sadd.s32 %s412, 1
      %p416 = scmp.eq.s32.totalorder %s42, 1
      %p417 = scmp.ne.s32.totalorder %s412, %s414
      %p418 = scmp.eq.s32.totalorder %s42, 0
      %p419 = por %p417, %p418
      %p420 = scmp.ne.s32.totalorder %s412, %s414
      %p421 = scmp.eq.s32.totalorder %s47, 1
      %p422 = por %p420, %p421
      %p423 = scmp.ne.s32.totalorder %s414, %s415
      %p424 = scmp.eq.s32.totalorder %s47, 0
      %p425 = por %p423, %p424
      %p426 = scmp.ne.s32.totalorder %s414, %s415
      %p427 = scmp.eq.s32.totalorder %s48, 1
      %p428 = por %p426, %p427
      %p430 = scmp.ne.s32.totalorder %s415, %s429
      %p431 = scmp.eq.s32.totalorder %s48, 0
      %p432 = por %p430, %p431
      %s434 = sadd.s32 %s433, 1
      %p437 = scmp.eq.s32.totalorder %s42, 1
      %p438 = scmp.ne.s32.totalorder %s433, %s435
      %p439 = scmp.eq.s32.totalorder %s42, 0
      %p440 = por %p438, %p439
      %p441 = scmp.ne.s32.totalorder %s433, %s435
      %p442 = scmp.eq.s32.totalorder %s47, 1
      %p443 = por %p441, %p442
      %p444 = scmp.ne.s32.totalorder %s435, %s436
      %p445 = scmp.eq.s32.totalorder %s47, 0
      %p446 = por %p444, %p445
      %p447 = scmp.ne.s32.totalorder %s435, %s436
      %p448 = scmp.eq.s32.totalorder %s48, 1
      %p449 = por %p447, %p448
      %p451 = scmp.ne.s32.totalorder %s436, %s450
      %p452 = scmp.eq.s32.totalorder %s48, 0
      %p453 = por %p451, %p452
      %s455 = sadd.s32 %s454, 1
      %p458 = scmp.eq.s32.totalorder %s42, 1
      %p459 = scmp.ne.s32.totalorder %s454, %s456
      %p460 = scmp.eq.s32.totalorder %s42, 0
      %p461 = por %p459, %p460
      %p462 = scmp.ne.s32.totalorder %s454, %s456
      %p463 = scmp.eq.s32.totalorder %s47, 1
      %p464 = por %p462, %p463
      %p465 = scmp.ne.s32.totalorder %s456, %s457
      %p466 = scmp.eq.s32.totalorder %s47, 0
      %p467 = por %p465, %p466
      %p468 = scmp.ne.s32.totalorder %s456, %s457
      %p469 = scmp.eq.s32.totalorder %s48, 1
      %p470 = por %p468, %p469
      %p472 = scmp.ne.s32.totalorder %s457, %s471
      %p473 = scmp.eq.s32.totalorder %s48, 0
      %p474 = por %p472, %p473
      %s476 = sadd.s32 %s475, 1
      %p479 = scmp.eq.s32.totalorder %s42, 1
      %p480 = scmp.ne.s32.totalorder %s475, %s477
      %p481 = scmp.eq.s32.totalorder %s42, 0
      %p482 = por %p480, %p481
      %p483 = scmp.ne.s32.totalorder %s475, %s477
      %p484 = scmp.eq.s32.totalorder %s47, 1
      %p485 = por %p483, %p484
      %p486 = scmp.ne.s32.totalorder %s477, %s478
      %p487 = scmp.eq.s32.totalorder %s47, 0
      %p488 = por %p486, %p487
      %p489 = scmp.ne.s32.totalorder %s477, %s478
      %p490 = scmp.eq.s32.totalorder %s48, 1
      %p491 = por %p489, %p490
      %p493 = scmp.ne.s32.totalorder %s478, %s492
      %p494 = scmp.eq.s32.totalorder %s48, 0
      %p495 = por %p493, %p494
      %s497 = sadd.s32 %s496, 1
      %p500 = scmp.eq.s32.totalorder %s42, 1
      %p501 = scmp.ne.s32.totalorder %s496, %s498
      %p502 = scmp.eq.s32.totalorder %s42, 0
      %p503 = por %p501, %p502
      %p504 = scmp.ne.s32.totalorder %s496, %s498
      %p505 = scmp.eq.s32.totalorder %s47, 1
      %p506 = por %p504, %p505
      %p507 = scmp.ne.s32.totalorder %s498, %s499
      %p508 = scmp.eq.s32.totalorder %s47, 0
      %p509 = por %p507, %p508
      %p510 = scmp.ne.s32.totalorder %s498, %s499
      %p511 = scmp.eq.s32.totalorder %s48, 1
      %p512 = por %p510, %p511
      %p514 = scmp.ne.s32.totalorder %s499, %s513
      %p515 = scmp.eq.s32.totalorder %s48, 0
      %p516 = por %p514, %p515
      %s518 = sadd.s32 %s517, 1
      %p521 = scmp.eq.s32.totalorder %s42, 1
      %p522 = scmp.ne.s32.totalorder %s517, %s519
      %p523 = scmp.eq.s32.totalorder %s42, 0
      %p524 = por %p522, %p523
      %p525 = scmp.ne.s32.totalorder %s517, %s519
      %p526 = scmp.eq.s32.totalorder %s47, 1
      %p527 = por %p525, %p526
      %p528 = scmp.ne.s32.totalorder %s519, %s520
      %p529 = scmp.eq.s32.totalorder %s47, 0
      %p530 = por %p528, %p529
      %p531 = scmp.ne.s32.totalorder %s519, %s520
      %p532 = scmp.eq.s32.totalorder %s48, 1
      %p533 = por %p531, %p532
      %p535 = scmp.ne.s32.totalorder %s520, %s534
      %p536 = scmp.eq.s32.totalorder %s48, 0
      %p537 = por %p535, %p536
      %s538 = ssub.s32 %s42, %s49
      %p539 = scmp.eq.s32.totalorder %s538, 0
      %s541 = sadd.s32 %s540, 1
      %s542 = scalar_select %p539, %s540, %s541
      %p545 = pneg %p539
      %p546 = scmp.eq.s32.totalorder %s42, 1
      %p547 = por %p545, %p546
      %p548 = scmp.ne.s32.totalorder %s540, %s543
      %p549 = scmp.eq.s32.totalorder %s42, 0
      %p550 = por %p548, %p549
      %p551 = scmp.ne.s32.totalorder %s540, %s543
      %p552 = scmp.eq.s32.totalorder %s47, 1
      %p553 = por %p551, %p552
      %p554 = scmp.ne.s32.totalorder %s543, %s544
      %p555 = scmp.eq.s32.totalorder %s47, 0
      %p556 = por %p554, %p555
      %p557 = scmp.ne.s32.totalorder %s543, %s544
      %p558 = scmp.eq.s32.totalorder %s48, 1
      %p559 = por %p557, %p558
      %p561 = scmp.ne.s32.totalorder %s544, %s560
      %p562 = scmp.eq.s32.totalorder %s48, 0
      %p563 = por %p561, %p562
      %p564 = scmp.le.s32.totalorder 1, %s42
      %p565 = scmp.lt.s32.totalorder %s42, 3
      %p566 = pnand %p564, %p565
      %p567 = pneg %p566
      // Predicated region
      $region9: #{tpu_custom_call.1} parent=5 // pred_check
        _
      $region10: #{tpu_custom_call.1} parent=5 // pred_check_branch
        %569 = sbr.rel (%p566) target = $region12
      $region11: #{tpu_custom_call.1} parent=5 // pred_region
        %s570 = ssub.s32 %s42, 1
        // Predicated region
        $region13: #{tpu_custom_call.1} parent=11 // pred_check
          %p571 = pneg %p89
        $region14: #{tpu_custom_call.1} parent=11 // pred_check_branch
          %573 = sbr.rel (%p571) target = $region16
        $region15: #{tpu_custom_call.1} parent=11 // pred_region
          %s575 = ssub.s32 512, 512
          %576 = vsyncadd [#allocation6], %s575
          %s577 = sshll.u32 [#allocation5], 4
          %s578 = int_to_ptr.vmem [resolvable:$true] %s577
          %583 = dma.hbm_to_vmem [thread:$0]  %s1, 512, %s578, [#allocation6], 128, 128, 8
        $region16: #{tpu_custom_call.1} parent=11 // pred_fallthru
          _
        // Predicated region
        $region17: #{tpu_custom_call.1} parent=11 // pred_check
          %p584 = pneg %p110
        $region18: #{tpu_custom_call.1} parent=11 // pred_check_branch
          %586 = sbr.rel (%p584) target = $region20
        $region19: #{tpu_custom_call.1} parent=11 // pred_region
          _
        $region20: #{tpu_custom_call.1} parent=11 // pred_fallthru
          _
        // Predicated region
        $region21: #{tpu_custom_call.1} parent=11 // pred_check
          %p587 = pneg %p131
        $region22: #{tpu_custom_call.1} parent=11 // pred_check_branch
          %589 = sbr.rel (%p587) target = $region24
        $region23: #{tpu_custom_call.1} parent=11 // pred_region
          %s591 = ssub.s32 16, 16
          %592 = vsyncadd [#allocation6], %s591
          %s594 = sshll.u32 [#allocation7], 4
          %s595 = int_to_ptr.vmem [resolvable:$true] %s594
          %597 = dma.hbm_to_vmem [thread:$0]  %s3, 16, %s595, [#allocation6]
        $region24: #{tpu_custom_call.1} parent=11 // pred_fallthru
          _
        // Predicated region
        $region25: #{tpu_custom_call.1} parent=11 // pred_check
          %p598 = pneg %p152
        $region26: #{tpu_custom_call.1} parent=11 // pred_check_branch
          %600 = sbr.rel (%p598) target = $region28
        $region27: #{tpu_custom_call.1} parent=11 // pred_region
          %s602 = ssub.s32 16, 16
          %603 = vsyncadd [#allocation9], %s602
          %s605 = sshll.u32 [#allocation8], 4
          %s606 = int_to_ptr.vmem [resolvable:$true] %s605
          %608 = dma.hbm_to_vmem [thread:$0]  %s4, 16, %s606, [#allocation9]
        $region28: #{tpu_custom_call.1} parent=11 // pred_fallthru
          _
        // Predicated region
        $region29: #{tpu_custom_call.1} parent=11 // pred_check
          %p609 = pneg %p173
        $region30: #{tpu_custom_call.1} parent=11 // pred_check_branch
          %611 = sbr.rel (%p609) target = $region32
        $region31: #{tpu_custom_call.1} parent=11 // pred_region
          _
        $region32: #{tpu_custom_call.1} parent=11 // pred_fallthru
          _
        // Predicated region
        $region33: #{tpu_custom_call.1} parent=11 // pred_check
          %p612 = pneg %p194
        $region34: #{tpu_custom_call.1} parent=11 // pred_check_branch
          %614 = sbr.rel (%p612) target = $region36
        $region35: #{tpu_custom_call.1} parent=11 // pred_region
          %s616 = ssub.s32 16, 16
          %617 = vsyncadd [#allocation9], %s616
          %s619 = sshll.u32 [#allocation10], 4
          %s620 = int_to_ptr.vmem [resolvable:$true] %s619
          %622 = dma.hbm_to_vmem [thread:$0]  %s6, 16, %s620, [#allocation9]
        $region36: #{tpu_custom_call.1} parent=11 // pred_fallthru
          _
        // Predicated region
        $region37: #{tpu_custom_call.1} parent=11 // pred_check
          %p623 = pneg %p215
        $region38: #{tpu_custom_call.1} parent=11 // pred_check_branch
          %625 = sbr.rel (%p623) target = $region40
        $region39: #{tpu_custom_call.1} parent=11 // pred_region
          %s627 = ssub.s32 16, 16
          %628 = vsyncadd [#allocation12], %s627
          %s630 = sshll.u32 [#allocation11], 4
          %s631 = int_to_ptr.vmem [resolvable:$true] %s630
          %633 = dma.hbm_to_vmem [thread:$0]  %s7, 16, %s631, [#allocation12]
        $region40: #{tpu_custom_call.1} parent=11 // pred_fallthru
          _
        // Predicated region
        $region41: #{tpu_custom_call.1} parent=11 // pred_check
          %p634 = pneg %p236
        $region42: #{tpu_custom_call.1} parent=11 // pred_check_branch
          %636 = sbr.rel (%p634) target = $region44
        $region43: #{tpu_custom_call.1} parent=11 // pred_region
          %s638 = ssub.s32 16, 16
          %639 = vsyncadd [#allocation12], %s638
          %s641 = sshll.u32 [#allocation13], 4
          %s642 = int_to_ptr.vmem [resolvable:$true] %s641
          %644 = dma.hbm_to_vmem [thread:$0]  %s8, 16, %s642, [#allocation12]
        $region44: #{tpu_custom_call.1} parent=11 // pred_fallthru
          _
        // Predicated region
        $region45: #{tpu_custom_call.1} parent=11 // pred_check
          %p645 = pneg %p257
        $region46: #{tpu_custom_call.1} parent=11 // pred_check_branch
          %647 = sbr.rel (%p645) target = $region48
        $region47: #{tpu_custom_call.1} parent=11 // pred_region
          %s649 = ssub.s32 512, 512
          %650 = vsyncadd [#allocation15], %s649
          %s651 = sshll.u32 [#allocation14], 4
          %s652 = int_to_ptr.vmem [resolvable:$true] %s651
          %657 = dma.hbm_to_vmem [thread:$0]  %s9, 512, %s652, [#allocation15], 128, 128, 8
        $region48: #{tpu_custom_call.1} parent=11 // pred_fallthru
          _
        // Predicated region
        $region49: #{tpu_custom_call.1} parent=11 // pred_check
          %p658 = pneg %p278
        $region50: #{tpu_custom_call.1} parent=11 // pred_check_branch
          %660 = sbr.rel (%p658) target = $region52
        $region51: #{tpu_custom_call.1} parent=11 // pred_region
          %s662 = ssub.s32 16, 16
          %663 = vsyncadd [#allocation15], %s662
          %s665 = sshll.u32 [#allocation16], 4
          %s666 = int_to_ptr.vmem [resolvable:$true] %s665
          %668 = dma.hbm_to_vmem [thread:$0]  %s10, 16, %s666, [#allocation15]
        $region52: #{tpu_custom_call.1} parent=11 // pred_fallthru
          _
        // Predicated region
        $region53: #{tpu_custom_call.1} parent=11 // pred_check
          %p669 = pneg %p299
        $region54: #{tpu_custom_call.1} parent=11 // pred_check_branch
          %671 = sbr.rel (%p669) target = $region56
        $region55: #{tpu_custom_call.1} parent=11 // pred_region
          %s673 = ssub.s32 16, 16
          %674 = vsyncadd [#allocation18], %s673
          %s676 = sshll.u32 [#allocation17], 4
          %s677 = int_to_ptr.vmem [resolvable:$true] %s676
          %679 = dma.hbm_to_vmem [thread:$0]  %s11, 16, %s677, [#allocation18]
        $region56: #{tpu_custom_call.1} parent=11 // pred_fallthru
          _
        // Predicated region
        $region57: #{tpu_custom_call.1} parent=11 // pred_check
          %p680 = pneg %p320
        $region58: #{tpu_custom_call.1} parent=11 // pred_check_branch
          %682 = sbr.rel (%p680) target = $region60
        $region59: #{tpu_custom_call.1} parent=11 // pred_region
          _
        $region60: #{tpu_custom_call.1} parent=11 // pred_fallthru
          _
        // Predicated region
        $region61: #{tpu_custom_call.1} parent=11 // pred_check
          %p683 = pneg %p341
        $region62: #{tpu_custom_call.1} parent=11 // pred_check_branch
          %685 = sbr.rel (%p683) target = $region64
        $region63: #{tpu_custom_call.1} parent=11 // pred_region
          _
        $region64: #{tpu_custom_call.1} parent=11 // pred_fallthru
          _
        // Predicated region
        $region65: #{tpu_custom_call.1} parent=11 // pred_check
          %p686 = pneg %p362
        $region66: #{tpu_custom_call.1} parent=11 // pred_check_branch
          %688 = sbr.rel (%p686) target = $region68
        $region67: #{tpu_custom_call.1} parent=11 // pred_region
          _
        $region68: #{tpu_custom_call.1} parent=11 // pred_fallthru
          _
        // Predicated region
        $region69: #{tpu_custom_call.1} parent=11 // pred_check
          %p689 = pneg %p383
        $region70: #{tpu_custom_call.1} parent=11 // pred_check_branch
          %691 = sbr.rel (%p689) target = $region72
        $region71: #{tpu_custom_call.1} parent=11 // pred_region
          %s693 = ssub.s32 16, 16
          %694 = vsyncadd [#allocation18], %s693
          %s696 = sshll.u32 [#allocation19], 4
          %s697 = int_to_ptr.vmem [resolvable:$true] %s696
          %699 = dma.hbm_to_vmem [thread:$0]  %s15, 16, %s697, [#allocation18]
        $region72: #{tpu_custom_call.1} parent=11 // pred_fallthru
          _
        // Predicated region
        $region73: #{tpu_custom_call.1} parent=11 // pred_check
          %p700 = pneg %p404
        $region74: #{tpu_custom_call.1} parent=11 // pred_check_branch
          %702 = sbr.rel (%p700) target = $region76
        $region75: #{tpu_custom_call.1} parent=11 // pred_region
          %s704 = ssub.s32 16, 16
          %705 = vsyncadd [#allocation21], %s704
          %s707 = sshll.u32 [#allocation20], 4
          %s708 = int_to_ptr.vmem [resolvable:$true] %s707
          %710 = dma.hbm_to_vmem [thread:$0]  %s16, 16, %s708, [#allocation21]
        $region76: #{tpu_custom_call.1} parent=11 // pred_fallthru
          _
        // Predicated region
        $region77: #{tpu_custom_call.1} parent=11 // pred_check
          %p711 = pneg %p425
        $region78: #{tpu_custom_call.1} parent=11 // pred_check_branch
          %713 = sbr.rel (%p711) target = $region80
        $region79: #{tpu_custom_call.1} parent=11 // pred_region
          %s715 = ssub.s32 128, 128
          %716 = vsyncadd [#allocation21], %s715
          %s718 = sshll.u32 [#allocation22], 4
          %s719 = int_to_ptr.vmem [resolvable:$true] %s718
          %721 = dma.hbm_to_vmem [thread:$0]  %s17, 128, %s719, [#allocation21]
        $region80: #{tpu_custom_call.1} parent=11 // pred_fallthru
          _
        // Predicated region
        $region81: #{tpu_custom_call.1} parent=11 // pred_check
          %p722 = pneg %p446
        $region82: #{tpu_custom_call.1} parent=11 // pred_check_branch
          %724 = sbr.rel (%p722) target = $region84
        $region83: #{tpu_custom_call.1} parent=11 // pred_region
          %s726 = ssub.s32 16, 16
          %727 = vsyncadd [#allocation24], %s726
          %s729 = sshll.u32 [#allocation23], 4
          %s730 = int_to_ptr.vmem [resolvable:$true] %s729
          %732 = dma.hbm_to_vmem [thread:$0]  %s18, 16, %s730, [#allocation24]
        $region84: #{tpu_custom_call.1} parent=11 // pred_fallthru
          _
        // Predicated region
        $region85: #{tpu_custom_call.1} parent=11 // pred_check
          %p733 = pneg %p467
        $region86: #{tpu_custom_call.1} parent=11 // pred_check_branch
          %735 = sbr.rel (%p733) target = $region88
        $region87: #{tpu_custom_call.1} parent=11 // pred_region
          _
        $region88: #{tpu_custom_call.1} parent=11 // pred_fallthru
          _
        // Predicated region
        $region89: #{tpu_custom_call.1} parent=11 // pred_check
          %p736 = pneg %p488
        $region90: #{tpu_custom_call.1} parent=11 // pred_check_branch
          %738 = sbr.rel (%p736) target = $region92
        $region91: #{tpu_custom_call.1} parent=11 // pred_region
          %s740 = ssub.s32 16, 16
          %741 = vsyncadd [#allocation24], %s740
          %s743 = sshll.u32 [#allocation25], 4
          %s744 = int_to_ptr.vmem [resolvable:$true] %s743
          %746 = dma.hbm_to_vmem [thread:$0]  %s20, 16, %s744, [#allocation24]
        $region92: #{tpu_custom_call.1} parent=11 // pred_fallthru
          _
        // Predicated region
        $region93: #{tpu_custom_call.1} parent=11 // pred_check
          %p747 = pneg %p509
        $region94: #{tpu_custom_call.1} parent=11 // pred_check_branch
          %749 = sbr.rel (%p747) target = $region96
        $region95: #{tpu_custom_call.1} parent=11 // pred_region
          _
        $region96: #{tpu_custom_call.1} parent=11 // pred_fallthru
          _
        // Predicated region
        $region97: #{tpu_custom_call.1} parent=11 // pred_check
          %p750 = pneg %p530
        $region98: #{tpu_custom_call.1} parent=11 // pred_check_branch
          %752 = sbr.rel (%p750) target = $region100
        $region99: #{tpu_custom_call.1} parent=11 // pred_region
          _
        $region100: #{tpu_custom_call.1} parent=11 // pred_fallthru
          _
      $region12: #{tpu_custom_call.1} parent=5 // pred_fallthru
        _
      %p753 = scmp.lt.s32.totalorder %s42, 2
      // Predicated region
      $region101: #{tpu_custom_call.1} parent=5 // pred_check
        %p754 = pneg %p753
      $region102: #{tpu_custom_call.1} parent=5 // pred_check_branch
        %756 = sbr.rel (%p754) target = $region104
      $region103: #{tpu_custom_call.1} parent=5 // pred_region
        // Predicated region
        $region105: #{tpu_custom_call.1} parent=103 // pred_check
          %p757 = pneg %p62
        $region106: #{tpu_custom_call.1} parent=103 // pred_check_branch
          %759 = sbr.rel (%p757) target = $region108
        $region107: #{tpu_custom_call.1} parent=103 // pred_region
          %s760 = sand.u32 %s52, 1
          %s761 = scalar_lea.sflag [#allocation3], %s760
          %s762 = sand.u32 %s52, 1
          %s763 = smul.addr %s762, 8
          %s764 = scalar_lea.vmem [#allocation2], %s763
          %s766 = ssub.s32 128, 128
          %767 = vsyncadd %s761, %s766
          %s768 = smul.addr %s42, 128
          %s769 = scalar_lea.hbm %s0, %s768
          %s771 = sshll.u32 %s764, 4
          %s772 = int_to_ptr.vmem [resolvable:$true] %s771
          %774 = dma.hbm_to_vmem [thread:$0]  %s769, 128, %s772, %s761
        $region108: #{tpu_custom_call.1} parent=103 // pred_fallthru
          _
      $region104: #{tpu_custom_call.1} parent=5 // pred_fallthru
        _
      %p775 = scmp.le.s32.totalorder 1, %s42
      %p776 = scmp.lt.s32.totalorder %s42, 3
      %p777 = pnand %p775, %p776
      %p778 = pneg %p777
      // Predicated region
      $region109: #{tpu_custom_call.1} parent=5 // pred_check
        _
      $region110: #{tpu_custom_call.1} parent=5 // pred_check_branch
        %780 = sbr.rel (%p777) target = $region112
      $region111: #{tpu_custom_call.1} parent=5 // pred_region
        %s781 = ssub.s32 %s42, 1
        %s782 = sand.u32 %s55, 1
        %s783 = scalar_lea.sflag [#allocation3], %s782
        %s784 = sand.u32 %s55, 1
        %s785 = smul.addr %s784, 8
        %s786 = scalar_lea.vmem [#allocation2], %s785
        // Predicated region
        $region113: #{tpu_custom_call.1} parent=111 // pred_check
          %p787 = pneg %p68
        $region114: #{tpu_custom_call.1} parent=111 // pred_check_branch
          %789 = sbr.rel (%p787) target = $region116
        $region115: #{tpu_custom_call.1} parent=111 // pred_region
          %790 = dma.done %s783, 128
        $region116: #{tpu_custom_call.1} parent=111 // pred_fallthru
          _
        // Predicated region
        $region117: #{tpu_custom_call.1} parent=111 // pred_check
          %p791 = pneg %p89
        $region118: #{tpu_custom_call.1} parent=111 // pred_check_branch
          %793 = sbr.rel (%p791) target = $region120
        $region119: #{tpu_custom_call.1} parent=111 // pred_region
          %794 = dma.done [#allocation6], 512
        $region120: #{tpu_custom_call.1} parent=111 // pred_fallthru
          _
        // Predicated region
        $region121: #{tpu_custom_call.1} parent=111 // pred_check
          %p795 = pneg %p131
        $region122: #{tpu_custom_call.1} parent=111 // pred_check_branch
          %797 = sbr.rel (%p795) target = $region124
        $region123: #{tpu_custom_call.1} parent=111 // pred_region
          %798 = dma.done [#allocation6], 16
        $region124: #{tpu_custom_call.1} parent=111 // pred_fallthru
          _
        // Predicated region
        $region125: #{tpu_custom_call.1} parent=111 // pred_check
          %p799 = pneg %p152
        $region126: #{tpu_custom_call.1} parent=111 // pred_check_branch
          %801 = sbr.rel (%p799) target = $region128
        $region127: #{tpu_custom_call.1} parent=111 // pred_region
          %802 = dma.done [#allocation9], 16
        $region128: #{tpu_custom_call.1} parent=111 // pred_fallthru
          _
        // Predicated region
        $region129: #{tpu_custom_call.1} parent=111 // pred_check
          %p803 = pneg %p194
        $region130: #{tpu_custom_call.1} parent=111 // pred_check_branch
          %805 = sbr.rel (%p803) target = $region132
        $region131: #{tpu_custom_call.1} parent=111 // pred_region
          %806 = dma.done [#allocation9], 16
        $region132: #{tpu_custom_call.1} parent=111 // pred_fallthru
          _
        // Predicated region
        $region133: #{tpu_custom_call.1} parent=111 // pred_check
          %p807 = pneg %p215
        $region134: #{tpu_custom_call.1} parent=111 // pred_check_branch
          %809 = sbr.rel (%p807) target = $region136
        $region135: #{tpu_custom_call.1} parent=111 // pred_region
          %810 = dma.done [#allocation12], 16
        $region136: #{tpu_custom_call.1} parent=111 // pred_fallthru
          _
        // Predicated region
        $region137: #{tpu_custom_call.1} parent=111 // pred_check
          %p811 = pneg %p236
        $region138: #{tpu_custom_call.1} parent=111 // pred_check_branch
          %813 = sbr.rel (%p811) target = $region140
        $region139: #{tpu_custom_call.1} parent=111 // pred_region
          %814 = dma.done [#allocation12], 16
        $region140: #{tpu_custom_call.1} parent=111 // pred_fallthru
          _
        // Predicated region
        $region141: #{tpu_custom_call.1} parent=111 // pred_check
          %p815 = pneg %p257
        $region142: #{tpu_custom_call.1} parent=111 // pred_check_branch
          %817 = sbr.rel (%p815) target = $region144
        $region143: #{tpu_custom_call.1} parent=111 // pred_region
          %818 = dma.done [#allocation15], 512
        $region144: #{tpu_custom_call.1} parent=111 // pred_fallthru
          _
        // Predicated region
        $region145: #{tpu_custom_call.1} parent=111 // pred_check
          %p819 = pneg %p278
        $region146: #{tpu_custom_call.1} parent=111 // pred_check_branch
          %821 = sbr.rel (%p819) target = $region148
        $region147: #{tpu_custom_call.1} parent=111 // pred_region
          %822 = dma.done [#allocation15], 16
        $region148: #{tpu_custom_call.1} parent=111 // pred_fallthru
          _
        // Predicated region
        $region149: #{tpu_custom_call.1} parent=111 // pred_check
          %p823 = pneg %p299
        $region150: #{tpu_custom_call.1} parent=111 // pred_check_branch
          %825 = sbr.rel (%p823) target = $region152
        $region151: #{tpu_custom_call.1} parent=111 // pred_region
          %826 = dma.done [#allocation18], 16
        $region152: #{tpu_custom_call.1} parent=111 // pred_fallthru
          _
        // Predicated region
        $region153: #{tpu_custom_call.1} parent=111 // pred_check
          %p827 = pneg %p383
        $region154: #{tpu_custom_call.1} parent=111 // pred_check_branch
          %829 = sbr.rel (%p827) target = $region156
        $region155: #{tpu_custom_call.1} parent=111 // pred_region
          %830 = dma.done [#allocation18], 16
        $region156: #{tpu_custom_call.1} parent=111 // pred_fallthru
          _
        // Predicated region
        $region157: #{tpu_custom_call.1} parent=111 // pred_check
          %p831 = pneg %p404
        $region158: #{tpu_custom_call.1} parent=111 // pred_check_branch
          %833 = sbr.rel (%p831) target = $region160
        $region159: #{tpu_custom_call.1} parent=111 // pred_region
          %834 = dma.done [#allocation21], 16
        $region160: #{tpu_custom_call.1} parent=111 // pred_fallthru
          _
        // Predicated region
        $region161: #{tpu_custom_call.1} parent=111 // pred_check
          %p835 = pneg %p425
        $region162: #{tpu_custom_call.1} parent=111 // pred_check_branch
          %837 = sbr.rel (%p835) target = $region164
        $region163: #{tpu_custom_call.1} parent=111 // pred_region
          %838 = dma.done [#allocation21], 128
        $region164: #{tpu_custom_call.1} parent=111 // pred_fallthru
          _
        // Predicated region
        $region165: #{tpu_custom_call.1} parent=111 // pred_check
          %p839 = pneg %p446
        $region166: #{tpu_custom_call.1} parent=111 // pred_check_branch
          %841 = sbr.rel (%p839) target = $region168
        $region167: #{tpu_custom_call.1} parent=111 // pred_region
          %842 = dma.done [#allocation24], 16
        $region168: #{tpu_custom_call.1} parent=111 // pred_fallthru
          _
        // Predicated region
        $region169: #{tpu_custom_call.1} parent=111 // pred_check
          %p843 = pneg %p488
        $region170: #{tpu_custom_call.1} parent=111 // pred_check_branch
          %845 = sbr.rel (%p843) target = $region172
        $region171: #{tpu_custom_call.1} parent=111 // pred_region
          %846 = dma.done [#allocation24], 16
        $region172: #{tpu_custom_call.1} parent=111 // pred_fallthru
          _
        %s847 = sand.u32 %s55, 1
        %s848 = scalar_lea.sflag [#allocation3], %s847
        %s849 = sand.u32 %s55, 1
        %s850 = smul.addr %s849, 8
        %s851 = scalar_lea.vmem [#allocation2], %s850
        %p852 = pneg %p68
        %p853 = pneg %p65
        %p854 = pneg %p89
        %p855 = pneg %p86
        %p856 = pneg %p110
        %p857 = pneg %p107
        %p858 = pneg %p131
        %p859 = pneg %p128
        %p860 = pneg %p152
        %p861 = pneg %p149
        %p862 = pneg %p173
        %p863 = pneg %p170
        %p864 = pneg %p194
        %p865 = pneg %p191
        %p866 = pneg %p215
        %p867 = pneg %p212
        %p868 = pneg %p236
        %p869 = pneg %p233
        %p870 = pneg %p257
        %p871 = pneg %p254
        %p872 = pneg %p278
        %p873 = pneg %p275
        %p874 = pneg %p299
        %p875 = pneg %p296
        %p876 = pneg %p320
        %p877 = pneg %p317
        %p878 = pneg %p341
        %p879 = pneg %p338
        %p880 = pneg %p362
        %p881 = pneg %p359
        %p882 = pneg %p383
        %p883 = pneg %p380
        %p884 = pneg %p404
        %p885 = pneg %p401
        %p886 = pneg %p425
        %p887 = pneg %p422
        %p888 = pneg %p446
        %p889 = pneg %p443
        %p890 = pneg %p467
        %p891 = pneg %p464
        %p892 = pneg %p488
        %p893 = pneg %p485
        %p894 = pneg %p509
        %p895 = pneg %p506
        %p896 = pneg %p530
        %p897 = pneg %p527
        %p898 = pneg %p556
        %p899 = pneg %p553
        %s900 = sand.u32 %s543, 1
        %s901 = scalar_lea.sflag [#allocation4], %s900
        %s902 = sand.u32 %s543, 1
        %s903 = smul.addr %s902, 8
        %s904 = scalar_lea.vmem [#allocation26], %s903
        %v905 = vld [vmem:[%s786] sm:$0xff]
        %v906 = vld [vmem:[#allocation5] sm:$0xff]
        %v907 = vld [vmem:[#allocation5 + $0x8] sm:$0xff]
        %v908 = vld [vmem:[#allocation5 + $0x10] sm:$0xff]
        %v909 = vld [vmem:[#allocation5 + $0x18] sm:$0xff]
        %v910 = vld [vmem:[%s2] sm:$0x1]
        %v912 = vlaneseq
        %v913 = vshrl.u32 %v912, 7
        %v914 = vsub.s32 0, %v913
        %v915 = vrot.slane %v910, %v914
        %vm917 = vcmask 261120
        %v919 = vsel %vm917, %v905, 0
        %921 = vmatprep.subr.mxu0 0.0
        %922 = vmatpush1.msra.mxu0 %v906
        %923 = vmatprep.subr.mxu0 0.0
        %924 = vmatpush1.msra.mxu0 %v907
        %925 = vmatprep.subr.mxu0 0.0
        %926 = vmatpush1.msra.mxu0 %v908
        %927 = vmatprep.subr.mxu0 0.0
        %928 = vmatpush1.msra.mxu0 %v909
        %929 = vmatprep.subr.mxu0 0.0
        %930 = vmatpush1.msra.mxu0 0.0
        %931 = vmatprep.subr.mxu0 0.0
        %932 = vmatpush1.msra.mxu0 0.0
        %933 = vmatprep.subr.mxu0 0.0
        %934 = vmatpush1.msra.mxu0 0.0
        %935 = vmatprep.subr.mxu0 0.0
        %936 = vmatpush1.msra.mxu0 0.0
        %937 = vmatprep.subr.mxu0 0.0
        %938 = vmatpush1.msra.mxu0 0.0
        %939 = vmatprep.subr.mxu0 0.0
        %940 = vmatpush1.msra.mxu0 0.0
        %941 = vmatprep.subr.mxu0 0.0
        %942 = vmatpush1.msra.mxu0 0.0
        %943 = vmatprep.subr.mxu0 0.0
        %944 = vmatpush1.msra.mxu0 0.0
        %945 = vmatprep.subr.mxu0 0.0
        %946 = vmatpush1.msra.mxu0 0.0
        %947 = vmatprep.subr.mxu0 0.0
        %948 = vmatpush1.msra.mxu0 0.0
        %949 = vmatprep.subr.mxu0 0.0
        %950 = vmatpush1.msra.mxu0 0.0
        %951 = vmatprep.subr.mxu0 0.0
        %952 = vmatpush1.msra.mxu0 0.0
        %953 = vmatprep.subr.mxu0 0.0
        %954 = vmatpush1.msra.mxu0 0.0
        %955 = vmatprep.subr.mxu0 0.0
        %956 = vmatpush1.msra.mxu0 0.0
        %957 = vmatprep.subr.mxu0 0.0
        %958 = vmatpush1.msra.mxu0 0.0
        %959 = vmatprep.subr.mxu0 0.0
        %960 = vmatpush1.msra.mxu0 0.0
        %961 = vmatprep.subr.mxu0 0.0
        %962 = vmatpush1.msra.mxu0 0.0
        %963 = vmatprep.subr.mxu0 0.0
        %964 = vmatpush1.msra.mxu0 0.0
        %965 = vmatprep.subr.mxu0 0.0
        %966 = vmatpush1.msra.mxu0 0.0
        %967 = vmatprep.subr.mxu0 0.0
        %968 = vmatpush1.msra.mxu0 0.0
        %969 = vmatprep.subr.mxu0 0.0
        %970 = vmatpush1.msra.mxu0 0.0
        %971 = vmatprep.subr.mxu0 0.0
        %972 = vmatpush1.msra.mxu0 0.0
        %973 = vmatprep.subr.mxu0 0.0
        %974 = vmatpush1.msra.mxu0 0.0
        %975 = vmatprep.subr.mxu0 0.0
        %976 = vmatpush1.msra.mxu0 0.0
        %977 = vmatprep.subr.mxu0 0.0
        %978 = vmatpush1.msra.mxu0 0.0
        %979 = vmatprep.subr.mxu0 0.0
        %980 = vmatpush1.msra.mxu0 0.0
        %981 = vmatprep.subr.mxu0 0.0
        %982 = vmatpush1.msra.mxu0 0.0
        %983 = vmatprep.subr.mxu0 0.0
        %984 = vmatpush1.msra.mxu0 0.0
        %985 = vmatprep.mubr.f32.mxu0 0.0
        %986 = vmatmul.mubr.f32.gmra.mrb[0].mxu0 %v919
        %v987 = vpop.f32.mrb[0].mxu0
        %v988 = vadd.f32 %v915, %v987
        %v989 = vpop.f32.mrb[0].mxu0
        %990 = vdwg.mxu0
        %v991 = vld [vmem:[#allocation7] sm:$0x1]
        %v992 = vld [vmem:[#allocation8] sm:$0x1]
        %v993 = vsel %vm917, %v988, 0.0
        %994 = vadd.xlane.f32.xlu0 %v993
        %v995 = vpop.xlane.xlu0 %994
        %v996 = vmul.f32 %v988, %v988
        %v997 = vsel %vm917, %v996, 0.0
        %998 = vadd.xlane.f32.xlu0 %v997
        %v999 = vpop.xlane.xlu0 %998
        %v1000 = vmul.f32 %v995, 0.03125
        %v1001 = vmul.f32 %v999, 0.03125
        %v1002 = vmul.f32 %v1000, %v1000
        %v1003 = vsub.f32 %v1001, %v1002
        %v1004 = vadd.f32 %v1003, 1e-05
        %v1005 = vrsqrt.pop %v1004
        %v1007 = vlaneseq
        %v1008 = vshrl.u32 %v1007, 7
        %v1009 = vsub.s32 0, %v1008
        %v1010 = vrot.slane %v991, %v1009
        %v1012 = vmul.f32 %v1010, %v1005
        %v1013 = vmul.f32 %v1000, %v1012
        %v1015 = vlaneseq
        %v1016 = vshrl.u32 %v1015, 7
        %v1017 = vsub.s32 0, %v1016
        %v1018 = vrot.slane %v992, %v1017
        %v1020 = vsub.f32 %v1018, %v1013
        %v1021 = vmul.f32 %v988, %v1012
        %v1022 = vadd.f32 %v1021, %v1020
        %v1023 = vmax.f32 %v1022, 0.0
        %v1024 = vld [vmem:[%s5] sm:$0xff]
        %v1025 = vld [vmem:[%s5 + $0x8] sm:$0xff]
        %v1026 = vld [vmem:[%s5 + $0x10] sm:$0xff]
        %v1027 = vld [vmem:[%s5 + $0x18] sm:$0xff]
        %v1028 = vld [vmem:[#allocation10] sm:$0x1]
        %v1030 = vlaneseq
        %v1031 = vshrl.u32 %v1030, 7
        %v1032 = vsub.s32 0, %v1031
        %v1033 = vrot.slane %v1028, %v1032
        %1035 = vmatprep.subr.mxu0 0.0
        %1036 = vmatpush1.msra.mxu0 %v1024
        %1037 = vmatprep.subr.mxu0 0.0
        %1038 = vmatpush1.msra.mxu0 %v1025
        %1039 = vmatprep.subr.mxu0 0.0
        %1040 = vmatpush1.msra.mxu0 %v1026
        %1041 = vmatprep.subr.mxu0 0.0
        %1042 = vmatpush1.msra.mxu0 %v1027
        %1043 = vmatprep.subr.mxu0 0.0
        %1044 = vmatpush1.msra.mxu0 0.0
        %1045 = vmatprep.subr.mxu0 0.0
        %1046 = vmatpush1.msra.mxu0 0.0
        %1047 = vmatprep.subr.mxu0 0.0
        %1048 = vmatpush1.msra.mxu0 0.0
        %1049 = vmatprep.subr.mxu0 0.0
        %1050 = vmatpush1.msra.mxu0 0.0
        %1051 = vmatprep.subr.mxu0 0.0
        %1052 = vmatpush1.msra.mxu0 0.0
        %1053 = vmatprep.subr.mxu0 0.0
        %1054 = vmatpush1.msra.mxu0 0.0
        %1055 = vmatprep.subr.mxu0 0.0
        %1056 = vmatpush1.msra.mxu0 0.0
        %1057 = vmatprep.subr.mxu0 0.0
        %1058 = vmatpush1.msra.mxu0 0.0
        %1059 = vmatprep.subr.mxu0 0.0
        %1060 = vmatpush1.msra.mxu0 0.0
        %1061 = vmatprep.subr.mxu0 0.0
        %1062 = vmatpush1.msra.mxu0 0.0
        %1063 = vmatprep.subr.mxu0 0.0
        %1064 = vmatpush1.msra.mxu0 0.0
        %1065 = vmatprep.subr.mxu0 0.0
        %1066 = vmatpush1.msra.mxu0 0.0
        %1067 = vmatprep.subr.mxu0 0.0
        %1068 = vmatpush1.msra.mxu0 0.0
        %1069 = vmatprep.subr.mxu0 0.0
        %1070 = vmatpush1.msra.mxu0 0.0
        %1071 = vmatprep.subr.mxu0 0.0
        %1072 = vmatpush1.msra.mxu0 0.0
        %1073 = vmatprep.subr.mxu0 0.0
        %1074 = vmatpush1.msra.mxu0 0.0
        %1075 = vmatprep.subr.mxu0 0.0
        %1076 = vmatpush1.msra.mxu0 0.0
        %1077 = vmatprep.subr.mxu0 0.0
        %1078 = vmatpush1.msra.mxu0 0.0
        %1079 = vmatprep.subr.mxu0 0.0
        %1080 = vmatpush1.msra.mxu0 0.0
        %1081 = vmatprep.subr.mxu0 0.0
        %1082 = vmatpush1.msra.mxu0 0.0
        %1083 = vmatprep.subr.mxu0 0.0
        %1084 = vmatpush1.msra.mxu0 0.0
        %1085 = vmatprep.subr.mxu0 0.0
        %1086 = vmatpush1.msra.mxu0 0.0
        %1087 = vmatprep.subr.mxu0 0.0
        %1088 = vmatpush1.msra.mxu0 0.0
        %1089 = vmatprep.subr.mxu0 0.0
        %1090 = vmatpush1.msra.mxu0 0.0
        %1091 = vmatprep.subr.mxu0 0.0
        %1092 = vmatpush1.msra.mxu0 0.0
        %1093 = vmatprep.subr.mxu0 0.0
        %1094 = vmatpush1.msra.mxu0 0.0
        %1095 = vmatprep.subr.mxu0 0.0
        %1096 = vmatpush1.msra.mxu0 0.0
        %1097 = vmatprep.subr.mxu0 0.0
        %1098 = vmatpush1.msra.mxu0 0.0
        %1099 = vmatprep.mubr.f32.mxu0 0.0
        %1100 = vmatmul.mubr.f32.gmra.mrb[0].mxu0 %v919
        %v1101 = vpop.f32.mrb[0].mxu0
        %v1102 = vadd.f32 %v1033, %v1101
        %v1103 = vpop.f32.mrb[0].mxu0
        %1104 = vdwg.mxu0
        %v1105 = vld [vmem:[#allocation11] sm:$0x1]
        %v1106 = vld [vmem:[#allocation13] sm:$0x1]
        %v1107 = vsel %vm917, %v1102, 0.0
        %1108 = vadd.xlane.f32.xlu0 %v1107
        %v1109 = vpop.xlane.xlu0 %1108
        %v1110 = vmul.f32 %v1102, %v1102
        %v1111 = vsel %vm917, %v1110, 0.0
        %1112 = vadd.xlane.f32.xlu0 %v1111
        %v1113 = vpop.xlane.xlu0 %1112
        %v1114 = vmul.f32 %v1109, 0.03125
        %v1115 = vmul.f32 %v1113, 0.03125
        %v1116 = vmul.f32 %v1114, %v1114
        %v1117 = vsub.f32 %v1115, %v1116
        %v1118 = vadd.f32 %v1117, 1e-05
        %v1119 = vrsqrt.pop %v1118
        %v1121 = vlaneseq
        %v1122 = vshrl.u32 %v1121, 7
        %v1123 = vsub.s32 0, %v1122
        %v1124 = vrot.slane %v1105, %v1123
        %v1126 = vmul.f32 %v1124, %v1119
        %v1127 = vmul.f32 %v1114, %v1126
        %v1129 = vlaneseq
        %v1130 = vshrl.u32 %v1129, 7
        %v1131 = vsub.s32 0, %v1130
        %v1132 = vrot.slane %v1106, %v1131
        %v1134 = vsub.f32 %v1132, %v1127
        %v1135 = vmul.f32 %v1102, %v1126
        %v1136 = vadd.f32 %v1135, %v1134
        %v1137 = vmax.f32 %v1136, 0.0
        %v1138 = vld [vmem:[#allocation14] sm:$0xff]
        %v1139 = vld [vmem:[#allocation14 + $0x8] sm:$0xff]
        %v1140 = vld [vmem:[#allocation14 + $0x10] sm:$0xff]
        %v1141 = vld [vmem:[#allocation14 + $0x18] sm:$0xff]
        %v1142 = vld [vmem:[#allocation16] sm:$0x1]
        %v1144 = vlaneseq
        %v1145 = vshrl.u32 %v1144, 7
        %v1146 = vsub.s32 0, %v1145
        %v1147 = vrot.slane %v1142, %v1146
        %1149 = vmatprep.subr.mxu0 0.0
        %1150 = vmatpush1.msra.mxu0 %v1138
        %1151 = vmatprep.subr.mxu0 0.0
        %1152 = vmatpush1.msra.mxu0 %v1139
        %1153 = vmatprep.subr.mxu0 0.0
        %1154 = vmatpush1.msra.mxu0 %v1140
        %1155 = vmatprep.subr.mxu0 0.0
        %1156 = vmatpush1.msra.mxu0 %v1141
        %1157 = vmatprep.subr.mxu0 0.0
        %1158 = vmatpush1.msra.mxu0 0.0
        %1159 = vmatprep.subr.mxu0 0.0
        %1160 = vmatpush1.msra.mxu0 0.0
        %1161 = vmatprep.subr.mxu0 0.0
        %1162 = vmatpush1.msra.mxu0 0.0
        %1163 = vmatprep.subr.mxu0 0.0
        %1164 = vmatpush1.msra.mxu0 0.0
        %1165 = vmatprep.subr.mxu0 0.0
        %1166 = vmatpush1.msra.mxu0 0.0
        %1167 = vmatprep.subr.mxu0 0.0
        %1168 = vmatpush1.msra.mxu0 0.0
        %1169 = vmatprep.subr.mxu0 0.0
        %1170 = vmatpush1.msra.mxu0 0.0
        %1171 = vmatprep.subr.mxu0 0.0
        %1172 = vmatpush1.msra.mxu0 0.0
        %1173 = vmatprep.subr.mxu0 0.0
        %1174 = vmatpush1.msra.mxu0 0.0
        %1175 = vmatprep.subr.mxu0 0.0
        %1176 = vmatpush1.msra.mxu0 0.0
        %1177 = vmatprep.subr.mxu0 0.0
        %1178 = vmatpush1.msra.mxu0 0.0
        %1179 = vmatprep.subr.mxu0 0.0
        %1180 = vmatpush1.msra.mxu0 0.0
        %1181 = vmatprep.subr.mxu0 0.0
        %1182 = vmatpush1.msra.mxu0 0.0
        %1183 = vmatprep.subr.mxu0 0.0
        %1184 = vmatpush1.msra.mxu0 0.0
        %1185 = vmatprep.subr.mxu0 0.0
        %1186 = vmatpush1.msra.mxu0 0.0
        %1187 = vmatprep.subr.mxu0 0.0
        %1188 = vmatpush1.msra.mxu0 0.0
        %1189 = vmatprep.subr.mxu0 0.0
        %1190 = vmatpush1.msra.mxu0 0.0
        %1191 = vmatprep.subr.mxu0 0.0
        %1192 = vmatpush1.msra.mxu0 0.0
        %1193 = vmatprep.subr.mxu0 0.0
        %1194 = vmatpush1.msra.mxu0 0.0
        %1195 = vmatprep.subr.mxu0 0.0
        %1196 = vmatpush1.msra.mxu0 0.0
        %1197 = vmatprep.subr.mxu0 0.0
        %1198 = vmatpush1.msra.mxu0 0.0
        %1199 = vmatprep.subr.mxu0 0.0
        %1200 = vmatpush1.msra.mxu0 0.0
        %1201 = vmatprep.subr.mxu0 0.0
        %1202 = vmatpush1.msra.mxu0 0.0
        %1203 = vmatprep.subr.mxu0 0.0
        %1204 = vmatpush1.msra.mxu0 0.0
        %1205 = vmatprep.subr.mxu0 0.0
        %1206 = vmatpush1.msra.mxu0 0.0
        %1207 = vmatprep.subr.mxu0 0.0
        %1208 = vmatpush1.msra.mxu0 0.0
        %1209 = vmatprep.subr.mxu0 0.0
        %1210 = vmatpush1.msra.mxu0 0.0
        %1211 = vmatprep.subr.mxu0 0.0
        %1212 = vmatpush1.msra.mxu0 0.0
        %1213 = vmatprep.mubr.f32.mxu0 0.0
        %1214 = vmatmul.mubr.f32.gmra.mrb[0].mxu0 %v919
        %v1215 = vpop.f32.mrb[0].mxu0
        %v1216 = vadd.f32 %v1147, %v1215
        %v1217 = vpop.f32.mrb[0].mxu0
        %1218 = vdwg.mxu0
        %v1219 = vld [vmem:[#allocation17] sm:$0x1]
        %v1220 = vld [vmem:[%s12] sm:$0x1]
        %v1221 = vsel %vm917, %v1216, 0.0
        %1222 = vadd.xlane.f32.xlu0 %v1221
        %v1223 = vpop.xlane.xlu0 %1222
        %v1224 = vmul.f32 %v1216, %v1216
        %v1225 = vsel %vm917, %v1224, 0.0
        %1226 = vadd.xlane.f32.xlu0 %v1225
        %v1227 = vpop.xlane.xlu0 %1226
        %v1228 = vmul.f32 %v1223, 0.03125
        %v1229 = vmul.f32 %v1227, 0.03125
        %v1230 = vmul.f32 %v1228, %v1228
        %v1231 = vsub.f32 %v1229, %v1230
        %v1232 = vadd.f32 %v1231, 1e-05
        %v1233 = vrsqrt.pop %v1232
        %v1235 = vlaneseq
        %v1236 = vshrl.u32 %v1235, 7
        %v1237 = vsub.s32 0, %v1236
        %v1238 = vrot.slane %v1219, %v1237
        %v1240 = vmul.f32 %v1238, %v1233
        %v1241 = vmul.f32 %v1228, %v1240
        %v1243 = vlaneseq
        %v1244 = vshrl.u32 %v1243, 7
        %v1245 = vsub.s32 0, %v1244
        %v1246 = vrot.slane %v1220, %v1245
        %v1248 = vsub.f32 %v1246, %v1241
        %v1249 = vmul.f32 %v1216, %v1240
        %v1250 = vadd.f32 %v1249, %v1248
        %v1251 = vmax.f32 %v1250, 0.0
        %v1252 = vld [vmem:[%s13] sm:$0xff]
        %v1253 = vld [vmem:[%s13 + $0x8] sm:$0xff]
        %v1254 = vld [vmem:[%s13 + $0x10] sm:$0xff]
        %v1255 = vld [vmem:[%s13 + $0x18] sm:$0xff]
        %v1256 = vld [vmem:[%s14] sm:$0x1]
        %v1257 = vld [vmem:[#allocation19] sm:$0x1]
        %v1258 = vld [vmem:[#allocation20] sm:$0x1]
        %v1259 = vld [vmem:[#allocation22] sm:$0xff]
        %v1260 = vld [vmem:[#allocation23] sm:$0x1]
        %v1261 = vld [vmem:[%s19] sm:$0xff]
        %v1262 = vld [vmem:[%s19 + $0x8] sm:$0xff]
        %v1263 = vld [vmem:[#allocation25] sm:$0x1]
        %v1264 = vld [vmem:[%s21] sm:$0xff]
        %v1265 = vld [vmem:[%s21 + $0x8] sm:$0xff]
        %v1266 = vld [vmem:[%s21 + $0x10] sm:$0xff]
        %v1267 = vld [vmem:[%s21 + $0x18] sm:$0xff]
        %v1268 = vld [vmem:[%s22] sm:$0x1]
        %v1269 = vand.u32 2147483647, %v1023
        %vm1270 = vcmp.le.f32.partialorder %v1269, 0.7853982
        %vm1271 = vcmp.lt.s32.totalorder %v1023, 0
        %v1272 = vand.u32 %v1023, 2139095040
        %v1273 = vshrl.u32 %v1272, 23
        %v1274 = vsub.s32 %v1273, 127
        %v1275 = vand.u32 2147483647, %v1023
        %v1276 = vand.u32 %v1275, 8388607
        %v1277 = vor.u32 %v1276, 8388608
        %v1278 = vsub.s32 0, %v1277
        %v1279 = vadd.s32 %v1274, 1
        %vm1280 = vcmp.gt.s32.totalorder %v1279, 0
        %v1281 = vsel %vm1280, %v1279, 0
        %v1282 = vshrl.u32 %v1281, 5
        %v1283 = vand.u32 %v1281, 31
        %v1284 = vsub.s32 32, %v1283
        %v1285 = vshrl.u32 683565275, %v1284
        %v1286 = vshll.u32 683565275, %v1283
        %v1287 = vshrl.u32 2475754826, %v1284
        %v1288 = vor.u32 %v1286, %v1287
        %v1289 = vshll.u32 2475754826, %v1283
        %v1290 = vshrl.u32 2131351028, %v1284
        %v1291 = vor.u32 %v1289, %v1290
        %v1292 = vshll.u32 2131351028, %v1283
        %v1293 = vshrl.u32 2102212464, %v1284
        %v1294 = vor.u32 %v1292, %v1293
        %v1295 = vshll.u32 2102212464, %v1283
        %v1296 = vshrl.u32 920167782, %v1284
        %v1297 = vor.u32 %v1295, %v1296
        %v1298 = vshll.u32 920167782, %v1283
        %v1299 = vshrl.u32 1326507024, %v1284
        %v1300 = vor.u32 %v1298, %v1299
        %vm1301 = vcmp.lt.s32.totalorder %v1282, 1
        %vm1302 = vcmp.lt.s32.totalorder %v1282, 2
        %vm1303 = vcmp.lt.s32.totalorder %v1282, 3
        %vm1304 = vcmp.lt.s32.totalorder %v1282, 4
        %v1305 = vsel %vm1301, %v1285, %v1288
        %v1306 = vsel %vm1304, %v1294, 2102212464
        %v1307 = vsel %vm1303, %v1291, %v1306
        %v1308 = vsel %vm1302, %v1305, %v1307
        %v1309 = vsel %vm1301, %v1288, %v1291
        %v1310 = vsel %vm1304, %v1297, 920167782
        %v1311 = vsel %vm1303, %v1294, %v1310
        %v1312 = vsel %vm1302, %v1309, %v1311
        %v1313 = vsel %vm1301, %v1291, %v1294
        %v1314 = vsel %vm1304, %v1300, 1326507024
        %v1315 = vsel %vm1303, %v1297, %v1314
        %v1316 = vsel %vm1302, %v1313, %v1315
        %v1317 = vshll.u32 %v1277, 8
        %v1318 = vmul.u32.u64.compose %v1317, %v1316
        %v1319 = vextract.low.u32 %v1318
        %v1320 = vextract.high.u32 %v1318
        %v1321 = vmul.u32.u64.compose %v1317, %v1312
        %v1322 = vextract.low.u32 %v1321
        %v1323 = vextract.high.u32 %v1321
        %v1324 = vmul.u32 %v1317, %v1308
        %v1325 = vadd.s32 %v1320, %v1322
        %vm1326 = vc.u32 %v1320, %v1322
        %v1327 = vadd.s32 %v1323, 1
        %v1328 = vsel %vm1326, %v1327, %v1323
        %v1329 = vadd.s32 %v1324, %v1328
        %v1330 = vadd.s32 %v1329, 536870912
        %v1331 = vshrl.u32 %v1330, 30
        %v1332 = vshll.u32 %v1331, 30
        %v1333 = vsub.s32 %v1329, %v1332
        %vm1334 = vcmp.lt.s32.totalorder %v1333, 0
        %v1335 = vsub.s32 0, %v1333
        %v1336 = vsel %vm1334, %v1335, %v1333
        %v1337 = vclz %v1336
        %v1338 = vsub.s32 %v1337, 2
        %vm1339 = vcmp.gt.s32.totalorder 0, %v1338
        %v1340 = vsel %vm1339, 0, %v1338
        %v1341 = vsub.s32 32, %v1340
        %v1342 = vshll.u32 %v1333, %v1340
        %v1343 = vshrl.u32 %v1325, %v1341
        %v1344 = vor.u32 %v1342, %v1343
        %v1345 = vsub.s32 4294967266, %v1340
        %v1346 = vadd.s32 %v1345, 127
        %v1347 = vshll.u32 %v1346, 23
        %v1348 = vor.u32 4788187, %v1347
        %v1349 = vand.u32 2147483647, %v1348
        %v1351 = vcvt.s32.f32 %v1344
        %v1352 = vmul.f32 %v1351, %v1349
        %v1353 = vxor.u32 %v1352, 2147483648
        %v1354 = vsel %vm1271, %v1353, %v1352
        %v1355 = vsub.s32 4, %v1331
        %v1356 = vsel %vm1271, %v1355, %v1331
        %v1357 = vsel %vm1270, %v1023, %v1354
        %v1358 = vsel %vm1270, 0, %v1356
        %v1359 = vcosq.f32.pop %v1357
        %v1360 = vsinq.f32.pop %v1357
        %vm1361 = vweird.f32 %v1023
        %v1362 = vand.u32 %v1358, 3
        %vm1363 = vcmp.lt.s32.totalorder %v1362, 2
        %vm1364 = vcmp.eq.s32.totalorder %v1362, 0
        %v1365 = vxor.u32 %v1360, 2147483648
        %v1366 = vsel %vm1364, %v1359, %v1365
        %vm1367 = vcmp.eq.s32.totalorder %v1362, 2
        %v1368 = vxor.u32 %v1359, 2147483648
        %v1369 = vsel %vm1367, %v1368, %v1360
        %v1370 = vsel %vm1363, %v1366, %v1369
        %v1371 = vsel %vm1361, nan, %v1370
        %v1372 = vmul.f32 %v1137, %v1371
        %v1373 = vand.u32 2147483647, %v1023
        %vm1374 = vcmp.le.f32.partialorder %v1373, 0.7853982
        %vm1375 = vcmp.lt.s32.totalorder %v1023, 0
        %v1376 = vand.u32 %v1023, 2139095040
        %v1377 = vshrl.u32 %v1376, 23
        %v1378 = vsub.s32 %v1377, 127
        %v1379 = vand.u32 2147483647, %v1023
        %v1380 = vand.u32 %v1379, 8388607
        %v1381 = vor.u32 %v1380, 8388608
        %v1382 = vsub.s32 0, %v1381
        %v1383 = vadd.s32 %v1378, 1
        %vm1384 = vcmp.gt.s32.totalorder %v1383, 0
        %v1385 = vsel %vm1384, %v1383, 0
        %v1386 = vshrl.u32 %v1385, 5
        %v1387 = vand.u32 %v1385, 31
        %v1388 = vsub.s32 32, %v1387
        %v1389 = vshrl.u32 683565275, %v1388
        %v1390 = vshll.u32 683565275, %v1387
        %v1391 = vshrl.u32 2475754826, %v1388
        %v1392 = vor.u32 %v1390, %v1391
        %v1393 = vshll.u32 2475754826, %v1387
        %v1394 = vshrl.u32 2131351028, %v1388
        %v1395 = vor.u32 %v1393, %v1394
        %v1396 = vshll.u32 2131351028, %v1387
        %v1397 = vshrl.u32 2102212464, %v1388
        %v1398 = vor.u32 %v1396, %v1397
        %v1399 = vshll.u32 2102212464, %v1387
        %v1400 = vshrl.u32 920167782, %v1388
        %v1401 = vor.u32 %v1399, %v1400
        %v1402 = vshll.u32 920167782, %v1387
        %v1403 = vshrl.u32 1326507024, %v1388
        %v1404 = vor.u32 %v1402, %v1403
        %vm1405 = vcmp.lt.s32.totalorder %v1386, 1
        %vm1406 = vcmp.lt.s32.totalorder %v1386, 2
        %vm1407 = vcmp.lt.s32.totalorder %v1386, 3
        %vm1408 = vcmp.lt.s32.totalorder %v1386, 4
        %v1409 = vsel %vm1405, %v1389, %v1392
        %v1410 = vsel %vm1408, %v1398, 2102212464
        %v1411 = vsel %vm1407, %v1395, %v1410
        %v1412 = vsel %vm1406, %v1409, %v1411
        %v1413 = vsel %vm1405, %v1392, %v1395
        %v1414 = vsel %vm1408, %v1401, 920167782
        %v1415 = vsel %vm1407, %v1398, %v1414
        %v1416 = vsel %vm1406, %v1413, %v1415
        %v1417 = vsel %vm1405, %v1395, %v1398
        %v1418 = vsel %vm1408, %v1404, 1326507024
        %v1419 = vsel %vm1407, %v1401, %v1418
        %v1420 = vsel %vm1406, %v1417, %v1419
        %v1421 = vshll.u32 %v1381, 8
        %v1422 = vmul.u32.u64.compose %v1421, %v1420
        %v1423 = vextract.low.u32 %v1422
        %v1424 = vextract.high.u32 %v1422
        %v1425 = vmul.u32.u64.compose %v1421, %v1416
        %v1426 = vextract.low.u32 %v1425
        %v1427 = vextract.high.u32 %v1425
        %v1428 = vmul.u32 %v1421, %v1412
        %v1429 = vadd.s32 %v1424, %v1426
        %vm1430 = vc.u32 %v1424, %v1426
        %v1431 = vadd.s32 %v1427, 1
        %v1432 = vsel %vm1430, %v1431, %v1427
        %v1433 = vadd.s32 %v1428, %v1432
        %v1434 = vadd.s32 %v1433, 536870912
        %v1435 = vshrl.u32 %v1434, 30
        %v1436 = vshll.u32 %v1435, 30
        %v1437 = vsub.s32 %v1433, %v1436
        %vm1438 = vcmp.lt.s32.totalorder %v1437, 0
        %v1439 = vsub.s32 0, %v1437
        %v1440 = vsel %vm1438, %v1439, %v1437
        %v1441 = vclz %v1440
        %v1442 = vsub.s32 %v1441, 2
        %vm1443 = vcmp.gt.s32.totalorder 0, %v1442
        %v1444 = vsel %vm1443, 0, %v1442
        %v1445 = vsub.s32 32, %v1444
        %v1446 = vshll.u32 %v1437, %v1444
        %v1447 = vshrl.u32 %v1429, %v1445
        %v1448 = vor.u32 %v1446, %v1447
        %v1449 = vsub.s32 4294967266, %v1444
        %v1450 = vadd.s32 %v1449, 127
        %v1451 = vshll.u32 %v1450, 23
        %v1452 = vor.u32 4788187, %v1451
        %v1453 = vand.u32 2147483647, %v1452
        %v1455 = vcvt.s32.f32 %v1448
        %v1456 = vmul.f32 %v1455, %v1453
        %v1457 = vxor.u32 %v1456, 2147483648
        %v1458 = vsel %vm1375, %v1457, %v1456
        %v1459 = vsub.s32 4, %v1435
        %v1460 = vsel %vm1375, %v1459, %v1435
        %v1461 = vsel %vm1374, %v1023, %v1458
        %v1462 = vsel %vm1374, 0, %v1460
        %v1463 = vcosq.f32.pop %v1461
        %v1464 = vsinq.f32.pop %v1461
        %vm1465 = vweird.f32 %v1023
        %v1466 = vadd.s32 %v1462, 3
        %v1467 = vand.u32 %v1466, 3
        %vm1468 = vcmp.lt.s32.totalorder %v1467, 2
        %vm1469 = vcmp.eq.s32.totalorder %v1467, 0
        %v1470 = vxor.u32 %v1464, 2147483648
        %v1471 = vsel %vm1469, %v1463, %v1470
        %vm1472 = vcmp.eq.s32.totalorder %v1467, 2
        %v1473 = vxor.u32 %v1463, 2147483648
        %v1474 = vsel %vm1472, %v1473, %v1464
        %v1475 = vsel %vm1468, %v1471, %v1474
        %v1476 = vsel %vm1465, nan, %v1475
        %v1477 = vmul.f32 %v1251, %v1476
        %v1478 = vadd.f32 %v1372, %v1477
        %v1480 = vlaneseq
        %v1481 = vshrl.u32 %v1480, 7
        %v1482 = vsub.s32 0, %v1481
        %v1483 = vrot.slane %v1256, %v1482
        %v1486 = vsel %vm917, %v1478, 0
        %1488 = vmatprep.subr.mxu0 0.0
        %1489 = vmatpush1.msra.mxu0 %v1252
        %1490 = vmatprep.subr.mxu0 0.0
        %1491 = vmatpush1.msra.mxu0 %v1253
        %1492 = vmatprep.subr.mxu0 0.0
        %1493 = vmatpush1.msra.mxu0 %v1254
        %1494 = vmatprep.subr.mxu0 0.0
        %1495 = vmatpush1.msra.mxu0 %v1255
        %1496 = vmatprep.subr.mxu0 0.0
        %1497 = vmatpush1.msra.mxu0 0.0
        %1498 = vmatprep.subr.mxu0 0.0
        %1499 = vmatpush1.msra.mxu0 0.0
        %1500 = vmatprep.subr.mxu0 0.0
        %1501 = vmatpush1.msra.mxu0 0.0
        %1502 = vmatprep.subr.mxu0 0.0
        %1503 = vmatpush1.msra.mxu0 0.0
        %1504 = vmatprep.subr.mxu0 0.0
        %1505 = vmatpush1.msra.mxu0 0.0
        %1506 = vmatprep.subr.mxu0 0.0
        %1507 = vmatpush1.msra.mxu0 0.0
        %1508 = vmatprep.subr.mxu0 0.0
        %1509 = vmatpush1.msra.mxu0 0.0
        %1510 = vmatprep.subr.mxu0 0.0
        %1511 = vmatpush1.msra.mxu0 0.0
        %1512 = vmatprep.subr.mxu0 0.0
        %1513 = vmatpush1.msra.mxu0 0.0
        %1514 = vmatprep.subr.mxu0 0.0
        %1515 = vmatpush1.msra.mxu0 0.0
        %1516 = vmatprep.subr.mxu0 0.0
        %1517 = vmatpush1.msra.mxu0 0.0
        %1518 = vmatprep.subr.mxu0 0.0
        %1519 = vmatpush1.msra.mxu0 0.0
        %1520 = vmatprep.subr.mxu0 0.0
        %1521 = vmatpush1.msra.mxu0 0.0
        %1522 = vmatprep.subr.mxu0 0.0
        %1523 = vmatpush1.msra.mxu0 0.0
        %1524 = vmatprep.subr.mxu0 0.0
        %1525 = vmatpush1.msra.mxu0 0.0
        %1526 = vmatprep.subr.mxu0 0.0
        %1527 = vmatpush1.msra.mxu0 0.0
        %1528 = vmatprep.subr.mxu0 0.0
        %1529 = vmatpush1.msra.mxu0 0.0
        %1530 = vmatprep.subr.mxu0 0.0
        %1531 = vmatpush1.msra.mxu0 0.0
        %1532 = vmatprep.subr.mxu0 0.0
        %1533 = vmatpush1.msra.mxu0 0.0
        %1534 = vmatprep.subr.mxu0 0.0
        %1535 = vmatpush1.msra.mxu0 0.0
        %1536 = vmatprep.subr.mxu0 0.0
        %1537 = vmatpush1.msra.mxu0 0.0
        %1538 = vmatprep.subr.mxu0 0.0
        %1539 = vmatpush1.msra.mxu0 0.0
        %1540 = vmatprep.subr.mxu0 0.0
        %1541 = vmatpush1.msra.mxu0 0.0
        %1542 = vmatprep.subr.mxu0 0.0
        %1543 = vmatpush1.msra.mxu0 0.0
        %1544 = vmatprep.subr.mxu0 0.0
        %1545 = vmatpush1.msra.mxu0 0.0
        %1546 = vmatprep.subr.mxu0 0.0
        %1547 = vmatpush1.msra.mxu0 0.0
        %1548 = vmatprep.subr.mxu0 0.0
        %1549 = vmatpush1.msra.mxu0 0.0
        %1550 = vmatprep.subr.mxu0 0.0
        %1551 = vmatpush1.msra.mxu0 0.0
        %1552 = vmatprep.mubr.f32.mxu0 0.0
        %1553 = vmatmul.mubr.f32.gmra.mrb[0].mxu0 %v1486
        %v1554 = vpop.f32.mrb[0].mxu0
        %v1555 = vadd.f32 %v1483, %v1554
        %v1556 = vpop.f32.mrb[0].mxu0
        %1557 = vdwg.mxu0
        %v1558 = vsel %vm917, %v1555, 0.0
        %1559 = vadd.xlane.f32.xlu0 %v1558
        %v1560 = vpop.xlane.xlu0 %1559
        %v1561 = vmul.f32 %v1555, %v1555
        %v1562 = vsel %vm917, %v1561, 0.0
        %1563 = vadd.xlane.f32.xlu0 %v1562
        %v1564 = vpop.xlane.xlu0 %1563
        %v1565 = vmul.f32 %v1560, 0.03125
        %v1566 = vmul.f32 %v1564, 0.03125
        %v1567 = vmul.f32 %v1565, %v1565
        %v1568 = vsub.f32 %v1566, %v1567
        %v1569 = vadd.f32 %v1568, 1e-05
        %v1570 = vrsqrt.pop %v1569
        %v1572 = vlaneseq
        %v1573 = vshrl.u32 %v1572, 7
        %v1574 = vsub.s32 0, %v1573
        %v1575 = vrot.slane %v1257, %v1574
        %v1577 = vmul.f32 %v1575, %v1570
        %v1578 = vmul.f32 %v1565, %v1577
        %v1580 = vlaneseq
        %v1581 = vshrl.u32 %v1580, 7
        %v1582 = vsub.s32 0, %v1581
        %v1583 = vrot.slane %v1258, %v1582
        %v1585 = vsub.f32 %v1583, %v1578
        %v1586 = vmul.f32 %v1555, %v1577
        %v1587 = vadd.f32 %v1586, %v1585
        %v1588 = vmax.f32 %v1587, 0.0
        %v1589 = vsel %vm917, %v1588, 0.0
        %1590 = vadd.xlane.f32.xlu0 %v1589
        %v1591 = vpop.xlane.xlu0 %1590
        %v1592 = vrcp.pop 32.0
        %v1593 = vmul.f32 %v1591, %v1592
        %v1595 = vlaneseq
        %v1596 = vand.u32 %v1595, 127
        %v1597 = vlaneseq
        %v1598 = vshrl.u32 %v1597, 7
        %v1599 = vsub.s32 %v1596, %v1598
        %v1600 = vrot.slane %v1593, %v1599
        %vm1601 = vcmask 64512
        %v1602 = vsel %vm1601, %v1600, 0
        %1604 = vmatprep.subr.mxu0 0.0
        %1605 = vmatpush1.msra.mxu0 %v1259
        %1606 = vmatprep.subr.mxu0 0.0
        %1607 = vmatpush1.msra.mxu0 0.0
        %1608 = vmatprep.subr.mxu0 0.0
        %1609 = vmatpush1.msra.mxu0 0.0
        %1610 = vmatprep.subr.mxu0 0.0
        %1611 = vmatpush1.msra.mxu0 0.0
        %1612 = vmatprep.subr.mxu0 0.0
        %1613 = vmatpush1.msra.mxu0 0.0
        %1614 = vmatprep.subr.mxu0 0.0
        %1615 = vmatpush1.msra.mxu0 0.0
        %1616 = vmatprep.subr.mxu0 0.0
        %1617 = vmatpush1.msra.mxu0 0.0
        %1618 = vmatprep.subr.mxu0 0.0
        %1619 = vmatpush1.msra.mxu0 0.0
        %1620 = vmatprep.subr.mxu0 0.0
        %1621 = vmatpush1.msra.mxu0 0.0
        %1622 = vmatprep.subr.mxu0 0.0
        %1623 = vmatpush1.msra.mxu0 0.0
        %1624 = vmatprep.subr.mxu0 0.0
        %1625 = vmatpush1.msra.mxu0 0.0
        %1626 = vmatprep.subr.mxu0 0.0
        %1627 = vmatpush1.msra.mxu0 0.0
        %1628 = vmatprep.subr.mxu0 0.0
        %1629 = vmatpush1.msra.mxu0 0.0
        %1630 = vmatprep.subr.mxu0 0.0
        %1631 = vmatpush1.msra.mxu0 0.0
        %1632 = vmatprep.subr.mxu0 0.0
        %1633 = vmatpush1.msra.mxu0 0.0
        %1634 = vmatprep.subr.mxu0 0.0
        %1635 = vmatpush1.msra.mxu0 0.0
        %1636 = vmatprep.subr.mxu0 0.0
        %1637 = vmatpush1.msra.mxu0 0.0
        %1638 = vmatprep.subr.mxu0 0.0
        %1639 = vmatpush1.msra.mxu0 0.0
        %1640 = vmatprep.subr.mxu0 0.0
        %1641 = vmatpush1.msra.mxu0 0.0
        %1642 = vmatprep.subr.mxu0 0.0
        %1643 = vmatpush1.msra.mxu0 0.0
        %1644 = vmatprep.subr.mxu0 0.0
        %1645 = vmatpush1.msra.mxu0 0.0
        %1646 = vmatprep.subr.mxu0 0.0
        %1647 = vmatpush1.msra.mxu0 0.0
        %1648 = vmatprep.subr.mxu0 0.0
        %1649 = vmatpush1.msra.mxu0 0.0
        %1650 = vmatprep.subr.mxu0 0.0
        %1651 = vmatpush1.msra.mxu0 0.0
        %1652 = vmatprep.subr.mxu0 0.0
        %1653 = vmatpush1.msra.mxu0 0.0
        %1654 = vmatprep.subr.mxu0 0.0
        %1655 = vmatpush1.msra.mxu0 0.0
        %1656 = vmatprep.subr.mxu0 0.0
        %1657 = vmatpush1.msra.mxu0 0.0
        %1658 = vmatprep.subr.mxu0 0.0
        %1659 = vmatpush1.msra.mxu0 0.0
        %1660 = vmatprep.subr.mxu0 0.0
        %1661 = vmatpush1.msra.mxu0 0.0
        %1662 = vmatprep.subr.mxu0 0.0
        %1663 = vmatpush1.msra.mxu0 0.0
        %1664 = vmatprep.subr.mxu0 0.0
        %1665 = vmatpush1.msra.mxu0 0.0
        %1666 = vmatprep.subr.mxu0 0.0
        %1667 = vmatpush1.msra.mxu0 0.0
        %1668 = vmatprep.mubr.f32.mxu0 0.0
        %1669 = vmatmul.mubr.f32.gmra.mrb[0].mxu0 %v1602
        %v1670 = vpop.f32.mrb[0].mxu0
        %v1671 = vadd.f32 %v1260, %v1670
        %v1672 = vpop.f32.mrb[0].mxu0
        %1673 = vdwg.mxu0
        %v1674 = vmax.f32 %v1671, 0.0
        %vm1675 = vcmask 130048
        %v1677 = vsel %vm1675, %v1674, 0
        %1679 = vmatprep.subr.mxu0 0.0
        %1680 = vmatpush1.msra.mxu0 %v1261
        %1681 = vmatprep.subr.mxu0 0.0
        %1682 = vmatpush1.msra.mxu0 %v1262
        %1683 = vmatprep.subr.mxu0 0.0
        %1684 = vmatpush1.msra.mxu0 0.0
        %1685 = vmatprep.subr.mxu0 0.0
        %1686 = vmatpush1.msra.mxu0 0.0
        %1687 = vmatprep.subr.mxu0 0.0
        %1688 = vmatpush1.msra.mxu0 0.0
        %1689 = vmatprep.subr.mxu0 0.0
        %1690 = vmatpush1.msra.mxu0 0.0
        %1691 = vmatprep.subr.mxu0 0.0
        %1692 = vmatpush1.msra.mxu0 0.0
        %1693 = vmatprep.subr.mxu0 0.0
        %1694 = vmatpush1.msra.mxu0 0.0
        %1695 = vmatprep.subr.mxu0 0.0
        %1696 = vmatpush1.msra.mxu0 0.0
        %1697 = vmatprep.subr.mxu0 0.0
        %1698 = vmatpush1.msra.mxu0 0.0
        %1699 = vmatprep.subr.mxu0 0.0
        %1700 = vmatpush1.msra.mxu0 0.0
        %1701 = vmatprep.subr.mxu0 0.0
        %1702 = vmatpush1.msra.mxu0 0.0
        %1703 = vmatprep.subr.mxu0 0.0
        %1704 = vmatpush1.msra.mxu0 0.0
        %1705 = vmatprep.subr.mxu0 0.0
        %1706 = vmatpush1.msra.mxu0 0.0
        %1707 = vmatprep.subr.mxu0 0.0
        %1708 = vmatpush1.msra.mxu0 0.0
        %1709 = vmatprep.subr.mxu0 0.0
        %1710 = vmatpush1.msra.mxu0 0.0
        %1711 = vmatprep.subr.mxu0 0.0
        %1712 = vmatpush1.msra.mxu0 0.0
        %1713 = vmatprep.subr.mxu0 0.0
        %1714 = vmatpush1.msra.mxu0 0.0
        %1715 = vmatprep.subr.mxu0 0.0
        %1716 = vmatpush1.msra.mxu0 0.0
        %1717 = vmatprep.subr.mxu0 0.0
        %1718 = vmatpush1.msra.mxu0 0.0
        %1719 = vmatprep.subr.mxu0 0.0
        %1720 = vmatpush1.msra.mxu0 0.0
        %1721 = vmatprep.subr.mxu0 0.0
        %1722 = vmatpush1.msra.mxu0 0.0
        %1723 = vmatprep.subr.mxu0 0.0
        %1724 = vmatpush1.msra.mxu0 0.0
        %1725 = vmatprep.subr.mxu0 0.0
        %1726 = vmatpush1.msra.mxu0 0.0
        %1727 = vmatprep.subr.mxu0 0.0
        %1728 = vmatpush1.msra.mxu0 0.0
        %1729 = vmatprep.subr.mxu0 0.0
        %1730 = vmatpush1.msra.mxu0 0.0
        %1731 = vmatprep.subr.mxu0 0.0
        %1732 = vmatpush1.msra.mxu0 0.0
        %1733 = vmatprep.subr.mxu0 0.0
        %1734 = vmatpush1.msra.mxu0 0.0
        %1735 = vmatprep.subr.mxu0 0.0
        %1736 = vmatpush1.msra.mxu0 0.0
        %1737 = vmatprep.subr.mxu0 0.0
        %1738 = vmatpush1.msra.mxu0 0.0
        %1739 = vmatprep.subr.mxu0 0.0
        %1740 = vmatpush1.msra.mxu0 0.0
        %1741 = vmatprep.subr.mxu0 0.0
        %1742 = vmatpush1.msra.mxu0 0.0
        %1743 = vmatprep.mubr.f32.mxu0 0.0
        %1744 = vmatmul.mubr.f32.gmra.mrb[0].mxu0 %v1677
        %v1745 = vpop.f32.mrb[0].mxu0
        %v1746 = vadd.f32 %v1263, %v1745
        %v1747 = vpop.f32.mrb[0].mxu0
        %1748 = vdwg.mxu0
        %vm1749 = vcmask 57344
        %v1750 = vsel %vm1749, %v1746, -inf
        %1751 = vmax.xlane.f32.xlu0 %v1750
        %v1752 = vpop.xlane.xlu0 %1751
        %v1753 = vsub.f32 %v1746, %v1752
        %v1754 = vmul.f32 %v1753, 1.442695
        %v1755 = vpow.pop %v1754
        %v1756 = vsel %vm1749, %v1755, 0.0
        %1757 = vadd.xlane.f32.xlu0 %v1756
        %v1758 = vpop.xlane.xlu0 %1757
        %v1759 = vrcp.pop %v1758
        %v1760 = vmul.f32 %v1755, %v1759
        %v1761 = vlaneseq
        %v1762 = vshrl.u32 %v1761, 7
        %v1763 = vsub.s32 0, %v1762
        %v1764 = vrot.slane %v1760, %v1763
        %1766 = vbcast.lane.b32.xlu0 %v1764, 256
        %v1767 = vpop.permute.xlu0 %1766
        %v1768 = vmul.f32 %v1588, %v1767
        %v1770 = vlaneseq
        %v1771 = vshrl.u32 %v1770, 7
        %v1772 = vsub.s32 0, %v1771
        %v1773 = vrot.slane %v1268, %v1772
        %v1776 = vsel %vm917, %v1768, 0
        %1778 = vmatprep.subr.mxu0 0.0
        %1779 = vmatpush1.msra.mxu0 %v1264
        %1780 = vmatprep.subr.mxu0 0.0
        %1781 = vmatpush1.msra.mxu0 %v1265
        %1782 = vmatprep.subr.mxu0 0.0
        %1783 = vmatpush1.msra.mxu0 %v1266
        %1784 = vmatprep.subr.mxu0 0.0
        %1785 = vmatpush1.msra.mxu0 %v1267
        %1786 = vmatprep.subr.mxu0 0.0
        %1787 = vmatpush1.msra.mxu0 0.0
        %1788 = vmatprep.subr.mxu0 0.0
        %1789 = vmatpush1.msra.mxu0 0.0
        %1790 = vmatprep.subr.mxu0 0.0
        %1791 = vmatpush1.msra.mxu0 0.0
        %1792 = vmatprep.subr.mxu0 0.0
        %1793 = vmatpush1.msra.mxu0 0.0
        %1794 = vmatprep.subr.mxu0 0.0
        %1795 = vmatpush1.msra.mxu0 0.0
        %1796 = vmatprep.subr.mxu0 0.0
        %1797 = vmatpush1.msra.mxu0 0.0
        %1798 = vmatprep.subr.mxu0 0.0
        %1799 = vmatpush1.msra.mxu0 0.0
        %1800 = vmatprep.subr.mxu0 0.0
        %1801 = vmatpush1.msra.mxu0 0.0
        %1802 = vmatprep.subr.mxu0 0.0
        %1803 = vmatpush1.msra.mxu0 0.0
        %1804 = vmatprep.subr.mxu0 0.0
        %1805 = vmatpush1.msra.mxu0 0.0
        %1806 = vmatprep.subr.mxu0 0.0
        %1807 = vmatpush1.msra.mxu0 0.0
        %1808 = vmatprep.subr.mxu0 0.0
        %1809 = vmatpush1.msra.mxu0 0.0
        %1810 = vmatprep.subr.mxu0 0.0
        %1811 = vmatpush1.msra.mxu0 0.0
        %1812 = vmatprep.subr.mxu0 0.0
        %1813 = vmatpush1.msra.mxu0 0.0
        %1814 = vmatprep.subr.mxu0 0.0
        %1815 = vmatpush1.msra.mxu0 0.0
        %1816 = vmatprep.subr.mxu0 0.0
        %1817 = vmatpush1.msra.mxu0 0.0
        %1818 = vmatprep.subr.mxu0 0.0
        %1819 = vmatpush1.msra.mxu0 0.0
        %1820 = vmatprep.subr.mxu0 0.0
        %1821 = vmatpush1.msra.mxu0 0.0
        %1822 = vmatprep.subr.mxu0 0.0
        %1823 = vmatpush1.msra.mxu0 0.0
        %1824 = vmatprep.subr.mxu0 0.0
        %1825 = vmatpush1.msra.mxu0 0.0
        %1826 = vmatprep.subr.mxu0 0.0
        %1827 = vmatpush1.msra.mxu0 0.0
        %1828 = vmatprep.subr.mxu0 0.0
        %1829 = vmatpush1.msra.mxu0 0.0
        %1830 = vmatprep.subr.mxu0 0.0
        %1831 = vmatpush1.msra.mxu0 0.0
        %1832 = vmatprep.subr.mxu0 0.0
        %1833 = vmatpush1.msra.mxu0 0.0
        %1834 = vmatprep.subr.mxu0 0.0
        %1835 = vmatpush1.msra.mxu0 0.0
        %1836 = vmatprep.subr.mxu0 0.0
        %1837 = vmatpush1.msra.mxu0 0.0
        %1838 = vmatprep.subr.mxu0 0.0
        %1839 = vmatpush1.msra.mxu0 0.0
        %1840 = vmatprep.subr.mxu0 0.0
        %1841 = vmatpush1.msra.mxu0 0.0
        %1842 = vmatprep.mubr.f32.mxu0 0.0
        %1843 = vmatmul.mubr.f32.gmra.mrb[0].mxu0 %v1776
        %v1844 = vpop.f32.mrb[0].mxu0
        %v1845 = vadd.f32 %v1773, %v1844
        %v1846 = vpop.f32.mrb[0].mxu0
        %1847 = vdwg.mxu0
        %1848 = vst.msk [vmem:[%s904] sm:$0xff] %vm917, %v1845
        %s1849 = sand.u32 %s543, 1
        %s1850 = scalar_lea.sflag [#allocation4], %s1849
        %s1851 = sand.u32 %s543, 1
        %s1852 = smul.addr %s1851, 8
        %s1853 = scalar_lea.vmem [#allocation26], %s1852
        // Predicated region
        $region173: #{tpu_custom_call.1} parent=111 // pred_check
          %p1854 = pneg %p553
        $region174: #{tpu_custom_call.1} parent=111 // pred_check_branch
          %1856 = sbr.rel (%p1854) target = $region176
        $region175: #{tpu_custom_call.1} parent=111 // pred_region
          %s1858 = ssub.s32 128, 128
          %1859 = vsyncadd %s1850, %s1858
          %s1860 = smul.addr %s47, 128
          %s1861 = scalar_lea.hbm %s23, %s1860
          %s1863 = sshll.u32 %s1853, 4
          %s1864 = int_to_ptr.vmem [resolvable:$true] %s1863
          %1866 = dma.vmem_to_hbm [thread:$0]  %s1864, 128, %s1861, %s1850
        $region176: #{tpu_custom_call.1} parent=111 // pred_fallthru
          _
      $region112: #{tpu_custom_call.1} parent=5 // pred_fallthru
        _
      %p1867 = scmp.le.s32.totalorder 2, %s42
      // Predicated region
      $region177: #{tpu_custom_call.1} parent=5 // pred_check
        %p1868 = pneg %p1867
      $region178: #{tpu_custom_call.1} parent=5 // pred_check_branch
        %1870 = sbr.rel (%p1868) target = $region180
      $region179: #{tpu_custom_call.1} parent=5 // pred_region
        %s1871 = ssub.s32 %s42, 2
        // Predicated region
        $region181: #{tpu_custom_call.1} parent=179 // pred_check
          %p1872 = pneg %p559
        $region182: #{tpu_custom_call.1} parent=179 // pred_check_branch
          %1874 = sbr.rel (%p1872) target = $region184
        $region183: #{tpu_custom_call.1} parent=179 // pred_region
          %s1875 = sand.u32 %s544, 1
          %s1876 = scalar_lea.sflag [#allocation4], %s1875
          %s1877 = sand.u32 %s544, 1
          %s1878 = smul.addr %s1877, 8
          %s1879 = scalar_lea.vmem [#allocation26], %s1878
          %1880 = dma.done %s1876, 128
        $region184: #{tpu_custom_call.1} parent=179 // pred_fallthru
          _
      $region180: #{tpu_custom_call.1} parent=5 // pred_fallthru
        _
    $region6: #{tpu_custom_call.1} parent=1 // loop_footer
      %s46 = sadd.s32 1, %s42
    $region7: #{tpu_custom_call.1} parent=1 // loop_footer_branch
      %41 = sbr.rel target = $region3
    $region8: #{tpu_custom_call.1} parent=1 // loop_exit
      _
    %1881 = vsyncpa [#allocation3], 1
    %s1882 = scalar_lea.sflag [#allocation3], 1
    %1883 = vsyncpa %s1882, 1
    %1884 = vsyncpa [#allocation6], 1
    %1885 = vsyncpa [#allocation9], 1
    %1886 = vsyncpa [#allocation12], 1
    %1887 = vsyncpa [#allocation15], 1
    %1888 = vsyncpa [#allocation18], 1
    %1889 = vsyncpa [#allocation21], 1
    %1890 = vsyncpa [#allocation24], 1
    %1891 = vsyncpa [#allocation4], 1
    %s1892 = scalar_lea.sflag [#allocation4], 1
    %1893 = vsyncpa %s1892, 1

</llo_original>
